<compile_context>
chip_gen: v7x
topology: tpu7x:2x2x1
jax: 0.10.0
libtpu: 0.0.40
codegen_flags: <defaults>
</compile_context>

<pallas_src>
import jax
import jax.numpy as jnp
from jax.experimental import pallas as pl
from jax.experimental.pallas import tpu as pltpu


def _ceil_div(a, b):
    return -(-a // b)


# ---------------------------------------------------------------------------
# Hardware helpers (all defensive; fall back to conservative values).
# ---------------------------------------------------------------------------
def _physical_vmem_bytes():
    """Per-TensorCore physical VMEM; conservative 64 MiB (v7x) fallback."""
    try:
        return int(pltpu.get_tpu_info().vmem_capacity_bytes)
    except Exception:
        return 64 << 20


def _vmem_limit(step_bytes):
    """Scoped-VMEM request: room for multi-buffered step blocks + headroom,
    floored at 32 MiB, capped at 3/4 of physical VMEM (48 MiB v7x / 96 MiB
    v5e-v6e) so Mosaic keeps internal-scratch headroom."""
    cap = (_physical_vmem_bytes() * 3) // 4
    want = 4 * int(step_bytes) + (8 << 20)
    return int(min(max(want, 32 << 20), cap))


def _has_bf16_valu():
    """bf16 VALU exists on v6e/v7x; v5e (and older) are f32-only elementwise."""
    try:
        kind = jax.devices()[0].device_kind.lower()
    except Exception:
        return False
    return any(tag in kind for tag in ("v6", "v7", "7x"))


# ---------------------------------------------------------------------------
# Kernel 1: out[:, n-tile] = silu(emb) @ W[:, n-tile] + b[:, n-tile]
# ---------------------------------------------------------------------------
def _emb_linear_kernel(emb_ref, w_ref, b_ref, out_ref):
    # SiLU in f32; (B, E) is tiny, recomputing per N-tile is free vs. W DMA.
    e = emb_ref[...].astype(jnp.float32)
    s = e * jax.nn.sigmoid(e)
    acc = jnp.dot(s.astype(w_ref.dtype), w_ref[...],
                  preferred_element_type=jnp.float32,
                  precision=jax.lax.Precision.HIGHEST)        # MXU, f32 accum
    out_ref[...] = (acc + b_ref[...].astype(jnp.float32)).astype(out_ref.dtype)


def emb_linear(emb, w, b, *, tn=None, out_dtype=None, w_buffers=2):
    B, E = emb.shape
    E2, O = w.shape
    assert E == E2 and b.shape == (1, O)
    out_dtype = emb.dtype if out_dtype is None else out_dtype

    emb_item = jnp.dtype(emb.dtype).itemsize
    w_item = jnp.dtype(w.dtype).itemsize
    b_item = jnp.dtype(b.dtype).itemsize
    out_item = jnp.dtype(out_dtype).itemsize

    if tn is None:
        # ~4 MiB weight tile (multiple of 128 lanes).
        tn = max(128, ((4 << 20) // (E * w_item)) // 128 * 128)
        # When W actually streams (>= 16 MiB), keep >= 8 grid steps so each
        # v7x TensorCore retains >= 4 pipelined steps to hide the W DMA.
        if E * O * w_item >= (16 << 20):
            tn = min(tn, max(128, _ceil_div(_ceil_div(O, 8), 128) * 128))
    tn = min(tn, O)
    grid = (pl.cdiv(O, tn),)

    step_bytes = (B * E * emb_item + E * tn * w_item
                  + tn * b_item + B * tn * out_item)

    # Optional deeper pipelining knob if the W DMA is still exposed after the
    # tile bump (costs one extra tile of VMEM).  Default 2 = standard spec.
    w_spec_kwargs = {}
    if w_buffers and int(w_buffers) > 2:
        w_spec_kwargs = dict(pipeline_mode=pl.Buffered(int(w_buffers)))
    w_spec = pl.BlockSpec((E, tn), lambda n: (0, n), **w_spec_kwargs)

    cost = pl.CostEstimate(
        flops=2 * B * E * O,
        transcendentals=B * E * int(grid[0]),
        bytes_accessed=(B * E * emb_item + E * O * w_item
                        + O * b_item + B * O * out_item),
    )

    return pl.pallas_call(
        _emb_linear_kernel,
        out_shape=jax.ShapeDtypeStruct((B, O), out_dtype),
        grid=grid,
        in_specs=[
            pl.BlockSpec((B, E), lambda n: (0, 0)),   # resident across steps
            w_spec,                                    # streamed weight tile
            pl.BlockSpec((1, tn), lambda n: (0, n)),
        ],
        out_specs=pl.BlockSpec((B, tn), lambda n: (0, n)),
        compiler_params=pltpu.CompilerParams(
            dimension_semantics=("parallel",),
            vmem_limit_bytes=_vmem_limit(step_bytes),
        ),
        cost_estimate=cost,
    )(emb, w, b)


# ---------------------------------------------------------------------------
# Kernel 2: LayerNorm (no affine, eps=1e-5) + adaLN modulation
# ---------------------------------------------------------------------------
def _make_ln_modulate_kernel(shift_row, scale_row, eps, fast_affine):
    def kernel(x_ref, mods_ref, out_ref):
        x = x_ref[...].astype(jnp.float32)                         # (ts, D)
        d_inv = 1.0 / x.shape[-1]
        mean = jnp.sum(x, axis=-1, keepdims=True) * d_inv
        mean_sq = jnp.sum(x * x, axis=-1, keepdims=True) * d_inv
        # Single-pass E[x^2]-mean^2 can dip slightly negative -> clamp.
        var = jnp.maximum(mean_sq - mean * mean, 0.0)
        normed = (x - mean) * jax.lax.rsqrt(var + eps)             # f32 stats

        shift = mods_ref[shift_row:shift_row + 1, :].astype(jnp.float32)  # (1,D)
        scale = mods_ref[scale_row:scale_row + 1, :].astype(jnp.float32)
        one_plus_scale = 1.0 + scale

        if fast_affine:
            # bf16 VALU epilogue (v6e/v7x only): halves the (ts, D)
            # elementwise cost when the modulate would bind on the VALU slot.
            dt = out_ref.dtype
            out_ref[...] = (normed.astype(dt) * one_plus_scale.astype(dt)
                            + shift.astype(dt))
        else:
            out_ref[...] = (normed * one_plus_scale + shift).astype(out_ref.dtype)
    return kernel


def ln_modulate(x, mods, *, shift_chunk, scale_chunk, ts=None, eps=1e-5):
    """x: (B, S, D); mods: (B, 12, D) adaLN table from the emb linear."""
    B, S, D = x.shape
    Bm, C, Dm = mods.shape
    assert Bm == B and Dm == D

    x_item = jnp.dtype(x.dtype).itemsize
    mods_item = jnp.dtype(mods.dtype).itemsize
    pack = max(8, 32 // x_item)            # sublane packing: 8 f32 / 16 bf16
    if ts is None:
        # ~4 MiB token tile (in + out double-buffered ~= 16 MiB of VMEM),
        # multiple of the sublane packing so stores stay lane-dense.
        ts = max(pack, ((4 << 20) // (D * x_item)) // pack * pack)
    ts = min(ts, S)
    grid = (B, pl.cdiv(S, ts))

    step_bytes = 2 * ts * D * x_item + C * D * mods_item
    fast_affine = (x.dtype == jnp.bfloat16) and _has_bf16_valu()

    cost = pl.CostEstimate(
        flops=8 * B * S * D,
        transcendentals=B * S,                                  # rsqrt per row
        bytes_accessed=2 * B * S * D * x_item + B * C * D * mods_item,
    )

    kernel = _make_ln_modulate_kernel(shift_chunk, scale_chunk, eps, fast_affine)

    return pl.pallas_call(
        kernel,
        out_shape=jax.ShapeDtypeStruct((B, S, D), x.dtype),
        grid=grid,
        in_specs=[
            pl.BlockSpec((pl.Squeezed(), ts, D), lambda bb, ss: (bb, ss, 0)),
            # Full (12, D) per-batch modulation block: constant across the
            # sequence axis (resident), rows selected statically in-kernel.
            pl.BlockSpec((pl.Squeezed(), C, D), lambda bb, ss: (bb, 0, 0)),
        ],
        out_specs=pl.BlockSpec((pl.Squeezed(), ts, D), lambda bb, ss: (bb, ss, 0)),
        compiler_params=pltpu.CompilerParams(
            dimension_semantics=("parallel", "parallel"),
            vmem_limit_bytes=_vmem_limit(step_bytes),
        ),
        cost_estimate=cost,
    )(x, mods)


# ---------------------------------------------------------------------------
# Module wrapper (same 10-tuple as the PyTorch forward)
# ---------------------------------------------------------------------------
def cogview3_adaln_zero_text_image(x, context, emb, w, b, dim):
    emb_out = emb_linear(emb, w, b)                  # (B, 12*dim)
    B = emb_out.shape[0]
    mods = emb_out.reshape(B, 12, dim)               # free view, no chunk copies

    # shift_msa / scale_msa are chunks 0 / 1; c_shift_msa / c_scale_msa are 6 / 7.
    x_out = ln_modulate(x, mods, shift_chunk=0, scale_chunk=1)
    context_out = ln_modulate(context, mods, shift_chunk=6, scale_chunk=7)

    gate_msa, shift_mlp, scale_mlp, gate_mlp = (mods[:, i, :] for i in (2, 3, 4, 5))
    c_gate_msa, c_shift_mlp, c_scale_mlp, c_gate_mlp = (
        mods[:, i, :] for i in (8, 9, 10, 11))

    return (x_out, gate_msa, shift_mlp, scale_mlp, gate_mlp,
            context_out, c_gate_msa, c_shift_mlp, c_scale_mlp, c_gate_mlp)


# ---------------------------------------------------------------------------
# Pure-JAX reference (full 10-output check)
# ---------------------------------------------------------------------------
def _reference(x, context, emb, w, b, dim):
    e = (jax.nn.silu(emb.astype(jnp.float32)) @ w.astype(jnp.float32)
         + b.astype(jnp.float32)[0])
    ch = [e[:, i * dim:(i + 1) * dim] for i in range(12)]

    def ln(t):
        t = t.astype(jnp.float32)
        m = t.mean(-1, keepdims=True)
        v = ((t - m) ** 2).mean(-1, keepdims=True)
        return (t - m) / jnp.sqrt(v + 1e-5)

    x_out = ln(x) * (1 + ch[1])[:, None, :] + ch[0][:, None, :]
    c_out = ln(context) * (1 + ch[7])[:, None, :] + ch[6][:, None, :]
    return (x_out, ch[2], ch[3], ch[4], ch[5],
            c_out, ch[8], ch[9], ch[10], ch[11])


if __name__ == "__main__":
    B, E, D = 2, 64, 128          # batch, embedding_dim, dim
    Sx, Sc = 16, 8                # image seq, text seq

    key = jax.random.PRNGKey(0)
    kx, kc, ke, kw, kb = jax.random.split(key, 5)

    x = jax.random.normal(kx, (B, Sx, D), dtype=jnp.float32)
    context = jax.random.normal(kc, (B, Sc, D), dtype=jnp.float32)
    emb = jax.random.normal(ke, (B, E), dtype=jnp.float32)
    w = jax.random.normal(kw, (E, 12 * D), dtype=jnp.float32) * 0.02
    b = jax.random.normal(kb, (1, 12 * D), dtype=jnp.float32) * 0.02

    # ---- float32 run: check all 10 outputs against the pure-JAX reference ----
    outs = jax.block_until_ready(
        cogview3_adaln_zero_text_image(x, context, emb, w, b, D))
    refs = _reference(x, context, emb, w, b, D)
    for o, r in zip(outs, refs):
        assert o.shape == r.shape and o.dtype == jnp.float32
        assert jnp.allclose(o, r, atol=2e-3, rtol=2e-3), float(
            jnp.max(jnp.abs(o - r)))

    # ---- bf16 run: streamed data in bf16 (halves HBM traffic); stats in f32 --
    xb, cb, eb, wb, bb = (t.astype(jnp.bfloat16) for t in (x, context, emb, w, b))
    outs_bf16 = jax.block_until_ready(
        cogview3_adaln_zero_text_image(xb, cb, eb, wb, bb, D))
    assert outs_bf16[0].dtype == jnp.bfloat16
    assert outs_bf16[5].dtype == jnp.bfloat16
    assert jnp.allclose(outs_bf16[0].astype(jnp.float32), refs[0],
                        atol=1e-1, rtol=1e-1)
    assert jnp.allclose(outs_bf16[5].astype(jnp.float32), refs[5],
                        atol=1e-1, rtol=1e-1)

    print("KERNEL_OK")
</pallas_src>

<mosaic_0001>
module attributes {stable_mosaic.version = 11 : i64} {
  func.func @_emb_linear_kernel(%arg0: i32, %arg1: memref<2x64xf32, #tpu.memory_space<vmem>>, %arg2: memref<64x1536xf32, #tpu.memory_space<vmem>>, %arg3: memref<1x1536xf32, #tpu.memory_space<vmem>>, %arg4: memref<2x1536xf32, #tpu.memory_space<vmem>>) attributes {dimension_semantics = [#tpu.dimension_semantics<parallel>], iteration_bounds = array<i64: 1>, scalar_prefetch = 0 : i64, scratch_operands = 0 : i64, tpu.core_type = #tpu.core_type<tc>, window_params = [{pipeline_mode = #tpu.pipeline_mode<synchronous>, transform_indices = @transform_0, window_bounds = array<i64: 2, 64>}, {transform_indices = @transform_1, window_bounds = array<i64: 64, 1536>}, {transform_indices = @transform_2, window_bounds = array<i64: 1, 1536>}, {transform_indices = @transform_3, window_bounds = array<i64: 2, 1536>}]} {
    %c0 = arith.constant 0 : index
    %c0_0 = arith.constant 0 : index
    %0 = vector.load %arg1[%c0, %c0_0] : memref<2x64xf32, #tpu.memory_space<vmem>>, vector<2x64xf32>
    %1 = arith.negf %0 : vector<2x64xf32>
    %2 = math.exp %1 : vector<2x64xf32>
    %cst = arith.constant 1.000000e+00 : f32
    %3 = vector.broadcast %cst : f32 to vector<2x64xf32>
    %4 = arith.addf %3, %2 : vector<2x64xf32>
    %5 = arith.divf %3, %4 : vector<2x64xf32>
    %6 = arith.mulf %0, %5 : vector<2x64xf32>
    %c0_1 = arith.constant 0 : index
    %c0_2 = arith.constant 0 : index
    %7 = vector.load %arg2[%c0_1, %c0_2] : memref<64x1536xf32, #tpu.memory_space<vmem>>, vector<64x1536xf32>
    %cst_3 = arith.constant dense<0.000000e+00> : vector<2x1536xf32>
    %8 = tpu.matmul %6, %7, %cst_3 {dimension_numbers = #tpu.dot_dimension_numbers<[1], [0], [0], [1], [0, 0, 1, 1], [], []>, precision = #tpu.contract_precision<fp32>} : vector<2x64xf32>, vector<64x1536xf32>, vector<2x1536xf32> -> vector<2x1536xf32>
    %c0_4 = arith.constant 0 : index
    %c0_5 = arith.constant 0 : index
    %9 = vector.load %arg3[%c0_4, %c0_5] : memref<1x1536xf32, #tpu.memory_space<vmem>>, vector<1x1536xf32>
    %10 = vector.broadcast %9 : vector<1x1536xf32> to vector<2x1536xf32>
    %11 = arith.addf %8, %10 : vector<2x1536xf32>
    %c0_6 = arith.constant 0 : index
    %c0_7 = arith.constant 0 : index
    %12 = vector.load %arg4[%c0_6, %c0_7] : memref<2x1536xf32, #tpu.memory_space<vmem>>, vector<2x1536xf32>
    tpu.vector_store %arg4[%c0_6, %c0_7], %11 {strides = array<i32>} : memref<2x1536xf32, #tpu.memory_space<vmem>>, vector<2x1536xf32>,
    return
  }
  func.func @transform_0(%arg0: i32) -> (i32, i32) {
    %c0_i32 = arith.constant 0 : i32
    %c0_i32_0 = arith.constant 0 : i32
    %c0_i32_1 = arith.constant 0 : i32
    return %c0_i32, %c0_i32_0 : i32, i32
  }
  func.func @transform_1(%arg0: i32) -> (i32, i32) {
    %c0_i32 = arith.constant 0 : i32
    %c0_i32_0 = arith.constant 0 : i32
    return %c0_i32, %arg0 : i32, i32
  }
  func.func @transform_2(%arg0: i32) -> (i32, i32) {
    %c0_i32 = arith.constant 0 : i32
    %c0_i32_0 = arith.constant 0 : i32
    return %c0_i32, %arg0 : i32, i32
  }
  func.func @transform_3(%arg0: i32) -> (i32, i32) {
    %c0_i32 = arith.constant 0 : i32
    %c0_i32_0 = arith.constant 0 : i32
    return %c0_i32, %arg0 : i32, i32
  }
}

</mosaic_0001>

<llo_original>
// kernel: tpu_custom_call.1
$region0: #{tpu_custom_call.1}
  #allocation0 [shape = 'u32[]', space=smem, size = 0x4, offset = 0x4, fixed_abs, tag = 'smem constant byte address 0x4 - core index']
  #allocation1 [shape = 'u32[144,128]{1,0:T(1,128)}', space=vmem, size = 0x12000, scoped, tag = 'internal scratch']
  %s0 = inlined_call_operand.hbm [shape: f32[2,64], index: 0, kind: input, shape index: {}]
  %s1 = inlined_call_operand.hbm [shape: f32[64,1536], index: 1, kind: input, shape index: {}]
  %s2 = inlined_call_operand.hbm [shape: f32[1,1536], index: 2, kind: input, shape index: {}]
  %s3 = inlined_call_operand.hbm [shape: f32[2,1536], index: 3, kind: output, shape index: {}]
  %s4 = sld [smem:[#allocation0]]
  $region34: #{tpu_custom_call.1} parent=0
    _
  %s6 = ssub.s32 1, %s4
  %s7 = scalar_select 0, %s6, %s4
  $region1: #{tpu_custom_call.1} parent=0
    #allocation2 [shape = 'u8[1024]{0}', space=vmem, size = 0x400, scoped, tag = 'input window, operand 0, single buffered']
    #allocation3 [shape = 's32[1]{0}', space=sflag, size = 0x4, scoped, tag = 'scoped memory for tpu_custom_call.1']
    #allocation4 [shape = 's32[1]{0}', space=sflag, size = 0x4, scoped, tag = 'scoped memory for tpu_custom_call.1']
    #allocation5 [shape = 'u8[393216]{0}', space=vmem, size = 0x60000, scoped, tag = 'input window, operand 1, single buffered']
    #allocation6 [shape = 's32[1]{0}', space=sflag, size = 0x4, scoped, tag = 'scoped memory for tpu_custom_call.1']
    #allocation7 [shape = 'u8[6144]{0}', space=vmem, size = 0x1800, scoped, tag = 'input window, operand 2, single buffered']
    #allocation8 [shape = 'u8[12288]{0}', space=vmem, size = 0x3000, scoped, tag = 'output window, operand 0, single buffered']
    %8 = vsyncpa [#allocation3], 0
    %9 = vsyncpa [#allocation6], 0
    %10 = vsyncpa [#allocation4], 0
    // Predicated region
    $region2: #{tpu_custom_call.1} parent=1 // pred_check
      _
    $region3: #{tpu_custom_call.1} parent=1 // pred_check_branch
      %12 = sbr.rel (0) target = $region5
    $region4: #{tpu_custom_call.1} parent=1 // pred_region
      %s14 = ssub.s32 32, 32
      %15 = vsyncadd [#allocation3], %s14
      %s17 = sshll.u32 [#allocation2], 4
      %s18 = int_to_ptr.vmem [resolvable:$true] %s17
      %20 = dma.hbm_to_vmem [thread:$0]  %s0, 32, %s18, [#allocation3]
    $region5: #{tpu_custom_call.1} parent=1 // pred_fallthru
      _
    // Predicated region
    $region6: #{tpu_custom_call.1} parent=1 // pred_check
      _
    $region7: #{tpu_custom_call.1} parent=1 // pred_check_branch
      %22 = sbr.rel (0) target = $region9
    $region8: #{tpu_custom_call.1} parent=1 // pred_region
      %s24 = ssub.s32 12288, 12288
      %25 = vsyncadd [#allocation6], %s24
      %s26 = sshll.u32 [#allocation5], 4
      %s27 = int_to_ptr.vmem [resolvable:$true] %s26
      %32 = dma.hbm_to_vmem [thread:$0]  %s1, 12288, %s27, [#allocation6], 1536, 1536, 96
    $region9: #{tpu_custom_call.1} parent=1 // pred_fallthru
      _
    // Predicated region
    $region10: #{tpu_custom_call.1} parent=1 // pred_check
      _
    $region11: #{tpu_custom_call.1} parent=1 // pred_check_branch
      %34 = sbr.rel (0) target = $region13
    $region12: #{tpu_custom_call.1} parent=1 // pred_region
      %s36 = ssub.s32 192, 192
      %37 = vsyncadd [#allocation6], %s36
      %s39 = sshll.u32 [#allocation7], 4
      %s40 = int_to_ptr.vmem [resolvable:$true] %s39
      %42 = dma.hbm_to_vmem [thread:$0]  %s2, 192, %s40, [#allocation6]
    $region13: #{tpu_custom_call.1} parent=1 // pred_fallthru
      _
    // Predicated region
    $region14: #{tpu_custom_call.1} parent=1 // pred_check
      _
    $region15: #{tpu_custom_call.1} parent=1 // pred_check_branch
      %44 = sbr.rel (0) target = $region17
    $region16: #{tpu_custom_call.1} parent=1 // pred_region
      %45 = dma.done [#allocation3], 32
    $region17: #{tpu_custom_call.1} parent=1 // pred_fallthru
      _
    // Predicated region
    $region18: #{tpu_custom_call.1} parent=1 // pred_check
      _
    $region19: #{tpu_custom_call.1} parent=1 // pred_check_branch
      %47 = sbr.rel (0) target = $region21
    $region20: #{tpu_custom_call.1} parent=1 // pred_region
      %48 = dma.done [#allocation6], 12288
    $region21: #{tpu_custom_call.1} parent=1 // pred_fallthru
      _
    // Predicated region
    $region22: #{tpu_custom_call.1} parent=1 // pred_check
      _
    $region23: #{tpu_custom_call.1} parent=1 // pred_check_branch
      %50 = sbr.rel (0) target = $region25
    $region24: #{tpu_custom_call.1} parent=1 // pred_region
      %51 = dma.done [#allocation6], 192
    $region25: #{tpu_custom_call.1} parent=1 // pred_fallthru
      _
    %v52 = vld [vmem:[#allocation2] sm:$0x3]
    %v53 = vxor.u32 %v52, 2147483648
    %v54 = vmul.f32 %v53, 1.442695
    %v55 = vpow.pop %v54
    %v56 = vadd.f32 %v55, 1.0
    %v57 = vrcp.pop %v56
    %v58 = vmul.f32 1.0, %v57
    %v59 = vmul.f32 %v52, %v58
    %v60 = vld [vmem:[#allocation5] sm:$0xff]
    %v61 = vld [vmem:[#allocation5 + $0x8] sm:$0xff]
    %v62 = vld [vmem:[#allocation5 + $0x10] sm:$0xff]
    %v63 = vld [vmem:[#allocation5 + $0x18] sm:$0xff]
    %v64 = vld [vmem:[#allocation5 + $0x20] sm:$0xff]
    %v65 = vld [vmem:[#allocation5 + $0x28] sm:$0xff]
    %v66 = vld [vmem:[#allocation5 + $0x30] sm:$0xff]
    %v67 = vld [vmem:[#allocation5 + $0x38] sm:$0xff]
    %v68 = vld [vmem:[#allocation5 + $0x40] sm:$0xff]
    %v69 = vld [vmem:[#allocation5 + $0x48] sm:$0xff]
    %v70 = vld [vmem:[#allocation5 + $0x50] sm:$0xff]
    %v71 = vld [vmem:[#allocation5 + $0x58] sm:$0xff]
    %v72 = vld [vmem:[#allocation5 + $0x60] sm:$0xff]
    %v73 = vld [vmem:[#allocation5 + $0x68] sm:$0xff]
    %v74 = vld [vmem:[#allocation5 + $0x70] sm:$0xff]
    %v75 = vld [vmem:[#allocation5 + $0x78] sm:$0xff]
    %v76 = vld [vmem:[#allocation5 + $0x80] sm:$0xff]
    %v77 = vld [vmem:[#allocation5 + $0x88] sm:$0xff]
    %v78 = vld [vmem:[#allocation5 + $0x90] sm:$0xff]
    %v79 = vld [vmem:[#allocation5 + $0x98] sm:$0xff]
    %v80 = vld [vmem:[#allocation5 + $0xa0] sm:$0xff]
    %v81 = vld [vmem:[#allocation5 + $0xa8] sm:$0xff]
    %v82 = vld [vmem:[#allocation5 + $0xb0] sm:$0xff]
    %v83 = vld [vmem:[#allocation5 + $0xb8] sm:$0xff]
    %v84 = vld [vmem:[#allocation5 + $0xc0] sm:$0xff]
    %v85 = vld [vmem:[#allocation5 + $0xc8] sm:$0xff]
    %v86 = vld [vmem:[#allocation5 + $0xd0] sm:$0xff]
    %v87 = vld [vmem:[#allocation5 + $0xd8] sm:$0xff]
    %v88 = vld [vmem:[#allocation5 + $0xe0] sm:$0xff]
    %v89 = vld [vmem:[#allocation5 + $0xe8] sm:$0xff]
    %v90 = vld [vmem:[#allocation5 + $0xf0] sm:$0xff]
    %v91 = vld [vmem:[#allocation5 + $0xf8] sm:$0xff]
    %v92 = vld [vmem:[#allocation5 + $0x100] sm:$0xff]
    %v93 = vld [vmem:[#allocation5 + $0x108] sm:$0xff]
    %v94 = vld [vmem:[#allocation5 + $0x110] sm:$0xff]
    %v95 = vld [vmem:[#allocation5 + $0x118] sm:$0xff]
    %v96 = vld [vmem:[#allocation5 + $0x120] sm:$0xff]
    %v97 = vld [vmem:[#allocation5 + $0x128] sm:$0xff]
    %v98 = vld [vmem:[#allocation5 + $0x130] sm:$0xff]
    %v99 = vld [vmem:[#allocation5 + $0x138] sm:$0xff]
    %v100 = vld [vmem:[#allocation5 + $0x140] sm:$0xff]
    %v101 = vld [vmem:[#allocation5 + $0x148] sm:$0xff]
    %v102 = vld [vmem:[#allocation5 + $0x150] sm:$0xff]
    %v103 = vld [vmem:[#allocation5 + $0x158] sm:$0xff]
    %v104 = vld [vmem:[#allocation5 + $0x160] sm:$0xff]
    %v105 = vld [vmem:[#allocation5 + $0x168] sm:$0xff]
    %v106 = vld [vmem:[#allocation5 + $0x170] sm:$0xff]
    %v107 = vld [vmem:[#allocation5 + $0x178] sm:$0xff]
    %v108 = vld [vmem:[#allocation5 + $0x180] sm:$0xff]
    %v109 = vld [vmem:[#allocation5 + $0x188] sm:$0xff]
    %v110 = vld [vmem:[#allocation5 + $0x190] sm:$0xff]
    %v111 = vld [vmem:[#allocation5 + $0x198] sm:$0xff]
    %v112 = vld [vmem:[#allocation5 + $0x1a0] sm:$0xff]
    %v113 = vld [vmem:[#allocation5 + $0x1a8] sm:$0xff]
    %v114 = vld [vmem:[#allocation5 + $0x1b0] sm:$0xff]
    %v115 = vld [vmem:[#allocation5 + $0x1b8] sm:$0xff]
    %v116 = vld [vmem:[#allocation5 + $0x1c0] sm:$0xff]
    %v117 = vld [vmem:[#allocation5 + $0x1c8] sm:$0xff]
    %v118 = vld [vmem:[#allocation5 + $0x1d0] sm:$0xff]
    %v119 = vld [vmem:[#allocation5 + $0x1d8] sm:$0xff]
    %v120 = vld [vmem:[#allocation5 + $0x1e0] sm:$0xff]
    %v121 = vld [vmem:[#allocation5 + $0x1e8] sm:$0xff]
    %v122 = vld [vmem:[#allocation5 + $0x1f0] sm:$0xff]
    %v123 = vld [vmem:[#allocation5 + $0x1f8] sm:$0xff]
    %v124 = vld [vmem:[#allocation5 + $0x200] sm:$0xff]
    %v125 = vld [vmem:[#allocation5 + $0x208] sm:$0xff]
    %v126 = vld [vmem:[#allocation5 + $0x210] sm:$0xff]
    %v127 = vld [vmem:[#allocation5 + $0x218] sm:$0xff]
    %v128 = vld [vmem:[#allocation5 + $0x220] sm:$0xff]
    %v129 = vld [vmem:[#allocation5 + $0x228] sm:$0xff]
    %v130 = vld [vmem:[#allocation5 + $0x230] sm:$0xff]
    %v131 = vld [vmem:[#allocation5 + $0x238] sm:$0xff]
    %v132 = vld [vmem:[#allocation5 + $0x240] sm:$0xff]
    %v133 = vld [vmem:[#allocation5 + $0x248] sm:$0xff]
    %v134 = vld [vmem:[#allocation5 + $0x250] sm:$0xff]
    %v135 = vld [vmem:[#allocation5 + $0x258] sm:$0xff]
    %v136 = vld [vmem:[#allocation5 + $0x260] sm:$0xff]
    %v137 = vld [vmem:[#allocation5 + $0x268] sm:$0xff]
    %v138 = vld [vmem:[#allocation5 + $0x270] sm:$0xff]
    %v139 = vld [vmem:[#allocation5 + $0x278] sm:$0xff]
    %v140 = vld [vmem:[#allocation5 + $0x280] sm:$0xff]
    %v141 = vld [vmem:[#allocation5 + $0x288] sm:$0xff]
    %v142 = vld [vmem:[#allocation5 + $0x290] sm:$0xff]
    %v143 = vld [vmem:[#allocation5 + $0x298] sm:$0xff]
    %v144 = vld [vmem:[#allocation5 + $0x2a0] sm:$0xff]
    %v145 = vld [vmem:[#allocation5 + $0x2a8] sm:$0xff]
    %v146 = vld [vmem:[#allocation5 + $0x2b0] sm:$0xff]
    %v147 = vld [vmem:[#allocation5 + $0x2b8] sm:$0xff]
    %v148 = vld [vmem:[#allocation5 + $0x2c0] sm:$0xff]
    %v149 = vld [vmem:[#allocation5 + $0x2c8] sm:$0xff]
    %v150 = vld [vmem:[#allocation5 + $0x2d0] sm:$0xff]
    %v151 = vld [vmem:[#allocation5 + $0x2d8] sm:$0xff]
    %v152 = vld [vmem:[#allocation5 + $0x2e0] sm:$0xff]
    %v153 = vld [vmem:[#allocation5 + $0x2e8] sm:$0xff]
    %v154 = vld [vmem:[#allocation5 + $0x2f0] sm:$0xff]
    %v155 = vld [vmem:[#allocation5 + $0x2f8] sm:$0xff]
    %v156 = vld [vmem:[#allocation7] sm:$0xff]
    %v157 = vld [vmem:[#allocation7 + $0x8] sm:$0xf]
    %v160 = vlaneseq
    %v161 = vshrl.u32 %v160, 7
    %v162 = vsub.s32 0, %v161
    %v163 = vrot.slane %v156, %v162
    %v164 = vlaneseq
    %v165 = vshrl.u32 %v164, 7
    %v166 = vsub.s32 1, %v165
    %v167 = vrot.slane %v156, %v166
    %v168 = vlaneseq
    %v169 = vshrl.u32 %v168, 7
    %v170 = vsub.s32 2, %v169
    %v171 = vrot.slane %v156, %v170
    %v172 = vlaneseq
    %v173 = vshrl.u32 %v172, 7
    %v174 = vsub.s32 3, %v173
    %v175 = vrot.slane %v156, %v174
    %v176 = vlaneseq
    %v177 = vshrl.u32 %v176, 7
    %v178 = vsub.s32 4, %v177
    %v179 = vrot.slane %v156, %v178
    %v180 = vlaneseq
    %v181 = vshrl.u32 %v180, 7
    %v182 = vsub.s32 5, %v181
    %v183 = vrot.slane %v156, %v182
    %v184 = vlaneseq
    %v185 = vshrl.u32 %v184, 7
    %v186 = vsub.s32 6, %v185
    %v187 = vrot.slane %v156, %v186
    %v188 = vlaneseq
    %v189 = vshrl.u32 %v188, 7
    %v190 = vsub.s32 7, %v189
    %v191 = vrot.slane %v156, %v190
    %v192 = vlaneseq
    %v193 = vshrl.u32 %v192, 7
    %v194 = vsub.s32 0, %v193
    %v195 = vrot.slane %v157, %v194
    %v196 = vlaneseq
    %v197 = vshrl.u32 %v196, 7
    %v198 = vsub.s32 1, %v197
    %v199 = vrot.slane %v157, %v198
    %v200 = vlaneseq
    %v201 = vshrl.u32 %v200, 7
    %v202 = vsub.s32 2, %v201
    %v203 = vrot.slane %v157, %v202
    %v204 = vlaneseq
    %v205 = vshrl.u32 %v204, 7
    %v206 = vsub.s32 3, %v205
    %v207 = vrot.slane %v157, %v206
    %vm220 = vcmask 523264
    %v222 = vsel %vm220, %v59, 0
    %v224 = vand.u32 %v61, 4294901760
    %225 = vmatprep.subr.mxu0 %v224
    %v226 = vand.u32 %v60, 4294901760
    %227 = vmatpush1.msra.mxu0 %v226
    %v228 = vand.u32 %v73, 4294901760
    %229 = vmatprep.subr.mxu0 %v228
    %v230 = vand.u32 %v72, 4294901760
    %231 = vmatpush1.msra.mxu0 %v230
    %v232 = vand.u32 %v85, 4294901760
    %233 = vmatprep.subr.mxu0 %v232
    %v234 = vand.u32 %v84, 4294901760
    %235 = vmatpush1.msra.mxu0 %v234
    %v236 = vand.u32 %v97, 4294901760
    %237 = vmatprep.subr.mxu0 %v236
    %v238 = vand.u32 %v96, 4294901760
    %239 = vmatpush1.msra.mxu0 %v238
    %v240 = vand.u32 %v109, 4294901760
    %241 = vmatprep.subr.mxu0 %v240
    %v242 = vand.u32 %v108, 4294901760
    %243 = vmatpush1.msra.mxu0 %v242
    %v244 = vand.u32 %v121, 4294901760
    %245 = vmatprep.subr.mxu0 %v244
    %v246 = vand.u32 %v120, 4294901760
    %247 = vmatpush1.msra.mxu0 %v246
    %v248 = vand.u32 %v133, 4294901760
    %249 = vmatprep.subr.mxu0 %v248
    %v250 = vand.u32 %v132, 4294901760
    %251 = vmatpush1.msra.mxu0 %v250
    %v252 = vand.u32 %v145, 4294901760
    %253 = vmatprep.subr.mxu0 %v252
    %v254 = vand.u32 %v144, 4294901760
    %255 = vmatpush1.msra.mxu0 %v254
    %256 = vmatprep.subr.mxu0 0.0
    %257 = vmatpush1.msra.mxu0 0.0
    %258 = vmatprep.subr.mxu0 0.0
    %259 = vmatpush1.msra.mxu0 0.0
    %260 = vmatprep.subr.mxu0 0.0
    %261 = vmatpush1.msra.mxu0 0.0
    %262 = vmatprep.subr.mxu0 0.0
    %263 = vmatpush1.msra.mxu0 0.0
    %264 = vmatprep.subr.mxu0 0.0
    %265 = vmatpush1.msra.mxu0 0.0
    %266 = vmatprep.subr.mxu0 0.0
    %267 = vmatpush1.msra.mxu0 0.0
    %268 = vmatprep.subr.mxu0 0.0
    %269 = vmatpush1.msra.mxu0 0.0
    %270 = vmatprep.subr.mxu0 0.0
    %271 = vmatpush1.msra.mxu0 0.0
    %272 = vmatprep.subr.mxu0 0.0
    %273 = vmatpush1.msra.mxu0 0.0
    %274 = vmatprep.subr.mxu0 0.0
    %275 = vmatpush1.msra.mxu0 0.0
    %276 = vmatprep.subr.mxu0 0.0
    %277 = vmatpush1.msra.mxu0 0.0
    %278 = vmatprep.subr.mxu0 0.0
    %279 = vmatpush1.msra.mxu0 0.0
    %280 = vmatprep.subr.mxu0 0.0
    %281 = vmatpush1.msra.mxu0 0.0
    %282 = vmatprep.subr.mxu0 0.0
    %283 = vmatpush1.msra.mxu0 0.0
    %284 = vmatprep.subr.mxu0 0.0
    %285 = vmatpush1.msra.mxu0 0.0
    %286 = vmatprep.subr.mxu0 0.0
    %287 = vmatpush1.msra.mxu0 0.0
    %288 = vmatprep.subr.mxu0 0.0
    %289 = vmatpush1.msra.mxu0 0.0
    %290 = vmatprep.subr.mxu0 0.0
    %291 = vmatpush1.msra.mxu0 0.0
    %292 = vmatprep.subr.mxu0 0.0
    %293 = vmatpush1.msra.mxu0 0.0
    %294 = vmatprep.subr.mxu0 0.0
    %295 = vmatpush1.msra.mxu0 0.0
    %296 = vmatprep.subr.mxu0 0.0
    %297 = vmatpush1.msra.mxu0 0.0
    %298 = vmatprep.subr.mxu0 0.0
    %299 = vmatpush1.msra.mxu0 0.0
    %300 = vmatprep.subr.mxu0 0.0
    %301 = vmatpush1.msra.mxu0 0.0
    %302 = vmatprep.subr.mxu0 0.0
    %303 = vmatpush1.msra.mxu0 0.0
    %304 = vmatprep.mubr.f32.mxu0 0.0
    %v305 = vand.u32 %v222, 4294901760
    %v306 = vsub.f32 %v222, %v305
    %v307 = vand.u32 %v306, 4294901760
    %v308 = vsub.f32 %v306, %v307
    %v309 = vand.u32 %v308, 4294901760
    %310 = vmatmul.mubr.f32.gmra.mrb[0].mxu0 %v309
    %v311 = vpop.f32.mrb[0].mxu0
    %v312 = vadd.f32 %v163, %v311
    %v313 = vpop.f32.mrb[0].mxu0
    %v314 = vadd.f32 %v167, %v313
    %315 = vdwg.mxu0
    %v316 = vand.u32 %v61, 4294901760
    %v317 = vsub.f32 %v61, %v316
    %v318 = vand.u32 %v317, 4294901760
    %v319 = vsub.f32 %v317, %v318
    %v320 = vand.u32 %v319, 4294901760
    %321 = vmatprep.subr.mxu0 %v320
    %v322 = vand.u32 %v60, 4294901760
    %v323 = vsub.f32 %v60, %v322
    %v324 = vand.u32 %v323, 4294901760
    %v325 = vsub.f32 %v323, %v324
    %v326 = vand.u32 %v325, 4294901760
    %327 = vmatpush1.msra.mxu0 %v326
    %v328 = vand.u32 %v73, 4294901760
    %v329 = vsub.f32 %v73, %v328
    %v330 = vand.u32 %v329, 4294901760
    %v331 = vsub.f32 %v329, %v330
    %v332 = vand.u32 %v331, 4294901760
    %333 = vmatprep.subr.mxu0 %v332
    %v334 = vand.u32 %v72, 4294901760
    %v335 = vsub.f32 %v72, %v334
    %v336 = vand.u32 %v335, 4294901760
    %v337 = vsub.f32 %v335, %v336
    %v338 = vand.u32 %v337, 4294901760
    %339 = vmatpush1.msra.mxu0 %v338
    %v340 = vand.u32 %v85, 4294901760
    %v341 = vsub.f32 %v85, %v340
    %v342 = vand.u32 %v341, 4294901760
    %v343 = vsub.f32 %v341, %v342
    %v344 = vand.u32 %v343, 4294901760
    %345 = vmatprep.subr.mxu0 %v344
    %v346 = vand.u32 %v84, 4294901760
    %v347 = vsub.f32 %v84, %v346
    %v348 = vand.u32 %v347, 4294901760
    %v349 = vsub.f32 %v347, %v348
    %v350 = vand.u32 %v349, 4294901760
    %351 = vmatpush1.msra.mxu0 %v350
    %v352 = vand.u32 %v97, 4294901760
    %v353 = vsub.f32 %v97, %v352
    %v354 = vand.u32 %v353, 4294901760
    %v355 = vsub.f32 %v353, %v354
    %v356 = vand.u32 %v355, 4294901760
    %357 = vmatprep.subr.mxu0 %v356
    %v358 = vand.u32 %v96, 4294901760
    %v359 = vsub.f32 %v96, %v358
    %v360 = vand.u32 %v359, 4294901760
    %v361 = vsub.f32 %v359, %v360
    %v362 = vand.u32 %v361, 4294901760
    %363 = vmatpush1.msra.mxu0 %v362
    %v364 = vand.u32 %v109, 4294901760
    %v365 = vsub.f32 %v109, %v364
    %v366 = vand.u32 %v365, 4294901760
    %v367 = vsub.f32 %v365, %v366
    %v368 = vand.u32 %v367, 4294901760
    %369 = vmatprep.subr.mxu0 %v368
    %v370 = vand.u32 %v108, 4294901760
    %v371 = vsub.f32 %v108, %v370
    %v372 = vand.u32 %v371, 4294901760
    %v373 = vsub.f32 %v371, %v372
    %v374 = vand.u32 %v373, 4294901760
    %375 = vmatpush1.msra.mxu0 %v374
    %v376 = vand.u32 %v121, 4294901760
    %v377 = vsub.f32 %v121, %v376
    %v378 = vand.u32 %v377, 4294901760
    %v379 = vsub.f32 %v377, %v378
    %v380 = vand.u32 %v379, 4294901760
    %381 = vmatprep.subr.mxu0 %v380
    %v382 = vand.u32 %v120, 4294901760
    %v383 = vsub.f32 %v120, %v382
    %v384 = vand.u32 %v383, 4294901760
    %v385 = vsub.f32 %v383, %v384
    %v386 = vand.u32 %v385, 4294901760
    %387 = vmatpush1.msra.mxu0 %v386
    %v388 = vand.u32 %v133, 4294901760
    %v389 = vsub.f32 %v133, %v388
    %v390 = vand.u32 %v389, 4294901760
    %v391 = vsub.f32 %v389, %v390
    %v392 = vand.u32 %v391, 4294901760
    %393 = vmatprep.subr.mxu0 %v392
    %v394 = vand.u32 %v132, 4294901760
    %v395 = vsub.f32 %v132, %v394
    %v396 = vand.u32 %v395, 4294901760
    %v397 = vsub.f32 %v395, %v396
    %v398 = vand.u32 %v397, 4294901760
    %399 = vmatpush1.msra.mxu0 %v398
    %v400 = vand.u32 %v145, 4294901760
    %v401 = vsub.f32 %v145, %v400
    %v402 = vand.u32 %v401, 4294901760
    %v403 = vsub.f32 %v401, %v402
    %v404 = vand.u32 %v403, 4294901760
    %405 = vmatprep.subr.mxu0 %v404
    %v406 = vand.u32 %v144, 4294901760
    %v407 = vsub.f32 %v144, %v406
    %v408 = vand.u32 %v407, 4294901760
    %v409 = vsub.f32 %v407, %v408
    %v410 = vand.u32 %v409, 4294901760
    %411 = vmatpush1.msra.mxu0 %v410
    %412 = vmatprep.subr.mxu0 0.0
    %413 = vmatpush1.msra.mxu0 0.0
    %414 = vmatprep.subr.mxu0 0.0
    %415 = vmatpush1.msra.mxu0 0.0
    %416 = vmatprep.subr.mxu0 0.0
    %417 = vmatpush1.msra.mxu0 0.0
    %418 = vmatprep.subr.mxu0 0.0
    %419 = vmatpush1.msra.mxu0 0.0
    %420 = vmatprep.subr.mxu0 0.0
    %421 = vmatpush1.msra.mxu0 0.0
    %422 = vmatprep.subr.mxu0 0.0
    %423 = vmatpush1.msra.mxu0 0.0
    %424 = vmatprep.subr.mxu0 0.0
    %425 = vmatpush1.msra.mxu0 0.0
    %426 = vmatprep.subr.mxu0 0.0
    %427 = vmatpush1.msra.mxu0 0.0
    %428 = vmatprep.subr.mxu0 0.0
    %429 = vmatpush1.msra.mxu0 0.0
    %430 = vmatprep.subr.mxu0 0.0
    %431 = vmatpush1.msra.mxu0 0.0
    %432 = vmatprep.subr.mxu0 0.0
    %433 = vmatpush1.msra.mxu0 0.0
    %434 = vmatprep.subr.mxu0 0.0
    %435 = vmatpush1.msra.mxu0 0.0
    %436 = vmatprep.subr.mxu0 0.0
    %437 = vmatpush1.msra.mxu0 0.0
    %438 = vmatprep.subr.mxu0 0.0
    %439 = vmatpush1.msra.mxu0 0.0
    %440 = vmatprep.subr.mxu0 0.0
    %441 = vmatpush1.msra.mxu0 0.0
    %442 = vmatprep.subr.mxu0 0.0
    %443 = vmatpush1.msra.mxu0 0.0
    %444 = vmatprep.subr.mxu0 0.0
    %445 = vmatpush1.msra.mxu0 0.0
    %446 = vmatprep.subr.mxu0 0.0
    %447 = vmatpush1.msra.mxu0 0.0
    %448 = vmatprep.subr.mxu0 0.0
    %449 = vmatpush1.msra.mxu0 0.0
    %450 = vmatprep.subr.mxu0 0.0
    %451 = vmatpush1.msra.mxu0 0.0
    %452 = vmatprep.subr.mxu0 0.0
    %453 = vmatpush1.msra.mxu0 0.0
    %454 = vmatprep.subr.mxu0 0.0
    %455 = vmatpush1.msra.mxu0 0.0
    %456 = vmatprep.subr.mxu0 0.0
    %457 = vmatpush1.msra.mxu0 0.0
    %458 = vmatprep.subr.mxu0 0.0
    %459 = vmatpush1.msra.mxu0 0.0
    %460 = vmatprep.mubr.f32.mxu0 0.0
    %v461 = vand.u32 %v222, 4294901760
    %462 = vmatmul.mubr.f32.gmra.mrb[0].mxu0 %v461
    %v463 = vpop.f32.mrb[0].mxu0
    %v464 = vadd.f32 %v312, %v463
    %v465 = vpop.f32.mrb[0].mxu0
    %v466 = vadd.f32 %v314, %v465
    %467 = vdwg.mxu0
    %v468 = vand.u32 %v61, 4294901760
    %v469 = vsub.f32 %v61, %v468
    %470 = vmatprep.subr.mxu0 %v469
    %v471 = vand.u32 %v60, 4294901760
    %v472 = vsub.f32 %v60, %v471
    %473 = vmatpush1.msra.mxu0 %v472
    %v474 = vand.u32 %v73, 4294901760
    %v475 = vsub.f32 %v73, %v474
    %476 = vmatprep.subr.mxu0 %v475
    %v477 = vand.u32 %v72, 4294901760
    %v478 = vsub.f32 %v72, %v477
    %479 = vmatpush1.msra.mxu0 %v478
    %v480 = vand.u32 %v85, 4294901760
    %v481 = vsub.f32 %v85, %v480
    %482 = vmatprep.subr.mxu0 %v481
    %v483 = vand.u32 %v84, 4294901760
    %v484 = vsub.f32 %v84, %v483
    %485 = vmatpush1.msra.mxu0 %v484
    %v486 = vand.u32 %v97, 4294901760
    %v487 = vsub.f32 %v97, %v486
    %488 = vmatprep.subr.mxu0 %v487
    %v489 = vand.u32 %v96, 4294901760
    %v490 = vsub.f32 %v96, %v489
    %491 = vmatpush1.msra.mxu0 %v490
    %v492 = vand.u32 %v109, 4294901760
    %v493 = vsub.f32 %v109, %v492
    %494 = vmatprep.subr.mxu0 %v493
    %v495 = vand.u32 %v108, 4294901760
    %v496 = vsub.f32 %v108, %v495
    %497 = vmatpush1.msra.mxu0 %v496
    %v498 = vand.u32 %v121, 4294901760
    %v499 = vsub.f32 %v121, %v498
    %500 = vmatprep.subr.mxu0 %v499
    %v501 = vand.u32 %v120, 4294901760
    %v502 = vsub.f32 %v120, %v501
    %503 = vmatpush1.msra.mxu0 %v502
    %v504 = vand.u32 %v133, 4294901760
    %v505 = vsub.f32 %v133, %v504
    %506 = vmatprep.subr.mxu0 %v505
    %v507 = vand.u32 %v132, 4294901760
    %v508 = vsub.f32 %v132, %v507
    %509 = vmatpush1.msra.mxu0 %v508
    %v510 = vand.u32 %v145, 4294901760
    %v511 = vsub.f32 %v145, %v510
    %512 = vmatprep.subr.mxu0 %v511
    %v513 = vand.u32 %v144, 4294901760
    %v514 = vsub.f32 %v144, %v513
    %515 = vmatpush1.msra.mxu0 %v514
    %516 = vmatprep.subr.mxu0 0.0
    %517 = vmatpush1.msra.mxu0 0.0
    %518 = vmatprep.subr.mxu0 0.0
    %519 = vmatpush1.msra.mxu0 0.0
    %520 = vmatprep.subr.mxu0 0.0
    %521 = vmatpush1.msra.mxu0 0.0
    %522 = vmatprep.subr.mxu0 0.0
    %523 = vmatpush1.msra.mxu0 0.0
    %524 = vmatprep.subr.mxu0 0.0
    %525 = vmatpush1.msra.mxu0 0.0
    %526 = vmatprep.subr.mxu0 0.0
    %527 = vmatpush1.msra.mxu0 0.0
    %528 = vmatprep.subr.mxu0 0.0
    %529 = vmatpush1.msra.mxu0 0.0
    %530 = vmatprep.subr.mxu0 0.0
    %531 = vmatpush1.msra.mxu0 0.0
    %532 = vmatprep.subr.mxu0 0.0
    %533 = vmatpush1.msra.mxu0 0.0
    %534 = vmatprep.subr.mxu0 0.0
    %535 = vmatpush1.msra.mxu0 0.0
    %536 = vmatprep.subr.mxu0 0.0
    %537 = vmatpush1.msra.mxu0 0.0
    %538 = vmatprep.subr.mxu0 0.0
    %539 = vmatpush1.msra.mxu0 0.0
    %540 = vmatprep.subr.mxu0 0.0
    %541 = vmatpush1.msra.mxu0 0.0
    %542 = vmatprep.subr.mxu0 0.0
    %543 = vmatpush1.msra.mxu0 0.0
    %544 = vmatprep.subr.mxu0 0.0
    %545 = vmatpush1.msra.mxu0 0.0
    %546 = vmatprep.subr.mxu0 0.0
    %547 = vmatpush1.msra.mxu0 0.0
    %548 = vmatprep.subr.mxu0 0.0
    %549 = vmatpush1.msra.mxu0 0.0
    %550 = vmatprep.subr.mxu0 0.0
    %551 = vmatpush1.msra.mxu0 0.0
    %552 = vmatprep.subr.mxu0 0.0
    %553 = vmatpush1.msra.mxu0 0.0
    %554 = vmatprep.subr.mxu0 0.0
    %555 = vmatpush1.msra.mxu0 0.0
    %556 = vmatprep.subr.mxu0 0.0
    %557 = vmatpush1.msra.mxu0 0.0
    %558 = vmatprep.subr.mxu0 0.0
    %559 = vmatpush1.msra.mxu0 0.0
    %560 = vmatprep.subr.mxu0 0.0
    %561 = vmatpush1.msra.mxu0 0.0
    %562 = vmatprep.subr.mxu0 0.0
    %563 = vmatpush1.msra.mxu0 0.0
    %564 = vmatprep.mubr.f32.mxu0 0.0
    %v565 = vand.u32 %v222, 4294901760
    %v566 = vsub.f32 %v222, %v565
    %567 = vmatmul.mubr.f32.gmra.mrb[0].mxu0 %v566
    %v568 = vpop.f32.mrb[0].mxu0
    %v569 = vadd.f32 %v464, %v568
    %v570 = vpop.f32.mrb[0].mxu0
    %v571 = vadd.f32 %v466, %v570
    %572 = vdwg.mxu0
    %v573 = vand.u32 %v61, 4294901760
    %574 = vmatprep.subr.mxu0 %v573
    %v575 = vand.u32 %v60, 4294901760
    %576 = vmatpush1.msra.mxu0 %v575
    %v577 = vand.u32 %v73, 4294901760
    %578 = vmatprep.subr.mxu0 %v577
    %v579 = vand.u32 %v72, 4294901760
    %580 = vmatpush1.msra.mxu0 %v579
    %v581 = vand.u32 %v85, 4294901760
    %582 = vmatprep.subr.mxu0 %v581
    %v583 = vand.u32 %v84, 4294901760
    %584 = vmatpush1.msra.mxu0 %v583
    %v585 = vand.u32 %v97, 4294901760
    %586 = vmatprep.subr.mxu0 %v585
    %v587 = vand.u32 %v96, 4294901760
    %588 = vmatpush1.msra.mxu0 %v587
    %v589 = vand.u32 %v109, 4294901760
    %590 = vmatprep.subr.mxu0 %v589
    %v591 = vand.u32 %v108, 4294901760
    %592 = vmatpush1.msra.mxu0 %v591
    %v593 = vand.u32 %v121, 4294901760
    %594 = vmatprep.subr.mxu0 %v593
    %v595 = vand.u32 %v120, 4294901760
    %596 = vmatpush1.msra.mxu0 %v595
    %v597 = vand.u32 %v133, 4294901760
    %598 = vmatprep.subr.mxu0 %v597
    %v599 = vand.u32 %v132, 4294901760
    %600 = vmatpush1.msra.mxu0 %v599
    %v601 = vand.u32 %v145, 4294901760
    %602 = vmatprep.subr.mxu0 %v601
    %v603 = vand.u32 %v144, 4294901760
    %604 = vmatpush1.msra.mxu0 %v603
    %605 = vmatprep.subr.mxu0 0.0
    %606 = vmatpush1.msra.mxu0 0.0
    %607 = vmatprep.subr.mxu0 0.0
    %608 = vmatpush1.msra.mxu0 0.0
    %609 = vmatprep.subr.mxu0 0.0
    %610 = vmatpush1.msra.mxu0 0.0
    %611 = vmatprep.subr.mxu0 0.0
    %612 = vmatpush1.msra.mxu0 0.0
    %613 = vmatprep.subr.mxu0 0.0
    %614 = vmatpush1.msra.mxu0 0.0
    %615 = vmatprep.subr.mxu0 0.0
    %616 = vmatpush1.msra.mxu0 0.0
    %617 = vmatprep.subr.mxu0 0.0
    %618 = vmatpush1.msra.mxu0 0.0
    %619 = vmatprep.subr.mxu0 0.0
    %620 = vmatpush1.msra.mxu0 0.0
    %621 = vmatprep.subr.mxu0 0.0
    %622 = vmatpush1.msra.mxu0 0.0
    %623 = vmatprep.subr.mxu0 0.0
    %624 = vmatpush1.msra.mxu0 0.0
    %625 = vmatprep.subr.mxu0 0.0
    %626 = vmatpush1.msra.mxu0 0.0
    %627 = vmatprep.subr.mxu0 0.0
    %628 = vmatpush1.msra.mxu0 0.0
    %629 = vmatprep.subr.mxu0 0.0
    %630 = vmatpush1.msra.mxu0 0.0
    %631 = vmatprep.subr.mxu0 0.0
    %632 = vmatpush1.msra.mxu0 0.0
    %633 = vmatprep.subr.mxu0 0.0
    %634 = vmatpush1.msra.mxu0 0.0
    %635 = vmatprep.subr.mxu0 0.0
    %636 = vmatpush1.msra.mxu0 0.0
    %637 = vmatprep.subr.mxu0 0.0
    %638 = vmatpush1.msra.mxu0 0.0
    %639 = vmatprep.subr.mxu0 0.0
    %640 = vmatpush1.msra.mxu0 0.0
    %641 = vmatprep.subr.mxu0 0.0
    %642 = vmatpush1.msra.mxu0 0.0
    %643 = vmatprep.subr.mxu0 0.0
    %644 = vmatpush1.msra.mxu0 0.0
    %645 = vmatprep.subr.mxu0 0.0
    %646 = vmatpush1.msra.mxu0 0.0
    %647 = vmatprep.subr.mxu0 0.0
    %648 = vmatpush1.msra.mxu0 0.0
    %649 = vmatprep.subr.mxu0 0.0
    %650 = vmatpush1.msra.mxu0 0.0
    %651 = vmatprep.subr.mxu0 0.0
    %652 = vmatpush1.msra.mxu0 0.0
    %653 = vmatprep.mubr.f32.mxu0 0.0
    %v654 = vand.u32 %v222, 4294901760
    %v655 = vsub.f32 %v222, %v654
    %v656 = vand.u32 %v655, 4294901760
    %657 = vmatmul.mubr.f32.gmra.mrb[0].mxu0 %v656
    %v658 = vpop.f32.mrb[0].mxu0
    %v659 = vadd.f32 %v569, %v658
    %v660 = vpop.f32.mrb[0].mxu0
    %v661 = vadd.f32 %v571, %v660
    %662 = vdwg.mxu0
    %v663 = vand.u32 %v61, 4294901760
    %v664 = vsub.f32 %v61, %v663
    %v665 = vand.u32 %v664, 4294901760
    %666 = vmatprep.subr.mxu0 %v665
    %v667 = vand.u32 %v60, 4294901760
    %v668 = vsub.f32 %v60, %v667
    %v669 = vand.u32 %v668, 4294901760
    %670 = vmatpush1.msra.mxu0 %v669
    %v671 = vand.u32 %v73, 4294901760
    %v672 = vsub.f32 %v73, %v671
    %v673 = vand.u32 %v672, 4294901760
    %674 = vmatprep.subr.mxu0 %v673
    %v675 = vand.u32 %v72, 4294901760
    %v676 = vsub.f32 %v72, %v675
    %v677 = vand.u32 %v676, 4294901760
    %678 = vmatpush1.msra.mxu0 %v677
    %v679 = vand.u32 %v85, 4294901760
    %v680 = vsub.f32 %v85, %v679
    %v681 = vand.u32 %v680, 4294901760
    %682 = vmatprep.subr.mxu0 %v681
    %v683 = vand.u32 %v84, 4294901760
    %v684 = vsub.f32 %v84, %v683
    %v685 = vand.u32 %v684, 4294901760
    %686 = vmatpush1.msra.mxu0 %v685
    %v687 = vand.u32 %v97, 4294901760
    %v688 = vsub.f32 %v97, %v687
    %v689 = vand.u32 %v688, 4294901760
    %690 = vmatprep.subr.mxu0 %v689
    %v691 = vand.u32 %v96, 4294901760
    %v692 = vsub.f32 %v96, %v691
    %v693 = vand.u32 %v692, 4294901760
    %694 = vmatpush1.msra.mxu0 %v693
    %v695 = vand.u32 %v109, 4294901760
    %v696 = vsub.f32 %v109, %v695
    %v697 = vand.u32 %v696, 4294901760
    %698 = vmatprep.subr.mxu0 %v697
    %v699 = vand.u32 %v108, 4294901760
    %v700 = vsub.f32 %v108, %v699
    %v701 = vand.u32 %v700, 4294901760
    %702 = vmatpush1.msra.mxu0 %v701
    %v703 = vand.u32 %v121, 4294901760
    %v704 = vsub.f32 %v121, %v703
    %v705 = vand.u32 %v704, 4294901760
    %706 = vmatprep.subr.mxu0 %v705
    %v707 = vand.u32 %v120, 4294901760
    %v708 = vsub.f32 %v120, %v707
    %v709 = vand.u32 %v708, 4294901760
    %710 = vmatpush1.msra.mxu0 %v709
    %v711 = vand.u32 %v133, 4294901760
    %v712 = vsub.f32 %v133, %v711
    %v713 = vand.u32 %v712, 4294901760
    %714 = vmatprep.subr.mxu0 %v713
    %v715 = vand.u32 %v132, 4294901760
    %v716 = vsub.f32 %v132, %v715
    %v717 = vand.u32 %v716, 4294901760
    %718 = vmatpush1.msra.mxu0 %v717
    %v719 = vand.u32 %v145, 4294901760
    %v720 = vsub.f32 %v145, %v719
    %v721 = vand.u32 %v720, 4294901760
    %722 = vmatprep.subr.mxu0 %v721
    %v723 = vand.u32 %v144, 4294901760
    %v724 = vsub.f32 %v144, %v723
    %v725 = vand.u32 %v724, 4294901760
    %726 = vmatpush1.msra.mxu0 %v725
    %727 = vmatprep.subr.mxu0 0.0
    %728 = vmatpush1.msra.mxu0 0.0
    %729 = vmatprep.subr.mxu0 0.0
    %730 = vmatpush1.msra.mxu0 0.0
    %731 = vmatprep.subr.mxu0 0.0
    %732 = vmatpush1.msra.mxu0 0.0
    %733 = vmatprep.subr.mxu0 0.0
    %734 = vmatpush1.msra.mxu0 0.0
    %735 = vmatprep.subr.mxu0 0.0
    %736 = vmatpush1.msra.mxu0 0.0
    %737 = vmatprep.subr.mxu0 0.0
    %738 = vmatpush1.msra.mxu0 0.0
    %739 = vmatprep.subr.mxu0 0.0
    %740 = vmatpush1.msra.mxu0 0.0
    %741 = vmatprep.subr.mxu0 0.0
    %742 = vmatpush1.msra.mxu0 0.0
    %743 = vmatprep.subr.mxu0 0.0
    %744 = vmatpush1.msra.mxu0 0.0
    %745 = vmatprep.subr.mxu0 0.0
    %746 = vmatpush1.msra.mxu0 0.0
    %747 = vmatprep.subr.mxu0 0.0
    %748 = vmatpush1.msra.mxu0 0.0
    %749 = vmatprep.subr.mxu0 0.0
    %750 = vmatpush1.msra.mxu0 0.0
    %751 = vmatprep.subr.mxu0 0.0
    %752 = vmatpush1.msra.mxu0 0.0
    %753 = vmatprep.subr.mxu0 0.0
    %754 = vmatpush1.msra.mxu0 0.0
    %755 = vmatprep.subr.mxu0 0.0
    %756 = vmatpush1.msra.mxu0 0.0
    %757 = vmatprep.subr.mxu0 0.0
    %758 = vmatpush1.msra.mxu0 0.0
    %759 = vmatprep.subr.mxu0 0.0
    %760 = vmatpush1.msra.mxu0 0.0
    %761 = vmatprep.subr.mxu0 0.0
    %762 = vmatpush1.msra.mxu0 0.0
    %763 = vmatprep.subr.mxu0 0.0
    %764 = vmatpush1.msra.mxu0 0.0
    %765 = vmatprep.subr.mxu0 0.0
    %766 = vmatpush1.msra.mxu0 0.0
    %767 = vmatprep.subr.mxu0 0.0
    %768 = vmatpush1.msra.mxu0 0.0
    %769 = vmatprep.subr.mxu0 0.0
    %770 = vmatpush1.msra.mxu0 0.0
    %771 = vmatprep.subr.mxu0 0.0
    %772 = vmatpush1.msra.mxu0 0.0
    %773 = vmatprep.subr.mxu0 0.0
    %774 = vmatpush1.msra.mxu0 0.0
    %775 = vmatprep.mubr.f32.mxu0 0.0
    %v776 = vand.u32 %v222, 4294901760
    %777 = vmatmul.mubr.f32.gmra.mrb[0].mxu0 %v776
    %v778 = vpop.f32.mrb[0].mxu0
    %v779 = vadd.f32 %v659, %v778
    %v780 = vpop.f32.mrb[0].mxu0
    %v781 = vadd.f32 %v661, %v780
    %782 = vdwg.mxu0
    %v783 = vand.u32 %v61, 4294901760
    %784 = vmatprep.subr.mxu0 %v783
    %v785 = vand.u32 %v60, 4294901760
    %786 = vmatpush1.msra.mxu0 %v785
    %v787 = vand.u32 %v73, 4294901760
    %788 = vmatprep.subr.mxu0 %v787
    %v789 = vand.u32 %v72, 4294901760
    %790 = vmatpush1.msra.mxu0 %v789
    %v791 = vand.u32 %v85, 4294901760
    %792 = vmatprep.subr.mxu0 %v791
    %v793 = vand.u32 %v84, 4294901760
    %794 = vmatpush1.msra.mxu0 %v793
    %v795 = vand.u32 %v97, 4294901760
    %796 = vmatprep.subr.mxu0 %v795
    %v797 = vand.u32 %v96, 4294901760
    %798 = vmatpush1.msra.mxu0 %v797
    %v799 = vand.u32 %v109, 4294901760
    %800 = vmatprep.subr.mxu0 %v799
    %v801 = vand.u32 %v108, 4294901760
    %802 = vmatpush1.msra.mxu0 %v801
    %v803 = vand.u32 %v121, 4294901760
    %804 = vmatprep.subr.mxu0 %v803
    %v805 = vand.u32 %v120, 4294901760
    %806 = vmatpush1.msra.mxu0 %v805
    %v807 = vand.u32 %v133, 4294901760
    %808 = vmatprep.subr.mxu0 %v807
    %v809 = vand.u32 %v132, 4294901760
    %810 = vmatpush1.msra.mxu0 %v809
    %v811 = vand.u32 %v145, 4294901760
    %812 = vmatprep.subr.mxu0 %v811
    %v813 = vand.u32 %v144, 4294901760
    %814 = vmatpush1.msra.mxu0 %v813
    %815 = vmatprep.subr.mxu0 0.0
    %816 = vmatpush1.msra.mxu0 0.0
    %817 = vmatprep.subr.mxu0 0.0
    %818 = vmatpush1.msra.mxu0 0.0
    %819 = vmatprep.subr.mxu0 0.0
    %820 = vmatpush1.msra.mxu0 0.0
    %821 = vmatprep.subr.mxu0 0.0
    %822 = vmatpush1.msra.mxu0 0.0
    %823 = vmatprep.subr.mxu0 0.0
    %824 = vmatpush1.msra.mxu0 0.0
    %825 = vmatprep.subr.mxu0 0.0
    %826 = vmatpush1.msra.mxu0 0.0
    %827 = vmatprep.subr.mxu0 0.0
    %828 = vmatpush1.msra.mxu0 0.0
    %829 = vmatprep.subr.mxu0 0.0
    %830 = vmatpush1.msra.mxu0 0.0
    %831 = vmatprep.subr.mxu0 0.0
    %832 = vmatpush1.msra.mxu0 0.0
    %833 = vmatprep.subr.mxu0 0.0
    %834 = vmatpush1.msra.mxu0 0.0
    %835 = vmatprep.subr.mxu0 0.0
    %836 = vmatpush1.msra.mxu0 0.0
    %837 = vmatprep.subr.mxu0 0.0
    %838 = vmatpush1.msra.mxu0 0.0
    %839 = vmatprep.subr.mxu0 0.0
    %840 = vmatpush1.msra.mxu0 0.0
    %841 = vmatprep.subr.mxu0 0.0
    %842 = vmatpush1.msra.mxu0 0.0
    %843 = vmatprep.subr.mxu0 0.0
    %844 = vmatpush1.msra.mxu0 0.0
    %845 = vmatprep.subr.mxu0 0.0
    %846 = vmatpush1.msra.mxu0 0.0
    %847 = vmatprep.subr.mxu0 0.0
    %848 = vmatpush1.msra.mxu0 0.0
    %849 = vmatprep.subr.mxu0 0.0
    %850 = vmatpush1.msra.mxu0 0.0
    %851 = vmatprep.subr.mxu0 0.0
    %852 = vmatpush1.msra.mxu0 0.0
    %853 = vmatprep.subr.mxu0 0.0
    %854 = vmatpush1.msra.mxu0 0.0
    %855 = vmatprep.subr.mxu0 0.0
    %856 = vmatpush1.msra.mxu0 0.0
    %857 = vmatprep.subr.mxu0 0.0
    %858 = vmatpush1.msra.mxu0 0.0
    %859 = vmatprep.subr.mxu0 0.0
    %860 = vmatpush1.msra.mxu0 0.0
    %861 = vmatprep.subr.mxu0 0.0
    %862 = vmatpush1.msra.mxu0 0.0
    %863 = vmatprep.mubr.f32.mxu0 0.0
    %v864 = vand.u32 %v222, 4294901760
    %865 = vmatmul.mubr.f32.gmra.mrb[0].mxu0 %v864
    %v866 = vpop.f32.mrb[0].mxu0
    %v867 = vadd.f32 %v779, %v866
    %v868 = vpop.f32.mrb[0].mxu0
    %v869 = vadd.f32 %v781, %v868
    %870 = vdwg.mxu0
    %v871 = vand.u32 %v63, 4294901760
    %872 = vmatprep.subr.mxu0 %v871
    %v873 = vand.u32 %v62, 4294901760
    %874 = vmatpush1.msra.mxu0 %v873
    %v875 = vand.u32 %v75, 4294901760
    %876 = vmatprep.subr.mxu0 %v875
    %v877 = vand.u32 %v74, 4294901760
    %878 = vmatpush1.msra.mxu0 %v877
    %v879 = vand.u32 %v87, 4294901760
    %880 = vmatprep.subr.mxu0 %v879
    %v881 = vand.u32 %v86, 4294901760
    %882 = vmatpush1.msra.mxu0 %v881
    %v883 = vand.u32 %v99, 4294901760
    %884 = vmatprep.subr.mxu0 %v883
    %v885 = vand.u32 %v98, 4294901760
    %886 = vmatpush1.msra.mxu0 %v885
    %v887 = vand.u32 %v111, 4294901760
    %888 = vmatprep.subr.mxu0 %v887
    %v889 = vand.u32 %v110, 4294901760
    %890 = vmatpush1.msra.mxu0 %v889
    %v891 = vand.u32 %v123, 4294901760
    %892 = vmatprep.subr.mxu0 %v891
    %v893 = vand.u32 %v122, 4294901760
    %894 = vmatpush1.msra.mxu0 %v893
    %v895 = vand.u32 %v135, 4294901760
    %896 = vmatprep.subr.mxu0 %v895
    %v897 = vand.u32 %v134, 4294901760
    %898 = vmatpush1.msra.mxu0 %v897
    %v899 = vand.u32 %v147, 4294901760
    %900 = vmatprep.subr.mxu0 %v899
    %v901 = vand.u32 %v146, 4294901760
    %902 = vmatpush1.msra.mxu0 %v901
    %903 = vmatprep.subr.mxu0 0.0
    %904 = vmatpush1.msra.mxu0 0.0
    %905 = vmatprep.subr.mxu0 0.0
    %906 = vmatpush1.msra.mxu0 0.0
    %907 = vmatprep.subr.mxu0 0.0
    %908 = vmatpush1.msra.mxu0 0.0
    %909 = vmatprep.subr.mxu0 0.0
    %910 = vmatpush1.msra.mxu0 0.0
    %911 = vmatprep.subr.mxu0 0.0
    %912 = vmatpush1.msra.mxu0 0.0
    %913 = vmatprep.subr.mxu0 0.0
    %914 = vmatpush1.msra.mxu0 0.0
    %915 = vmatprep.subr.mxu0 0.0
    %916 = vmatpush1.msra.mxu0 0.0
    %917 = vmatprep.subr.mxu0 0.0
    %918 = vmatpush1.msra.mxu0 0.0
    %919 = vmatprep.subr.mxu0 0.0
    %920 = vmatpush1.msra.mxu0 0.0
    %921 = vmatprep.subr.mxu0 0.0
    %922 = vmatpush1.msra.mxu0 0.0
    %923 = vmatprep.subr.mxu0 0.0
    %924 = vmatpush1.msra.mxu0 0.0
    %925 = vmatprep.subr.mxu0 0.0
    %926 = vmatpush1.msra.mxu0 0.0
    %927 = vmatprep.subr.mxu0 0.0
    %928 = vmatpush1.msra.mxu0 0.0
    %929 = vmatprep.subr.mxu0 0.0
    %930 = vmatpush1.msra.mxu0 0.0
    %931 = vmatprep.subr.mxu0 0.0
    %932 = vmatpush1.msra.mxu0 0.0
    %933 = vmatprep.subr.mxu0 0.0
    %934 = vmatpush1.msra.mxu0 0.0
    %935 = vmatprep.subr.mxu0 0.0
    %936 = vmatpush1.msra.mxu0 0.0
    %937 = vmatprep.subr.mxu0 0.0
    %938 = vmatpush1.msra.mxu0 0.0
    %939 = vmatprep.subr.mxu0 0.0
    %940 = vmatpush1.msra.mxu0 0.0
    %941 = vmatprep.subr.mxu0 0.0
    %942 = vmatpush1.msra.mxu0 0.0
    %943 = vmatprep.subr.mxu0 0.0
    %944 = vmatpush1.msra.mxu0 0.0
    %945 = vmatprep.subr.mxu0 0.0
    %946 = vmatpush1.msra.mxu0 0.0
    %947 = vmatprep.subr.mxu0 0.0
    %948 = vmatpush1.msra.mxu0 0.0
    %949 = vmatprep.subr.mxu0 0.0
    %950 = vmatpush1.msra.mxu0 0.0
    %951 = vmatprep.mubr.f32.mxu0 0.0
    %v952 = vand.u32 %v222, 4294901760
    %v953 = vsub.f32 %v222, %v952
    %v954 = vand.u32 %v953, 4294901760
    %v955 = vsub.f32 %v953, %v954
    %v956 = vand.u32 %v955, 4294901760
    %957 = vmatmul.mubr.f32.gmra.mrb[0].mxu0 %v956
    %v958 = vpop.f32.mrb[0].mxu0
    %v959 = vadd.f32 %v171, %v958
    %v960 = vpop.f32.mrb[0].mxu0
    %v961 = vadd.f32 %v175, %v960
    %962 = vdwg.mxu0
    %v963 = vand.u32 %v63, 4294901760
    %v964 = vsub.f32 %v63, %v963
    %v965 = vand.u32 %v964, 4294901760
    %v966 = vsub.f32 %v964, %v965
    %v967 = vand.u32 %v966, 4294901760
    %968 = vmatprep.subr.mxu0 %v967
    %v969 = vand.u32 %v62, 4294901760
    %v970 = vsub.f32 %v62, %v969
    %v971 = vand.u32 %v970, 4294901760
    %v972 = vsub.f32 %v970, %v971
    %v973 = vand.u32 %v972, 4294901760
    %974 = vmatpush1.msra.mxu0 %v973
    %v975 = vand.u32 %v75, 4294901760
    %v976 = vsub.f32 %v75, %v975
    %v977 = vand.u32 %v976, 4294901760
    %v978 = vsub.f32 %v976, %v977
    %v979 = vand.u32 %v978, 4294901760
    %980 = vmatprep.subr.mxu0 %v979
    %v981 = vand.u32 %v74, 4294901760
    %v982 = vsub.f32 %v74, %v981
    %v983 = vand.u32 %v982, 4294901760
    %v984 = vsub.f32 %v982, %v983
    %v985 = vand.u32 %v984, 4294901760
    %986 = vmatpush1.msra.mxu0 %v985
    %v987 = vand.u32 %v87, 4294901760
    %v988 = vsub.f32 %v87, %v987
    %v989 = vand.u32 %v988, 4294901760
    %v990 = vsub.f32 %v988, %v989
    %v991 = vand.u32 %v990, 4294901760
    %992 = vmatprep.subr.mxu0 %v991
    %v993 = vand.u32 %v86, 4294901760
    %v994 = vsub.f32 %v86, %v993
    %v995 = vand.u32 %v994, 4294901760
    %v996 = vsub.f32 %v994, %v995
    %v997 = vand.u32 %v996, 4294901760
    %998 = vmatpush1.msra.mxu0 %v997
    %v999 = vand.u32 %v99, 4294901760
    %v1000 = vsub.f32 %v99, %v999
    %v1001 = vand.u32 %v1000, 4294901760
    %v1002 = vsub.f32 %v1000, %v1001
    %v1003 = vand.u32 %v1002, 4294901760
    %1004 = vmatprep.subr.mxu0 %v1003
    %v1005 = vand.u32 %v98, 4294901760
    %v1006 = vsub.f32 %v98, %v1005
    %v1007 = vand.u32 %v1006, 4294901760
    %v1008 = vsub.f32 %v1006, %v1007
    %v1009 = vand.u32 %v1008, 4294901760
    %1010 = vmatpush1.msra.mxu0 %v1009
    %v1011 = vand.u32 %v111, 4294901760
    %v1012 = vsub.f32 %v111, %v1011
    %v1013 = vand.u32 %v1012, 4294901760
    %v1014 = vsub.f32 %v1012, %v1013
    %v1015 = vand.u32 %v1014, 4294901760
    %1016 = vmatprep.subr.mxu0 %v1015
    %v1017 = vand.u32 %v110, 4294901760
    %v1018 = vsub.f32 %v110, %v1017
    %v1019 = vand.u32 %v1018, 4294901760
    %v1020 = vsub.f32 %v1018, %v1019
    %v1021 = vand.u32 %v1020, 4294901760
    %1022 = vmatpush1.msra.mxu0 %v1021
    %v1023 = vand.u32 %v123, 4294901760
    %v1024 = vsub.f32 %v123, %v1023
    %v1025 = vand.u32 %v1024, 4294901760
    %v1026 = vsub.f32 %v1024, %v1025
    %v1027 = vand.u32 %v1026, 4294901760
    %1028 = vmatprep.subr.mxu0 %v1027
    %v1029 = vand.u32 %v122, 4294901760
    %v1030 = vsub.f32 %v122, %v1029
    %v1031 = vand.u32 %v1030, 4294901760
    %v1032 = vsub.f32 %v1030, %v1031
    %v1033 = vand.u32 %v1032, 4294901760
    %1034 = vmatpush1.msra.mxu0 %v1033
    %v1035 = vand.u32 %v135, 4294901760
    %v1036 = vsub.f32 %v135, %v1035
    %v1037 = vand.u32 %v1036, 4294901760
    %v1038 = vsub.f32 %v1036, %v1037
    %v1039 = vand.u32 %v1038, 4294901760
    %1040 = vmatprep.subr.mxu0 %v1039
    %v1041 = vand.u32 %v134, 4294901760
    %v1042 = vsub.f32 %v134, %v1041
    %v1043 = vand.u32 %v1042, 4294901760
    %v1044 = vsub.f32 %v1042, %v1043
    %v1045 = vand.u32 %v1044, 4294901760
    %1046 = vmatpush1.msra.mxu0 %v1045
    %v1047 = vand.u32 %v147, 4294901760
    %v1048 = vsub.f32 %v147, %v1047
    %v1049 = vand.u32 %v1048, 4294901760
    %v1050 = vsub.f32 %v1048, %v1049
    %v1051 = vand.u32 %v1050, 4294901760
    %1052 = vmatprep.subr.mxu0 %v1051
    %v1053 = vand.u32 %v146, 4294901760
    %v1054 = vsub.f32 %v146, %v1053
    %v1055 = vand.u32 %v1054, 4294901760
    %v1056 = vsub.f32 %v1054, %v1055
    %v1057 = vand.u32 %v1056, 4294901760
    %1058 = vmatpush1.msra.mxu0 %v1057
    %1059 = vmatprep.subr.mxu0 0.0
    %1060 = vmatpush1.msra.mxu0 0.0
    %1061 = vmatprep.subr.mxu0 0.0
    %1062 = vmatpush1.msra.mxu0 0.0
    %1063 = vmatprep.subr.mxu0 0.0
    %1064 = vmatpush1.msra.mxu0 0.0
    %1065 = vmatprep.subr.mxu0 0.0
    %1066 = vmatpush1.msra.mxu0 0.0
    %1067 = vmatprep.subr.mxu0 0.0
    %1068 = vmatpush1.msra.mxu0 0.0
    %1069 = vmatprep.subr.mxu0 0.0
    %1070 = vmatpush1.msra.mxu0 0.0
    %1071 = vmatprep.subr.mxu0 0.0
    %1072 = vmatpush1.msra.mxu0 0.0
    %1073 = vmatprep.subr.mxu0 0.0
    %1074 = vmatpush1.msra.mxu0 0.0
    %1075 = vmatprep.subr.mxu0 0.0
    %1076 = vmatpush1.msra.mxu0 0.0
    %1077 = vmatprep.subr.mxu0 0.0
    %1078 = vmatpush1.msra.mxu0 0.0
    %1079 = vmatprep.subr.mxu0 0.0
    %1080 = vmatpush1.msra.mxu0 0.0
    %1081 = vmatprep.subr.mxu0 0.0
    %1082 = vmatpush1.msra.mxu0 0.0
    %1083 = vmatprep.subr.mxu0 0.0
    %1084 = vmatpush1.msra.mxu0 0.0
    %1085 = vmatprep.subr.mxu0 0.0
    %1086 = vmatpush1.msra.mxu0 0.0
    %1087 = vmatprep.subr.mxu0 0.0
    %1088 = vmatpush1.msra.mxu0 0.0
    %1089 = vmatprep.subr.mxu0 0.0
    %1090 = vmatpush1.msra.mxu0 0.0
    %1091 = vmatprep.subr.mxu0 0.0
    %1092 = vmatpush1.msra.mxu0 0.0
    %1093 = vmatprep.subr.mxu0 0.0
    %1094 = vmatpush1.msra.mxu0 0.0
    %1095 = vmatprep.subr.mxu0 0.0
    %1096 = vmatpush1.msra.mxu0 0.0
    %1097 = vmatprep.subr.mxu0 0.0
    %1098 = vmatpush1.msra.mxu0 0.0
    %1099 = vmatprep.subr.mxu0 0.0
    %1100 = vmatpush1.msra.mxu0 0.0
    %1101 = vmatprep.subr.mxu0 0.0
    %1102 = vmatpush1.msra.mxu0 0.0
    %1103 = vmatprep.subr.mxu0 0.0
    %1104 = vmatpush1.msra.mxu0 0.0
    %1105 = vmatprep.subr.mxu0 0.0
    %1106 = vmatpush1.msra.mxu0 0.0
    %1107 = vmatprep.mubr.f32.mxu0 0.0
    %v1108 = vand.u32 %v222, 4294901760
    %1109 = vmatmul.mubr.f32.gmra.mrb[0].mxu0 %v1108
    %v1110 = vpop.f32.mrb[0].mxu0
    %v1111 = vadd.f32 %v959, %v1110
    %v1112 = vpop.f32.mrb[0].mxu0
    %v1113 = vadd.f32 %v961, %v1112
    %1114 = vdwg.mxu0
    %v1115 = vand.u32 %v63, 4294901760
    %v1116 = vsub.f32 %v63, %v1115
    %1117 = vmatprep.subr.mxu0 %v1116
    %v1118 = vand.u32 %v62, 4294901760
    %v1119 = vsub.f32 %v62, %v1118
    %1120 = vmatpush1.msra.mxu0 %v1119
    %v1121 = vand.u32 %v75, 4294901760
    %v1122 = vsub.f32 %v75, %v1121
    %1123 = vmatprep.subr.mxu0 %v1122
    %v1124 = vand.u32 %v74, 4294901760
    %v1125 = vsub.f32 %v74, %v1124
    %1126 = vmatpush1.msra.mxu0 %v1125
    %v1127 = vand.u32 %v87, 4294901760
    %v1128 = vsub.f32 %v87, %v1127
    %1129 = vmatprep.subr.mxu0 %v1128
    %v1130 = vand.u32 %v86, 4294901760
    %v1131 = vsub.f32 %v86, %v1130
    %1132 = vmatpush1.msra.mxu0 %v1131
    %v1133 = vand.u32 %v99, 4294901760
    %v1134 = vsub.f32 %v99, %v1133
    %1135 = vmatprep.subr.mxu0 %v1134
    %v1136 = vand.u32 %v98, 4294901760
    %v1137 = vsub.f32 %v98, %v1136
    %1138 = vmatpush1.msra.mxu0 %v1137
    %v1139 = vand.u32 %v111, 4294901760
    %v1140 = vsub.f32 %v111, %v1139
    %1141 = vmatprep.subr.mxu0 %v1140
    %v1142 = vand.u32 %v110, 4294901760
    %v1143 = vsub.f32 %v110, %v1142
    %1144 = vmatpush1.msra.mxu0 %v1143
    %v1145 = vand.u32 %v123, 4294901760
    %v1146 = vsub.f32 %v123, %v1145
    %1147 = vmatprep.subr.mxu0 %v1146
    %v1148 = vand.u32 %v122, 4294901760
    %v1149 = vsub.f32 %v122, %v1148
    %1150 = vmatpush1.msra.mxu0 %v1149
    %v1151 = vand.u32 %v135, 4294901760
    %v1152 = vsub.f32 %v135, %v1151
    %1153 = vmatprep.subr.mxu0 %v1152
    %v1154 = vand.u32 %v134, 4294901760
    %v1155 = vsub.f32 %v134, %v1154
    %1156 = vmatpush1.msra.mxu0 %v1155
    %v1157 = vand.u32 %v147, 4294901760
    %v1158 = vsub.f32 %v147, %v1157
    %1159 = vmatprep.subr.mxu0 %v1158
    %v1160 = vand.u32 %v146, 4294901760
    %v1161 = vsub.f32 %v146, %v1160
    %1162 = vmatpush1.msra.mxu0 %v1161
    %1163 = vmatprep.subr.mxu0 0.0
    %1164 = vmatpush1.msra.mxu0 0.0
    %1165 = vmatprep.subr.mxu0 0.0
    %1166 = vmatpush1.msra.mxu0 0.0
    %1167 = vmatprep.subr.mxu0 0.0
    %1168 = vmatpush1.msra.mxu0 0.0
    %1169 = vmatprep.subr.mxu0 0.0
    %1170 = vmatpush1.msra.mxu0 0.0
    %1171 = vmatprep.subr.mxu0 0.0
    %1172 = vmatpush1.msra.mxu0 0.0
    %1173 = vmatprep.subr.mxu0 0.0
    %1174 = vmatpush1.msra.mxu0 0.0
    %1175 = vmatprep.subr.mxu0 0.0
    %1176 = vmatpush1.msra.mxu0 0.0
    %1177 = vmatprep.subr.mxu0 0.0
    %1178 = vmatpush1.msra.mxu0 0.0
    %1179 = vmatprep.subr.mxu0 0.0
    %1180 = vmatpush1.msra.mxu0 0.0
    %1181 = vmatprep.subr.mxu0 0.0
    %1182 = vmatpush1.msra.mxu0 0.0
    %1183 = vmatprep.subr.mxu0 0.0
    %1184 = vmatpush1.msra.mxu0 0.0
    %1185 = vmatprep.subr.mxu0 0.0
    %1186 = vmatpush1.msra.mxu0 0.0
    %1187 = vmatprep.subr.mxu0 0.0
    %1188 = vmatpush1.msra.mxu0 0.0
    %1189 = vmatprep.subr.mxu0 0.0
    %1190 = vmatpush1.msra.mxu0 0.0
    %1191 = vmatprep.subr.mxu0 0.0
    %1192 = vmatpush1.msra.mxu0 0.0
    %1193 = vmatprep.subr.mxu0 0.0
    %1194 = vmatpush1.msra.mxu0 0.0
    %1195 = vmatprep.subr.mxu0 0.0
    %1196 = vmatpush1.msra.mxu0 0.0
    %1197 = vmatprep.subr.mxu0 0.0
    %1198 = vmatpush1.msra.mxu0 0.0
    %1199 = vmatprep.subr.mxu0 0.0
    %1200 = vmatpush1.msra.mxu0 0.0
    %1201 = vmatprep.subr.mxu0 0.0
    %1202 = vmatpush1.msra.mxu0 0.0
    %1203 = vmatprep.subr.mxu0 0.0
    %1204 = vmatpush1.msra.mxu0 0.0
    %1205 = vmatprep.subr.mxu0 0.0
    %1206 = vmatpush1.msra.mxu0 0.0
    %1207 = vmatprep.subr.mxu0 0.0
    %1208 = vmatpush1.msra.mxu0 0.0
    %1209 = vmatprep.subr.mxu0 0.0
    %1210 = vmatpush1.msra.mxu0 0.0
    %1211 = vmatprep.mubr.f32.mxu0 0.0
    %v1212 = vand.u32 %v222, 4294901760
    %v1213 = vsub.f32 %v222, %v1212
    %1214 = vmatmul.mubr.f32.gmra.mrb[0].mxu0 %v1213
    %v1215 = vpop.f32.mrb[0].mxu0
    %v1216 = vadd.f32 %v1111, %v1215
    %v1217 = vpop.f32.mrb[0].mxu0
    %v1218 = vadd.f32 %v1113, %v1217
    %1219 = vdwg.mxu0
    %v1220 = vand.u32 %v63, 4294901760
    %1221 = vmatprep.subr.mxu0 %v1220
    %v1222 = vand.u32 %v62, 4294901760
    %1223 = vmatpush1.msra.mxu0 %v1222
    %v1224 = vand.u32 %v75, 4294901760
    %1225 = vmatprep.subr.mxu0 %v1224
    %v1226 = vand.u32 %v74, 4294901760
    %1227 = vmatpush1.msra.mxu0 %v1226
    %v1228 = vand.u32 %v87, 4294901760
    %1229 = vmatprep.subr.mxu0 %v1228
    %v1230 = vand.u32 %v86, 4294901760
    %1231 = vmatpush1.msra.mxu0 %v1230
    %v1232 = vand.u32 %v99, 4294901760
    %1233 = vmatprep.subr.mxu0 %v1232
    %v1234 = vand.u32 %v98, 4294901760
    %1235 = vmatpush1.msra.mxu0 %v1234
    %v1236 = vand.u32 %v111, 4294901760
    %1237 = vmatprep.subr.mxu0 %v1236
    %v1238 = vand.u32 %v110, 4294901760
    %1239 = vmatpush1.msra.mxu0 %v1238
    %v1240 = vand.u32 %v123, 4294901760
    %1241 = vmatprep.subr.mxu0 %v1240
    %v1242 = vand.u32 %v122, 4294901760
    %1243 = vmatpush1.msra.mxu0 %v1242
    %v1244 = vand.u32 %v135, 4294901760
    %1245 = vmatprep.subr.mxu0 %v1244
    %v1246 = vand.u32 %v134, 4294901760
    %1247 = vmatpush1.msra.mxu0 %v1246
    %v1248 = vand.u32 %v147, 4294901760
    %1249 = vmatprep.subr.mxu0 %v1248
    %v1250 = vand.u32 %v146, 4294901760
    %1251 = vmatpush1.msra.mxu0 %v1250
    %1252 = vmatprep.subr.mxu0 0.0
    %1253 = vmatpush1.msra.mxu0 0.0
    %1254 = vmatprep.subr.mxu0 0.0
    %1255 = vmatpush1.msra.mxu0 0.0
    %1256 = vmatprep.subr.mxu0 0.0
    %1257 = vmatpush1.msra.mxu0 0.0
    %1258 = vmatprep.subr.mxu0 0.0
    %1259 = vmatpush1.msra.mxu0 0.0
    %1260 = vmatprep.subr.mxu0 0.0
    %1261 = vmatpush1.msra.mxu0 0.0
    %1262 = vmatprep.subr.mxu0 0.0
    %1263 = vmatpush1.msra.mxu0 0.0
    %1264 = vmatprep.subr.mxu0 0.0
    %1265 = vmatpush1.msra.mxu0 0.0
    %1266 = vmatprep.subr.mxu0 0.0
    %1267 = vmatpush1.msra.mxu0 0.0
    %1268 = vmatprep.subr.mxu0 0.0
    %1269 = vmatpush1.msra.mxu0 0.0
    %1270 = vmatprep.subr.mxu0 0.0
    %1271 = vmatpush1.msra.mxu0 0.0
    %1272 = vmatprep.subr.mxu0 0.0
    %1273 = vmatpush1.msra.mxu0 0.0
    %1274 = vmatprep.subr.mxu0 0.0
    %1275 = vmatpush1.msra.mxu0 0.0
    %1276 = vmatprep.subr.mxu0 0.0
    %1277 = vmatpush1.msra.mxu0 0.0
    %1278 = vmatprep.subr.mxu0 0.0
    %1279 = vmatpush1.msra.mxu0 0.0
    %1280 = vmatprep.subr.mxu0 0.0
    %1281 = vmatpush1.msra.mxu0 0.0
    %1282 = vmatprep.subr.mxu0 0.0
    %1283 = vmatpush1.msra.mxu0 0.0
    %1284 = vmatprep.subr.mxu0 0.0
    %1285 = vmatpush1.msra.mxu0 0.0
    %1286 = vmatprep.subr.mxu0 0.0
    %1287 = vmatpush1.msra.mxu0 0.0
    %1288 = vmatprep.subr.mxu0 0.0
    %1289 = vmatpush1.msra.mxu0 0.0
    %1290 = vmatprep.subr.mxu0 0.0
    %1291 = vmatpush1.msra.mxu0 0.0
    %1292 = vmatprep.subr.mxu0 0.0
    %1293 = vmatpush1.msra.mxu0 0.0
    %1294 = vmatprep.subr.mxu0 0.0
    %1295 = vmatpush1.msra.mxu0 0.0
    %1296 = vmatprep.subr.mxu0 0.0
    %1297 = vmatpush1.msra.mxu0 0.0
    %1298 = vmatprep.subr.mxu0 0.0
    %1299 = vmatpush1.msra.mxu0 0.0
    %1300 = vmatprep.mubr.f32.mxu0 0.0
    %v1301 = vand.u32 %v222, 4294901760
    %v1302 = vsub.f32 %v222, %v1301
    %v1303 = vand.u32 %v1302, 4294901760
    %1304 = vmatmul.mubr.f32.gmra.mrb[0].mxu0 %v1303
    %v1305 = vpop.f32.mrb[0].mxu0
    %v1306 = vadd.f32 %v1216, %v1305
    %v1307 = vpop.f32.mrb[0].mxu0
    %v1308 = vadd.f32 %v1218, %v1307
    %1309 = vdwg.mxu0
    %v1310 = vand.u32 %v63, 4294901760
    %v1311 = vsub.f32 %v63, %v1310
    %v1312 = vand.u32 %v1311, 4294901760
    %1313 = vmatprep.subr.mxu0 %v1312
    %v1314 = vand.u32 %v62, 4294901760
    %v1315 = vsub.f32 %v62, %v1314
    %v1316 = vand.u32 %v1315, 4294901760
    %1317 = vmatpush1.msra.mxu0 %v1316
    %v1318 = vand.u32 %v75, 4294901760
    %v1319 = vsub.f32 %v75, %v1318
    %v1320 = vand.u32 %v1319, 4294901760
    %1321 = vmatprep.subr.mxu0 %v1320
    %v1322 = vand.u32 %v74, 4294901760
    %v1323 = vsub.f32 %v74, %v1322
    %v1324 = vand.u32 %v1323, 4294901760
    %1325 = vmatpush1.msra.mxu0 %v1324
    %v1326 = vand.u32 %v87, 4294901760
    %v1327 = vsub.f32 %v87, %v1326
    %v1328 = vand.u32 %v1327, 4294901760
    %1329 = vmatprep.subr.mxu0 %v1328
    %v1330 = vand.u32 %v86, 4294901760
    %v1331 = vsub.f32 %v86, %v1330
    %v1332 = vand.u32 %v1331, 4294901760
    %1333 = vmatpush1.msra.mxu0 %v1332
    %v1334 = vand.u32 %v99, 4294901760
    %v1335 = vsub.f32 %v99, %v1334
    %v1336 = vand.u32 %v1335, 4294901760
    %1337 = vmatprep.subr.mxu0 %v1336
    %v1338 = vand.u32 %v98, 4294901760
    %v1339 = vsub.f32 %v98, %v1338
    %v1340 = vand.u32 %v1339, 4294901760
    %1341 = vmatpush1.msra.mxu0 %v1340
    %v1342 = vand.u32 %v111, 4294901760
    %v1343 = vsub.f32 %v111, %v1342
    %v1344 = vand.u32 %v1343, 4294901760
    %1345 = vmatprep.subr.mxu0 %v1344
    %v1346 = vand.u32 %v110, 4294901760
    %v1347 = vsub.f32 %v110, %v1346
    %v1348 = vand.u32 %v1347, 4294901760
    %1349 = vmatpush1.msra.mxu0 %v1348
    %v1350 = vand.u32 %v123, 4294901760
    %v1351 = vsub.f32 %v123, %v1350
    %v1352 = vand.u32 %v1351, 4294901760
    %1353 = vmatprep.subr.mxu0 %v1352
    %v1354 = vand.u32 %v122, 4294901760
    %v1355 = vsub.f32 %v122, %v1354
    %v1356 = vand.u32 %v1355, 4294901760
    %1357 = vmatpush1.msra.mxu0 %v1356
    %v1358 = vand.u32 %v135, 4294901760
    %v1359 = vsub.f32 %v135, %v1358
    %v1360 = vand.u32 %v1359, 4294901760
    %1361 = vmatprep.subr.mxu0 %v1360
    %v1362 = vand.u32 %v134, 4294901760
    %v1363 = vsub.f32 %v134, %v1362
    %v1364 = vand.u32 %v1363, 4294901760
    %1365 = vmatpush1.msra.mxu0 %v1364
    %v1366 = vand.u32 %v147, 4294901760
    %v1367 = vsub.f32 %v147, %v1366
    %v1368 = vand.u32 %v1367, 4294901760
    %1369 = vmatprep.subr.mxu0 %v1368
    %v1370 = vand.u32 %v146, 4294901760
    %v1371 = vsub.f32 %v146, %v1370
    %v1372 = vand.u32 %v1371, 4294901760
    %1373 = vmatpush1.msra.mxu0 %v1372
    %1374 = vmatprep.subr.mxu0 0.0
    %1375 = vmatpush1.msra.mxu0 0.0
    %1376 = vmatprep.subr.mxu0 0.0
    %1377 = vmatpush1.msra.mxu0 0.0
    %1378 = vmatprep.subr.mxu0 0.0
    %1379 = vmatpush1.msra.mxu0 0.0
    %1380 = vmatprep.subr.mxu0 0.0
    %1381 = vmatpush1.msra.mxu0 0.0
    %1382 = vmatprep.subr.mxu0 0.0
    %1383 = vmatpush1.msra.mxu0 0.0
    %1384 = vmatprep.subr.mxu0 0.0
    %1385 = vmatpush1.msra.mxu0 0.0
    %1386 = vmatprep.subr.mxu0 0.0
    %1387 = vmatpush1.msra.mxu0 0.0
    %1388 = vmatprep.subr.mxu0 0.0
    %1389 = vmatpush1.msra.mxu0 0.0
    %1390 = vmatprep.subr.mxu0 0.0
    %1391 = vmatpush1.msra.mxu0 0.0
    %1392 = vmatprep.subr.mxu0 0.0
    %1393 = vmatpush1.msra.mxu0 0.0
    %1394 = vmatprep.subr.mxu0 0.0
    %1395 = vmatpush1.msra.mxu0 0.0
    %1396 = vmatprep.subr.mxu0 0.0
    %1397 = vmatpush1.msra.mxu0 0.0
    %1398 = vmatprep.subr.mxu0 0.0
    %1399 = vmatpush1.msra.mxu0 0.0
    %1400 = vmatprep.subr.mxu0 0.0
    %1401 = vmatpush1.msra.mxu0 0.0
    %1402 = vmatprep.subr.mxu0 0.0
    %1403 = vmatpush1.msra.mxu0 0.0
    %1404 = vmatprep.subr.mxu0 0.0
    %1405 = vmatpush1.msra.mxu0 0.0
    %1406 = vmatprep.subr.mxu0 0.0
    %1407 = vmatpush1.msra.mxu0 0.0
    %1408 = vmatprep.subr.mxu0 0.0
    %1409 = vmatpush1.msra.mxu0 0.0
    %1410 = vmatprep.subr.mxu0 0.0
    %1411 = vmatpush1.msra.mxu0 0.0
    %1412 = vmatprep.subr.mxu0 0.0
    %1413 = vmatpush1.msra.mxu0 0.0
    %1414 = vmatprep.subr.mxu0 0.0
    %1415 = vmatpush1.msra.mxu0 0.0
    %1416 = vmatprep.subr.mxu0 0.0
    %1417 = vmatpush1.msra.mxu0 0.0
    %1418 = vmatprep.subr.mxu0 0.0
    %1419 = vmatpush1.msra.mxu0 0.0
    %1420 = vmatprep.subr.mxu0 0.0
    %1421 = vmatpush1.msra.mxu0 0.0
    %1422 = vmatprep.mubr.f32.mxu0 0.0
    %v1423 = vand.u32 %v222, 4294901760
    %1424 = vmatmul.mubr.f32.gmra.mrb[0].mxu0 %v1423
    %v1425 = vpop.f32.mrb[0].mxu0
    %v1426 = vadd.f32 %v1306, %v1425
    %v1427 = vpop.f32.mrb[0].mxu0
    %v1428 = vadd.f32 %v1308, %v1427
    %1429 = vdwg.mxu0
    %v1430 = vand.u32 %v63, 4294901760
    %1431 = vmatprep.subr.mxu0 %v1430
    %v1432 = vand.u32 %v62, 4294901760
    %1433 = vmatpush1.msra.mxu0 %v1432
    %v1434 = vand.u32 %v75, 4294901760
    %1435 = vmatprep.subr.mxu0 %v1434
    %v1436 = vand.u32 %v74, 4294901760
    %1437 = vmatpush1.msra.mxu0 %v1436
    %v1438 = vand.u32 %v87, 4294901760
    %1439 = vmatprep.subr.mxu0 %v1438
    %v1440 = vand.u32 %v86, 4294901760
    %1441 = vmatpush1.msra.mxu0 %v1440
    %v1442 = vand.u32 %v99, 4294901760
    %1443 = vmatprep.subr.mxu0 %v1442
    %v1444 = vand.u32 %v98, 4294901760
    %1445 = vmatpush1.msra.mxu0 %v1444
    %v1446 = vand.u32 %v111, 4294901760
    %1447 = vmatprep.subr.mxu0 %v1446
    %v1448 = vand.u32 %v110, 4294901760
    %1449 = vmatpush1.msra.mxu0 %v1448
    %v1450 = vand.u32 %v123, 4294901760
    %1451 = vmatprep.subr.mxu0 %v1450
    %v1452 = vand.u32 %v122, 4294901760
    %1453 = vmatpush1.msra.mxu0 %v1452
    %v1454 = vand.u32 %v135, 4294901760
    %1455 = vmatprep.subr.mxu0 %v1454
    %v1456 = vand.u32 %v134, 4294901760
    %1457 = vmatpush1.msra.mxu0 %v1456
    %v1458 = vand.u32 %v147, 4294901760
    %1459 = vmatprep.subr.mxu0 %v1458
    %v1460 = vand.u32 %v146, 4294901760
    %1461 = vmatpush1.msra.mxu0 %v1460
    %1462 = vmatprep.subr.mxu0 0.0
    %1463 = vmatpush1.msra.mxu0 0.0
    %1464 = vmatprep.subr.mxu0 0.0
    %1465 = vmatpush1.msra.mxu0 0.0
    %1466 = vmatprep.subr.mxu0 0.0
    %1467 = vmatpush1.msra.mxu0 0.0
    %1468 = vmatprep.subr.mxu0 0.0
    %1469 = vmatpush1.msra.mxu0 0.0
    %1470 = vmatprep.subr.mxu0 0.0
    %1471 = vmatpush1.msra.mxu0 0.0
    %1472 = vmatprep.subr.mxu0 0.0
    %1473 = vmatpush1.msra.mxu0 0.0
    %1474 = vmatprep.subr.mxu0 0.0
    %1475 = vmatpush1.msra.mxu0 0.0
    %1476 = vmatprep.subr.mxu0 0.0
    %1477 = vmatpush1.msra.mxu0 0.0
    %1478 = vmatprep.subr.mxu0 0.0
    %1479 = vmatpush1.msra.mxu0 0.0
    %1480 = vmatprep.subr.mxu0 0.0
    %1481 = vmatpush1.msra.mxu0 0.0
    %1482 = vmatprep.subr.mxu0 0.0
    %1483 = vmatpush1.msra.mxu0 0.0
    %1484 = vmatprep.subr.mxu0 0.0
    %1485 = vmatpush1.msra.mxu0 0.0
    %1486 = vmatprep.subr.mxu0 0.0
    %1487 = vmatpush1.msra.mxu0 0.0
    %1488 = vmatprep.subr.mxu0 0.0
    %1489 = vmatpush1.msra.mxu0 0.0
    %1490 = vmatprep.subr.mxu0 0.0
    %1491 = vmatpush1.msra.mxu0 0.0
    %1492 = vmatprep.subr.mxu0 0.0
    %1493 = vmatpush1.msra.mxu0 0.0
    %1494 = vmatprep.subr.mxu0 0.0
    %1495 = vmatpush1.msra.mxu0 0.0
    %1496 = vmatprep.subr.mxu0 0.0
    %1497 = vmatpush1.msra.mxu0 0.0
    %1498 = vmatprep.subr.mxu0 0.0
    %1499 = vmatpush1.msra.mxu0 0.0
    %1500 = vmatprep.subr.mxu0 0.0
    %1501 = vmatpush1.msra.mxu0 0.0
    %1502 = vmatprep.subr.mxu0 0.0
    %1503 = vmatpush1.msra.mxu0 0.0
    %1504 = vmatprep.subr.mxu0 0.0
    %1505 = vmatpush1.msra.mxu0 0.0
    %1506 = vmatprep.subr.mxu0 0.0
    %1507 = vmatpush1.msra.mxu0 0.0
    %1508 = vmatprep.subr.mxu0 0.0
    %1509 = vmatpush1.msra.mxu0 0.0
    %1510 = vmatprep.mubr.f32.mxu0 0.0
    %v1511 = vand.u32 %v222, 4294901760
    %1512 = vmatmul.mubr.f32.gmra.mrb[0].mxu0 %v1511
    %v1513 = vpop.f32.mrb[0].mxu0
    %v1514 = vadd.f32 %v1426, %v1513
    %v1515 = vpop.f32.mrb[0].mxu0
    %v1516 = vadd.f32 %v1428, %v1515
    %1517 = vdwg.mxu0
    %v1518 = vand.u32 %v65, 4294901760
    %1519 = vmatprep.subr.mxu0 %v1518
    %v1520 = vand.u32 %v64, 4294901760
    %1521 = vmatpush1.msra.mxu0 %v1520
    %v1522 = vand.u32 %v77, 4294901760
    %1523 = vmatprep.subr.mxu0 %v1522
    %v1524 = vand.u32 %v76, 4294901760
    %1525 = vmatpush1.msra.mxu0 %v1524
    %v1526 = vand.u32 %v89, 4294901760
    %1527 = vmatprep.subr.mxu0 %v1526
    %v1528 = vand.u32 %v88, 4294901760
    %1529 = vmatpush1.msra.mxu0 %v1528
    %v1530 = vand.u32 %v101, 4294901760
    %1531 = vmatprep.subr.mxu0 %v1530
    %v1532 = vand.u32 %v100, 4294901760
    %1533 = vmatpush1.msra.mxu0 %v1532
    %v1534 = vand.u32 %v113, 4294901760
    %1535 = vmatprep.subr.mxu0 %v1534
    %v1536 = vand.u32 %v112, 4294901760
    %1537 = vmatpush1.msra.mxu0 %v1536
    %v1538 = vand.u32 %v125, 4294901760
    %1539 = vmatprep.subr.mxu0 %v1538
    %v1540 = vand.u32 %v124, 4294901760
    %1541 = vmatpush1.msra.mxu0 %v1540
    %v1542 = vand.u32 %v137, 4294901760
    %1543 = vmatprep.subr.mxu0 %v1542
    %v1544 = vand.u32 %v136, 4294901760
    %1545 = vmatpush1.msra.mxu0 %v1544
    %v1546 = vand.u32 %v149, 4294901760
    %1547 = vmatprep.subr.mxu0 %v1546
    %v1548 = vand.u32 %v148, 4294901760
    %1549 = vmatpush1.msra.mxu0 %v1548
    %1550 = vmatprep.subr.mxu0 0.0
    %1551 = vmatpush1.msra.mxu0 0.0
    %1552 = vmatprep.subr.mxu0 0.0
    %1553 = vmatpush1.msra.mxu0 0.0
    %1554 = vmatprep.subr.mxu0 0.0
    %1555 = vmatpush1.msra.mxu0 0.0
    %1556 = vmatprep.subr.mxu0 0.0
    %1557 = vmatpush1.msra.mxu0 0.0
    %1558 = vmatprep.subr.mxu0 0.0
    %1559 = vmatpush1.msra.mxu0 0.0
    %1560 = vmatprep.subr.mxu0 0.0
    %1561 = vmatpush1.msra.mxu0 0.0
    %1562 = vmatprep.subr.mxu0 0.0
    %1563 = vmatpush1.msra.mxu0 0.0
    %1564 = vmatprep.subr.mxu0 0.0
    %1565 = vmatpush1.msra.mxu0 0.0
    %1566 = vmatprep.subr.mxu0 0.0
    %1567 = vmatpush1.msra.mxu0 0.0
    %1568 = vmatprep.subr.mxu0 0.0
    %1569 = vmatpush1.msra.mxu0 0.0
    %1570 = vmatprep.subr.mxu0 0.0
    %1571 = vmatpush1.msra.mxu0 0.0
    %1572 = vmatprep.subr.mxu0 0.0
    %1573 = vmatpush1.msra.mxu0 0.0
    %1574 = vmatprep.subr.mxu0 0.0
    %1575 = vmatpush1.msra.mxu0 0.0
    %1576 = vmatprep.subr.mxu0 0.0
    %1577 = vmatpush1.msra.mxu0 0.0
    %1578 = vmatprep.subr.mxu0 0.0
    %1579 = vmatpush1.msra.mxu0 0.0
    %1580 = vmatprep.subr.mxu0 0.0
    %1581 = vmatpush1.msra.mxu0 0.0
    %1582 = vmatprep.subr.mxu0 0.0
    %1583 = vmatpush1.msra.mxu0 0.0
    %1584 = vmatprep.subr.mxu0 0.0
    %1585 = vmatpush1.msra.mxu0 0.0
    %1586 = vmatprep.subr.mxu0 0.0
    %1587 = vmatpush1.msra.mxu0 0.0
    %1588 = vmatprep.subr.mxu0 0.0
    %1589 = vmatpush1.msra.mxu0 0.0
    %1590 = vmatprep.subr.mxu0 0.0
    %1591 = vmatpush1.msra.mxu0 0.0
    %1592 = vmatprep.subr.mxu0 0.0
    %1593 = vmatpush1.msra.mxu0 0.0
    %1594 = vmatprep.subr.mxu0 0.0
    %1595 = vmatpush1.msra.mxu0 0.0
    %1596 = vmatprep.subr.mxu0 0.0
    %1597 = vmatpush1.msra.mxu0 0.0
    %1598 = vmatprep.mubr.f32.mxu0 0.0
    %v1599 = vand.u32 %v222, 4294901760
    %v1600 = vsub.f32 %v222, %v1599
    %v1601 = vand.u32 %v1600, 4294901760
    %v1602 = vsub.f32 %v1600, %v1601
    %v1603 = vand.u32 %v1602, 4294901760
    %1604 = vmatmul.mubr.f32.gmra.mrb[0].mxu0 %v1603
    %v1605 = vpop.f32.mrb[0].mxu0
    %v1606 = vadd.f32 %v179, %v1605
    %v1607 = vpop.f32.mrb[0].mxu0
    %v1608 = vadd.f32 %v183, %v1607
    %1609 = vdwg.mxu0
    %v1610 = vand.u32 %v65, 4294901760
    %v1611 = vsub.f32 %v65, %v1610
    %v1612 = vand.u32 %v1611, 4294901760
    %v1613 = vsub.f32 %v1611, %v1612
    %v1614 = vand.u32 %v1613, 4294901760
    %1615 = vmatprep.subr.mxu0 %v1614
    %v1616 = vand.u32 %v64, 4294901760
    %v1617 = vsub.f32 %v64, %v1616
    %v1618 = vand.u32 %v1617, 4294901760
    %v1619 = vsub.f32 %v1617, %v1618
    %v1620 = vand.u32 %v1619, 4294901760
    %1621 = vmatpush1.msra.mxu0 %v1620
    %v1622 = vand.u32 %v77, 4294901760
    %v1623 = vsub.f32 %v77, %v1622
    %v1624 = vand.u32 %v1623, 4294901760
    %v1625 = vsub.f32 %v1623, %v1624
    %v1626 = vand.u32 %v1625, 4294901760
    %1627 = vmatprep.subr.mxu0 %v1626
    %v1628 = vand.u32 %v76, 4294901760
    %v1629 = vsub.f32 %v76, %v1628
    %v1630 = vand.u32 %v1629, 4294901760
    %v1631 = vsub.f32 %v1629, %v1630
    %v1632 = vand.u32 %v1631, 4294901760
    %1633 = vmatpush1.msra.mxu0 %v1632
    %v1634 = vand.u32 %v89, 4294901760
    %v1635 = vsub.f32 %v89, %v1634
    %v1636 = vand.u32 %v1635, 4294901760
    %v1637 = vsub.f32 %v1635, %v1636
    %v1638 = vand.u32 %v1637, 4294901760
    %1639 = vmatprep.subr.mxu0 %v1638
    %v1640 = vand.u32 %v88, 4294901760
    %v1641 = vsub.f32 %v88, %v1640
    %v1642 = vand.u32 %v1641, 4294901760
    %v1643 = vsub.f32 %v1641, %v1642
    %v1644 = vand.u32 %v1643, 4294901760
    %1645 = vmatpush1.msra.mxu0 %v1644
    %v1646 = vand.u32 %v101, 4294901760
    %v1647 = vsub.f32 %v101, %v1646
    %v1648 = vand.u32 %v1647, 4294901760
    %v1649 = vsub.f32 %v1647, %v1648
    %v1650 = vand.u32 %v1649, 4294901760
    %1651 = vmatprep.subr.mxu0 %v1650
    %v1652 = vand.u32 %v100, 4294901760
    %v1653 = vsub.f32 %v100, %v1652
    %v1654 = vand.u32 %v1653, 4294901760
    %v1655 = vsub.f32 %v1653, %v1654
    %v1656 = vand.u32 %v1655, 4294901760
    %1657 = vmatpush1.msra.mxu0 %v1656
    %v1658 = vand.u32 %v113, 4294901760
    %v1659 = vsub.f32 %v113, %v1658
    %v1660 = vand.u32 %v1659, 4294901760
    %v1661 = vsub.f32 %v1659, %v1660
    %v1662 = vand.u32 %v1661, 4294901760
    %1663 = vmatprep.subr.mxu0 %v1662
    %v1664 = vand.u32 %v112, 4294901760
    %v1665 = vsub.f32 %v112, %v1664
    %v1666 = vand.u32 %v1665, 4294901760
    %v1667 = vsub.f32 %v1665, %v1666
    %v1668 = vand.u32 %v1667, 4294901760
    %1669 = vmatpush1.msra.mxu0 %v1668
    %v1670 = vand.u32 %v125, 4294901760
    %v1671 = vsub.f32 %v125, %v1670
    %v1672 = vand.u32 %v1671, 4294901760
    %v1673 = vsub.f32 %v1671, %v1672
    %v1674 = vand.u32 %v1673, 4294901760
    %1675 = vmatprep.subr.mxu0 %v1674
    %v1676 = vand.u32 %v124, 4294901760
    %v1677 = vsub.f32 %v124, %v1676
    %v1678 = vand.u32 %v1677, 4294901760
    %v1679 = vsub.f32 %v1677, %v1678
    %v1680 = vand.u32 %v1679, 4294901760
    %1681 = vmatpush1.msra.mxu0 %v1680
    %v1682 = vand.u32 %v137, 4294901760
    %v1683 = vsub.f32 %v137, %v1682
    %v1684 = vand.u32 %v1683, 4294901760
    %v1685 = vsub.f32 %v1683, %v1684
    %v1686 = vand.u32 %v1685, 4294901760
    %1687 = vmatprep.subr.mxu0 %v1686
    %v1688 = vand.u32 %v136, 4294901760
    %v1689 = vsub.f32 %v136, %v1688
    %v1690 = vand.u32 %v1689, 4294901760
    %v1691 = vsub.f32 %v1689, %v1690
    %v1692 = vand.u32 %v1691, 4294901760
    %1693 = vmatpush1.msra.mxu0 %v1692
    %v1694 = vand.u32 %v149, 4294901760
    %v1695 = vsub.f32 %v149, %v1694
    %v1696 = vand.u32 %v1695, 4294901760
    %v1697 = vsub.f32 %v1695, %v1696
    %v1698 = vand.u32 %v1697, 4294901760
    %1699 = vmatprep.subr.mxu0 %v1698
    %v1700 = vand.u32 %v148, 4294901760
    %v1701 = vsub.f32 %v148, %v1700
    %v1702 = vand.u32 %v1701, 4294901760
    %v1703 = vsub.f32 %v1701, %v1702
    %v1704 = vand.u32 %v1703, 4294901760
    %1705 = vmatpush1.msra.mxu0 %v1704
    %1706 = vmatprep.subr.mxu0 0.0
    %1707 = vmatpush1.msra.mxu0 0.0
    %1708 = vmatprep.subr.mxu0 0.0
    %1709 = vmatpush1.msra.mxu0 0.0
    %1710 = vmatprep.subr.mxu0 0.0
    %1711 = vmatpush1.msra.mxu0 0.0
    %1712 = vmatprep.subr.mxu0 0.0
    %1713 = vmatpush1.msra.mxu0 0.0
    %1714 = vmatprep.subr.mxu0 0.0
    %1715 = vmatpush1.msra.mxu0 0.0
    %1716 = vmatprep.subr.mxu0 0.0
    %1717 = vmatpush1.msra.mxu0 0.0
    %1718 = vmatprep.subr.mxu0 0.0
    %1719 = vmatpush1.msra.mxu0 0.0
    %1720 = vmatprep.subr.mxu0 0.0
    %1721 = vmatpush1.msra.mxu0 0.0
    %1722 = vmatprep.subr.mxu0 0.0
    %1723 = vmatpush1.msra.mxu0 0.0
    %1724 = vmatprep.subr.mxu0 0.0
    %1725 = vmatpush1.msra.mxu0 0.0
    %1726 = vmatprep.subr.mxu0 0.0
    %1727 = vmatpush1.msra.mxu0 0.0
    %1728 = vmatprep.subr.mxu0 0.0
    %1729 = vmatpush1.msra.mxu0 0.0
    %1730 = vmatprep.subr.mxu0 0.0
    %1731 = vmatpush1.msra.mxu0 0.0
    %1732 = vmatprep.subr.mxu0 0.0
    %1733 = vmatpush1.msra.mxu0 0.0
    %1734 = vmatprep.subr.mxu0 0.0
    %1735 = vmatpush1.msra.mxu0 0.0
    %1736 = vmatprep.subr.mxu0 0.0
    %1737 = vmatpush1.msra.mxu0 0.0
    %1738 = vmatprep.subr.mxu0 0.0
    %1739 = vmatpush1.msra.mxu0 0.0
    %1740 = vmatprep.subr.mxu0 0.0
    %1741 = vmatpush1.msra.mxu0 0.0
    %1742 = vmatprep.subr.mxu0 0.0
    %1743 = vmatpush1.msra.mxu0 0.0
    %1744 = vmatprep.subr.mxu0 0.0
    %1745 = vmatpush1.msra.mxu0 0.0
    %1746 = vmatprep.subr.mxu0 0.0
    %1747 = vmatpush1.msra.mxu0 0.0
    %1748 = vmatprep.subr.mxu0 0.0
    %1749 = vmatpush1.msra.mxu0 0.0
    %1750 = vmatprep.subr.mxu0 0.0
    %1751 = vmatpush1.msra.mxu0 0.0
    %1752 = vmatprep.subr.mxu0 0.0
    %1753 = vmatpush1.msra.mxu0 0.0
    %1754 = vmatprep.mubr.f32.mxu0 0.0
    %v1755 = vand.u32 %v222, 4294901760
    %1756 = vmatmul.mubr.f32.gmra.mrb[0].mxu0 %v1755
    %v1757 = vpop.f32.mrb[0].mxu0
    %v1758 = vadd.f32 %v1606, %v1757
    %v1759 = vpop.f32.mrb[0].mxu0
    %v1760 = vadd.f32 %v1608, %v1759
    %1761 = vdwg.mxu0
    %v1762 = vand.u32 %v65, 4294901760
    %v1763 = vsub.f32 %v65, %v1762
    %1764 = vmatprep.subr.mxu0 %v1763
    %v1765 = vand.u32 %v64, 4294901760
    %v1766 = vsub.f32 %v64, %v1765
    %1767 = vmatpush1.msra.mxu0 %v1766
    %v1768 = vand.u32 %v77, 4294901760
    %v1769 = vsub.f32 %v77, %v1768
    %1770 = vmatprep.subr.mxu0 %v1769
    %v1771 = vand.u32 %v76, 4294901760
    %v1772 = vsub.f32 %v76, %v1771
    %1773 = vmatpush1.msra.mxu0 %v1772
    %v1774 = vand.u32 %v89, 4294901760
    %v1775 = vsub.f32 %v89, %v1774
    %1776 = vmatprep.subr.mxu0 %v1775
    %v1777 = vand.u32 %v88, 4294901760
    %v1778 = vsub.f32 %v88, %v1777
    %1779 = vmatpush1.msra.mxu0 %v1778
    %v1780 = vand.u32 %v101, 4294901760
    %v1781 = vsub.f32 %v101, %v1780
    %1782 = vmatprep.subr.mxu0 %v1781
    %v1783 = vand.u32 %v100, 4294901760
    %v1784 = vsub.f32 %v100, %v1783
    %1785 = vmatpush1.msra.mxu0 %v1784
    %v1786 = vand.u32 %v113, 4294901760
    %v1787 = vsub.f32 %v113, %v1786
    %1788 = vmatprep.subr.mxu0 %v1787
    %v1789 = vand.u32 %v112, 4294901760
    %v1790 = vsub.f32 %v112, %v1789
    %1791 = vmatpush1.msra.mxu0 %v1790
    %v1792 = vand.u32 %v125, 4294901760
    %v1793 = vsub.f32 %v125, %v1792
    %1794 = vmatprep.subr.mxu0 %v1793
    %v1795 = vand.u32 %v124, 4294901760
    %v1796 = vsub.f32 %v124, %v1795
    %1797 = vmatpush1.msra.mxu0 %v1796
    %v1798 = vand.u32 %v137, 4294901760
    %v1799 = vsub.f32 %v137, %v1798
    %1800 = vmatprep.subr.mxu0 %v1799
    %v1801 = vand.u32 %v136, 4294901760
    %v1802 = vsub.f32 %v136, %v1801
    %1803 = vmatpush1.msra.mxu0 %v1802
    %v1804 = vand.u32 %v149, 4294901760
    %v1805 = vsub.f32 %v149, %v1804
    %1806 = vmatprep.subr.mxu0 %v1805
    %v1807 = vand.u32 %v148, 4294901760
    %v1808 = vsub.f32 %v148, %v1807
    %1809 = vmatpush1.msra.mxu0 %v1808
    %1810 = vmatprep.subr.mxu0 0.0
    %1811 = vmatpush1.msra.mxu0 0.0
    %1812 = vmatprep.subr.mxu0 0.0
    %1813 = vmatpush1.msra.mxu0 0.0
    %1814 = vmatprep.subr.mxu0 0.0
    %1815 = vmatpush1.msra.mxu0 0.0
    %1816 = vmatprep.subr.mxu0 0.0
    %1817 = vmatpush1.msra.mxu0 0.0
    %1818 = vmatprep.subr.mxu0 0.0
    %1819 = vmatpush1.msra.mxu0 0.0
    %1820 = vmatprep.subr.mxu0 0.0
    %1821 = vmatpush1.msra.mxu0 0.0
    %1822 = vmatprep.subr.mxu0 0.0
    %1823 = vmatpush1.msra.mxu0 0.0
    %1824 = vmatprep.subr.mxu0 0.0
    %1825 = vmatpush1.msra.mxu0 0.0
    %1826 = vmatprep.subr.mxu0 0.0
    %1827 = vmatpush1.msra.mxu0 0.0
    %1828 = vmatprep.subr.mxu0 0.0
    %1829 = vmatpush1.msra.mxu0 0.0
    %1830 = vmatprep.subr.mxu0 0.0
    %1831 = vmatpush1.msra.mxu0 0.0
    %1832 = vmatprep.subr.mxu0 0.0
    %1833 = vmatpush1.msra.mxu0 0.0
    %1834 = vmatprep.subr.mxu0 0.0
    %1835 = vmatpush1.msra.mxu0 0.0
    %1836 = vmatprep.subr.mxu0 0.0
    %1837 = vmatpush1.msra.mxu0 0.0
    %1838 = vmatprep.subr.mxu0 0.0
    %1839 = vmatpush1.msra.mxu0 0.0
    %1840 = vmatprep.subr.mxu0 0.0
    %1841 = vmatpush1.msra.mxu0 0.0
    %1842 = vmatprep.subr.mxu0 0.0
    %1843 = vmatpush1.msra.mxu0 0.0
    %1844 = vmatprep.subr.mxu0 0.0
    %1845 = vmatpush1.msra.mxu0 0.0
    %1846 = vmatprep.subr.mxu0 0.0
    %1847 = vmatpush1.msra.mxu0 0.0
    %1848 = vmatprep.subr.mxu0 0.0
    %1849 = vmatpush1.msra.mxu0 0.0
    %1850 = vmatprep.subr.mxu0 0.0
    %1851 = vmatpush1.msra.mxu0 0.0
    %1852 = vmatprep.subr.mxu0 0.0
    %1853 = vmatpush1.msra.mxu0 0.0
    %1854 = vmatprep.subr.mxu0 0.0
    %1855 = vmatpush1.msra.mxu0 0.0
    %1856 = vmatprep.subr.mxu0 0.0
    %1857 = vmatpush1.msra.mxu0 0.0
    %1858 = vmatprep.mubr.f32.mxu0 0.0
    %v1859 = vand.u32 %v222, 4294901760
    %v1860 = vsub.f32 %v222, %v1859
    %1861 = vmatmul.mubr.f32.gmra.mrb[0].mxu0 %v1860
    %v1862 = vpop.f32.mrb[0].mxu0
    %v1863 = vadd.f32 %v1758, %v1862
    %v1864 = vpop.f32.mrb[0].mxu0
    %v1865 = vadd.f32 %v1760, %v1864
    %1866 = vdwg.mxu0
    %v1867 = vand.u32 %v65, 4294901760
    %1868 = vmatprep.subr.mxu0 %v1867
    %v1869 = vand.u32 %v64, 4294901760
    %1870 = vmatpush1.msra.mxu0 %v1869
    %v1871 = vand.u32 %v77, 4294901760
    %1872 = vmatprep.subr.mxu0 %v1871
    %v1873 = vand.u32 %v76, 4294901760
    %1874 = vmatpush1.msra.mxu0 %v1873
    %v1875 = vand.u32 %v89, 4294901760
    %1876 = vmatprep.subr.mxu0 %v1875
    %v1877 = vand.u32 %v88, 4294901760
    %1878 = vmatpush1.msra.mxu0 %v1877
    %v1879 = vand.u32 %v101, 4294901760
    %1880 = vmatprep.subr.mxu0 %v1879
    %v1881 = vand.u32 %v100, 4294901760
    %1882 = vmatpush1.msra.mxu0 %v1881
    %v1883 = vand.u32 %v113, 4294901760
    %1884 = vmatprep.subr.mxu0 %v1883
    %v1885 = vand.u32 %v112, 4294901760
    %1886 = vmatpush1.msra.mxu0 %v1885
    %v1887 = vand.u32 %v125, 4294901760
    %1888 = vmatprep.subr.mxu0 %v1887
    %v1889 = vand.u32 %v124, 4294901760
    %1890 = vmatpush1.msra.mxu0 %v1889
    %v1891 = vand.u32 %v137, 4294901760
    %1892 = vmatprep.subr.mxu0 %v1891
    %v1893 = vand.u32 %v136, 4294901760
    %1894 = vmatpush1.msra.mxu0 %v1893
    %v1895 = vand.u32 %v149, 4294901760
    %1896 = vmatprep.subr.mxu0 %v1895
    %v1897 = vand.u32 %v148, 4294901760
    %1898 = vmatpush1.msra.mxu0 %v1897
    %1899 = vmatprep.subr.mxu0 0.0
    %1900 = vmatpush1.msra.mxu0 0.0
    %1901 = vmatprep.subr.mxu0 0.0
    %1902 = vmatpush1.msra.mxu0 0.0
    %1903 = vmatprep.subr.mxu0 0.0
    %1904 = vmatpush1.msra.mxu0 0.0
    %1905 = vmatprep.subr.mxu0 0.0
    %1906 = vmatpush1.msra.mxu0 0.0
    %1907 = vmatprep.subr.mxu0 0.0
    %1908 = vmatpush1.msra.mxu0 0.0
    %1909 = vmatprep.subr.mxu0 0.0
    %1910 = vmatpush1.msra.mxu0 0.0
    %1911 = vmatprep.subr.mxu0 0.0
    %1912 = vmatpush1.msra.mxu0 0.0
    %1913 = vmatprep.subr.mxu0 0.0
    %1914 = vmatpush1.msra.mxu0 0.0
    %1915 = vmatprep.subr.mxu0 0.0
    %1916 = vmatpush1.msra.mxu0 0.0
    %1917 = vmatprep.subr.mxu0 0.0
    %1918 = vmatpush1.msra.mxu0 0.0
    %1919 = vmatprep.subr.mxu0 0.0
    %1920 = vmatpush1.msra.mxu0 0.0
    %1921 = vmatprep.subr.mxu0 0.0
    %1922 = vmatpush1.msra.mxu0 0.0
    %1923 = vmatprep.subr.mxu0 0.0
    %1924 = vmatpush1.msra.mxu0 0.0
    %1925 = vmatprep.subr.mxu0 0.0
    %1926 = vmatpush1.msra.mxu0 0.0
    %1927 = vmatprep.subr.mxu0 0.0
    %1928 = vmatpush1.msra.mxu0 0.0
    %1929 = vmatprep.subr.mxu0 0.0
    %1930 = vmatpush1.msra.mxu0 0.0
    %1931 = vmatprep.subr.mxu0 0.0
    %1932 = vmatpush1.msra.mxu0 0.0
    %1933 = vmatprep.subr.mxu0 0.0
    %1934 = vmatpush1.msra.mxu0 0.0
    %1935 = vmatprep.subr.mxu0 0.0
    %1936 = vmatpush1.msra.mxu0 0.0
    %1937 = vmatprep.subr.mxu0 0.0
    %1938 = vmatpush1.msra.mxu0 0.0
    %1939 = vmatprep.subr.mxu0 0.0
    %1940 = vmatpush1.msra.mxu0 0.0
    %1941 = vmatprep.subr.mxu0 0.0
    %1942 = vmatpush1.msra.mxu0 0.0
    %1943 = vmatprep.subr.mxu0 0.0
    %1944 = vmatpush1.msra.mxu0 0.0
    %1945 = vmatprep.subr.mxu0 0.0
    %1946 = vmatpush1.msra.mxu0 0.0
    %1947 = vmatprep.mubr.f32.mxu0 0.0
    %v1948 = vand.u32 %v222, 4294901760
    %v1949 = vsub.f32 %v222, %v1948
    %v1950 = vand.u32 %v1949, 4294901760
    %1951 = vmatmul.mubr.f32.gmra.mrb[0].mxu0 %v1950
    %v1952 = vpop.f32.mrb[0].mxu0
    %v1953 = vadd.f32 %v1863, %v1952
    %v1954 = vpop.f32.mrb[0].mxu0
    %v1955 = vadd.f32 %v1865, %v1954
    %1956 = vdwg.mxu0
    %v1957 = vand.u32 %v65, 4294901760
    %v1958 = vsub.f32 %v65, %v1957
    %v1959 = vand.u32 %v1958, 4294901760
    %1960 = vmatprep.subr.mxu0 %v1959
    %v1961 = vand.u32 %v64, 4294901760
    %v1962 = vsub.f32 %v64, %v1961
    %v1963 = vand.u32 %v1962, 4294901760
    %1964 = vmatpush1.msra.mxu0 %v1963
    %v1965 = vand.u32 %v77, 4294901760
    %v1966 = vsub.f32 %v77, %v1965
    %v1967 = vand.u32 %v1966, 4294901760
    %1968 = vmatprep.subr.mxu0 %v1967
    %v1969 = vand.u32 %v76, 4294901760
    %v1970 = vsub.f32 %v76, %v1969
    %v1971 = vand.u32 %v1970, 4294901760
    %1972 = vmatpush1.msra.mxu0 %v1971
    %v1973 = vand.u32 %v89, 4294901760
    %v1974 = vsub.f32 %v89, %v1973
    %v1975 = vand.u32 %v1974, 4294901760
    %1976 = vmatprep.subr.mxu0 %v1975
    %v1977 = vand.u32 %v88, 4294901760
    %v1978 = vsub.f32 %v88, %v1977
    %v1979 = vand.u32 %v1978, 4294901760
    %1980 = vmatpush1.msra.mxu0 %v1979
    %v1981 = vand.u32 %v101, 4294901760
    %v1982 = vsub.f32 %v101, %v1981
    %v1983 = vand.u32 %v1982, 4294901760
    %1984 = vmatprep.subr.mxu0 %v1983
    %v1985 = vand.u32 %v100, 4294901760
    %v1986 = vsub.f32 %v100, %v1985
    %v1987 = vand.u32 %v1986, 4294901760
    %1988 = vmatpush1.msra.mxu0 %v1987
    %v1989 = vand.u32 %v113, 4294901760
    %v1990 = vsub.f32 %v113, %v1989
    %v1991 = vand.u32 %v1990, 4294901760
    %1992 = vmatprep.subr.mxu0 %v1991
    %v1993 = vand.u32 %v112, 4294901760
    %v1994 = vsub.f32 %v112, %v1993
    %v1995 = vand.u32 %v1994, 4294901760
    %1996 = vmatpush1.msra.mxu0 %v1995
    %v1997 = vand.u32 %v125, 4294901760
    %v1998 = vsub.f32 %v125, %v1997
    %v1999 = vand.u32 %v1998, 4294901760
    %2000 = vmatprep.subr.mxu0 %v1999
    %v2001 = vand.u32 %v124, 4294901760
    %v2002 = vsub.f32 %v124, %v2001
    %v2003 = vand.u32 %v2002, 4294901760
    %2004 = vmatpush1.msra.mxu0 %v2003
    %v2005 = vand.u32 %v137, 4294901760
    %v2006 = vsub.f32 %v137, %v2005
    %v2007 = vand.u32 %v2006, 4294901760
    %2008 = vmatprep.subr.mxu0 %v2007
    %v2009 = vand.u32 %v136, 4294901760
    %v2010 = vsub.f32 %v136, %v2009
    %v2011 = vand.u32 %v2010, 4294901760
    %2012 = vmatpush1.msra.mxu0 %v2011
    %v2013 = vand.u32 %v149, 4294901760
    %v2014 = vsub.f32 %v149, %v2013
    %v2015 = vand.u32 %v2014, 4294901760
    %2016 = vmatprep.subr.mxu0 %v2015
    %v2017 = vand.u32 %v148, 4294901760
    %v2018 = vsub.f32 %v148, %v2017
    %v2019 = vand.u32 %v2018, 4294901760
    %2020 = vmatpush1.msra.mxu0 %v2019
    %2021 = vmatprep.subr.mxu0 0.0
    %2022 = vmatpush1.msra.mxu0 0.0
    %2023 = vmatprep.subr.mxu0 0.0
    %2024 = vmatpush1.msra.mxu0 0.0
    %2025 = vmatprep.subr.mxu0 0.0
    %2026 = vmatpush1.msra.mxu0 0.0
    %2027 = vmatprep.subr.mxu0 0.0
    %2028 = vmatpush1.msra.mxu0 0.0
    %2029 = vmatprep.subr.mxu0 0.0
    %2030 = vmatpush1.msra.mxu0 0.0
    %2031 = vmatprep.subr.mxu0 0.0
    %2032 = vmatpush1.msra.mxu0 0.0
    %2033 = vmatprep.subr.mxu0 0.0
    %2034 = vmatpush1.msra.mxu0 0.0
    %2035 = vmatprep.subr.mxu0 0.0
    %2036 = vmatpush1.msra.mxu0 0.0
    %2037 = vmatprep.subr.mxu0 0.0
    %2038 = vmatpush1.msra.mxu0 0.0
    %2039 = vmatprep.subr.mxu0 0.0
    %2040 = vmatpush1.msra.mxu0 0.0
    %2041 = vmatprep.subr.mxu0 0.0
    %2042 = vmatpush1.msra.mxu0 0.0
    %2043 = vmatprep.subr.mxu0 0.0
    %2044 = vmatpush1.msra.mxu0 0.0
    %2045 = vmatprep.subr.mxu0 0.0
    %2046 = vmatpush1.msra.mxu0 0.0
    %2047 = vmatprep.subr.mxu0 0.0
    %2048 = vmatpush1.msra.mxu0 0.0
    %2049 = vmatprep.subr.mxu0 0.0
    %2050 = vmatpush1.msra.mxu0 0.0
    %2051 = vmatprep.subr.mxu0 0.0
    %2052 = vmatpush1.msra.mxu0 0.0
    %2053 = vmatprep.subr.mxu0 0.0
    %2054 = vmatpush1.msra.mxu0 0.0
    %2055 = vmatprep.subr.mxu0 0.0
    %2056 = vmatpush1.msra.mxu0 0.0
    %2057 = vmatprep.subr.mxu0 0.0
    %2058 = vmatpush1.msra.mxu0 0.0
    %2059 = vmatprep.subr.mxu0 0.0
    %2060 = vmatpush1.msra.mxu0 0.0
    %2061 = vmatprep.subr.mxu0 0.0
    %2062 = vmatpush1.msra.mxu0 0.0
    %2063 = vmatprep.subr.mxu0 0.0
    %2064 = vmatpush1.msra.mxu0 0.0
    %2065 = vmatprep.subr.mxu0 0.0
    %2066 = vmatpush1.msra.mxu0 0.0
    %2067 = vmatprep.subr.mxu0 0.0
    %2068 = vmatpush1.msra.mxu0 0.0
    %2069 = vmatprep.mubr.f32.mxu0 0.0
    %v2070 = vand.u32 %v222, 4294901760
    %2071 = vmatmul.mubr.f32.gmra.mrb[0].mxu0 %v2070
    %v2072 = vpop.f32.mrb[0].mxu0
    %v2073 = vadd.f32 %v1953, %v2072
    %v2074 = vpop.f32.mrb[0].mxu0
    %v2075 = vadd.f32 %v1955, %v2074
    %2076 = vdwg.mxu0
    %v2077 = vand.u32 %v65, 4294901760
    %2078 = vmatprep.subr.mxu0 %v2077
    %v2079 = vand.u32 %v64, 4294901760
    %2080 = vmatpush1.msra.mxu0 %v2079
    %v2081 = vand.u32 %v77, 4294901760
    %2082 = vmatprep.subr.mxu0 %v2081
    %v2083 = vand.u32 %v76, 4294901760
    %2084 = vmatpush1.msra.mxu0 %v2083
    %v2085 = vand.u32 %v89, 4294901760
    %2086 = vmatprep.subr.mxu0 %v2085
    %v2087 = vand.u32 %v88, 4294901760
    %2088 = vmatpush1.msra.mxu0 %v2087
    %v2089 = vand.u32 %v101, 4294901760
    %2090 = vmatprep.subr.mxu0 %v2089
    %v2091 = vand.u32 %v100, 4294901760
    %2092 = vmatpush1.msra.mxu0 %v2091
    %v2093 = vand.u32 %v113, 4294901760
    %2094 = vmatprep.subr.mxu0 %v2093
    %v2095 = vand.u32 %v112, 4294901760
    %2096 = vmatpush1.msra.mxu0 %v2095
    %v2097 = vand.u32 %v125, 4294901760
    %2098 = vmatprep.subr.mxu0 %v2097
    %v2099 = vand.u32 %v124, 4294901760
    %2100 = vmatpush1.msra.mxu0 %v2099
    %v2101 = vand.u32 %v137, 4294901760
    %2102 = vmatprep.subr.mxu0 %v2101
    %v2103 = vand.u32 %v136, 4294901760
    %2104 = vmatpush1.msra.mxu0 %v2103
    %v2105 = vand.u32 %v149, 4294901760
    %2106 = vmatprep.subr.mxu0 %v2105
    %v2107 = vand.u32 %v148, 4294901760
    %2108 = vmatpush1.msra.mxu0 %v2107
    %2109 = vmatprep.subr.mxu0 0.0
    %2110 = vmatpush1.msra.mxu0 0.0
    %2111 = vmatprep.subr.mxu0 0.0
    %2112 = vmatpush1.msra.mxu0 0.0
    %2113 = vmatprep.subr.mxu0 0.0
    %2114 = vmatpush1.msra.mxu0 0.0
    %2115 = vmatprep.subr.mxu0 0.0
    %2116 = vmatpush1.msra.mxu0 0.0
    %2117 = vmatprep.subr.mxu0 0.0
    %2118 = vmatpush1.msra.mxu0 0.0
    %2119 = vmatprep.subr.mxu0 0.0
    %2120 = vmatpush1.msra.mxu0 0.0
    %2121 = vmatprep.subr.mxu0 0.0
    %2122 = vmatpush1.msra.mxu0 0.0
    %2123 = vmatprep.subr.mxu0 0.0
    %2124 = vmatpush1.msra.mxu0 0.0
    %2125 = vmatprep.subr.mxu0 0.0
    %2126 = vmatpush1.msra.mxu0 0.0
    %2127 = vmatprep.subr.mxu0 0.0
    %2128 = vmatpush1.msra.mxu0 0.0
    %2129 = vmatprep.subr.mxu0 0.0
    %2130 = vmatpush1.msra.mxu0 0.0
    %2131 = vmatprep.subr.mxu0 0.0
    %2132 = vmatpush1.msra.mxu0 0.0
    %2133 = vmatprep.subr.mxu0 0.0
    %2134 = vmatpush1.msra.mxu0 0.0
    %2135 = vmatprep.subr.mxu0 0.0
    %2136 = vmatpush1.msra.mxu0 0.0
    %2137 = vmatprep.subr.mxu0 0.0
    %2138 = vmatpush1.msra.mxu0 0.0
    %2139 = vmatprep.subr.mxu0 0.0
    %2140 = vmatpush1.msra.mxu0 0.0
    %2141 = vmatprep.subr.mxu0 0.0
    %2142 = vmatpush1.msra.mxu0 0.0
    %2143 = vmatprep.subr.mxu0 0.0
    %2144 = vmatpush1.msra.mxu0 0.0
    %2145 = vmatprep.subr.mxu0 0.0
    %2146 = vmatpush1.msra.mxu0 0.0
    %2147 = vmatprep.subr.mxu0 0.0
    %2148 = vmatpush1.msra.mxu0 0.0
    %2149 = vmatprep.subr.mxu0 0.0
    %2150 = vmatpush1.msra.mxu0 0.0
    %2151 = vmatprep.subr.mxu0 0.0
    %2152 = vmatpush1.msra.mxu0 0.0
    %2153 = vmatprep.subr.mxu0 0.0
    %2154 = vmatpush1.msra.mxu0 0.0
    %2155 = vmatprep.subr.mxu0 0.0
    %2156 = vmatpush1.msra.mxu0 0.0
    %2157 = vmatprep.mubr.f32.mxu0 0.0
    %v2158 = vand.u32 %v222, 4294901760
    %2159 = vmatmul.mubr.f32.gmra.mrb[0].mxu0 %v2158
    %v2160 = vpop.f32.mrb[0].mxu0
    %v2161 = vadd.f32 %v2073, %v2160
    %v2162 = vpop.f32.mrb[0].mxu0
    %v2163 = vadd.f32 %v2075, %v2162
    %2164 = vdwg.mxu0
    %v2165 = vand.u32 %v67, 4294901760
    %2166 = vmatprep.subr.mxu0 %v2165
    %v2167 = vand.u32 %v66, 4294901760
    %2168 = vmatpush1.msra.mxu0 %v2167
    %v2169 = vand.u32 %v79, 4294901760
    %2170 = vmatprep.subr.mxu0 %v2169
    %v2171 = vand.u32 %v78, 4294901760
    %2172 = vmatpush1.msra.mxu0 %v2171
    %v2173 = vand.u32 %v91, 4294901760
    %2174 = vmatprep.subr.mxu0 %v2173
    %v2175 = vand.u32 %v90, 4294901760
    %2176 = vmatpush1.msra.mxu0 %v2175
    %v2177 = vand.u32 %v103, 4294901760
    %2178 = vmatprep.subr.mxu0 %v2177
    %v2179 = vand.u32 %v102, 4294901760
    %2180 = vmatpush1.msra.mxu0 %v2179
    %v2181 = vand.u32 %v115, 4294901760
    %2182 = vmatprep.subr.mxu0 %v2181
    %v2183 = vand.u32 %v114, 4294901760
    %2184 = vmatpush1.msra.mxu0 %v2183
    %v2185 = vand.u32 %v127, 4294901760
    %2186 = vmatprep.subr.mxu0 %v2185
    %v2187 = vand.u32 %v126, 4294901760
    %2188 = vmatpush1.msra.mxu0 %v2187
    %v2189 = vand.u32 %v139, 4294901760
    %2190 = vmatprep.subr.mxu0 %v2189
    %v2191 = vand.u32 %v138, 4294901760
    %2192 = vmatpush1.msra.mxu0 %v2191
    %v2193 = vand.u32 %v151, 4294901760
    %2194 = vmatprep.subr.mxu0 %v2193
    %v2195 = vand.u32 %v150, 4294901760
    %2196 = vmatpush1.msra.mxu0 %v2195
    %2197 = vmatprep.subr.mxu0 0.0
    %2198 = vmatpush1.msra.mxu0 0.0
    %2199 = vmatprep.subr.mxu0 0.0
    %2200 = vmatpush1.msra.mxu0 0.0
    %2201 = vmatprep.subr.mxu0 0.0
    %2202 = vmatpush1.msra.mxu0 0.0
    %2203 = vmatprep.subr.mxu0 0.0
    %2204 = vmatpush1.msra.mxu0 0.0
    %2205 = vmatprep.subr.mxu0 0.0
    %2206 = vmatpush1.msra.mxu0 0.0
    %2207 = vmatprep.subr.mxu0 0.0
    %2208 = vmatpush1.msra.mxu0 0.0
    %2209 = vmatprep.subr.mxu0 0.0
    %2210 = vmatpush1.msra.mxu0 0.0
    %2211 = vmatprep.subr.mxu0 0.0
    %2212 = vmatpush1.msra.mxu0 0.0
    %2213 = vmatprep.subr.mxu0 0.0
    %2214 = vmatpush1.msra.mxu0 0.0
    %2215 = vmatprep.subr.mxu0 0.0
    %2216 = vmatpush1.msra.mxu0 0.0
    %2217 = vmatprep.subr.mxu0 0.0
    %2218 = vmatpush1.msra.mxu0 0.0
    %2219 = vmatprep.subr.mxu0 0.0
    %2220 = vmatpush1.msra.mxu0 0.0
    %2221 = vmatprep.subr.mxu0 0.0
    %2222 = vmatpush1.msra.mxu0 0.0
    %2223 = vmatprep.subr.mxu0 0.0
    %2224 = vmatpush1.msra.mxu0 0.0
    %2225 = vmatprep.subr.mxu0 0.0
    %2226 = vmatpush1.msra.mxu0 0.0
    %2227 = vmatprep.subr.mxu0 0.0
    %2228 = vmatpush1.msra.mxu0 0.0
    %2229 = vmatprep.subr.mxu0 0.0
    %2230 = vmatpush1.msra.mxu0 0.0
    %2231 = vmatprep.subr.mxu0 0.0
    %2232 = vmatpush1.msra.mxu0 0.0
    %2233 = vmatprep.subr.mxu0 0.0
    %2234 = vmatpush1.msra.mxu0 0.0
    %2235 = vmatprep.subr.mxu0 0.0
    %2236 = vmatpush1.msra.mxu0 0.0
    %2237 = vmatprep.subr.mxu0 0.0
    %2238 = vmatpush1.msra.mxu0 0.0
    %2239 = vmatprep.subr.mxu0 0.0
    %2240 = vmatpush1.msra.mxu0 0.0
    %2241 = vmatprep.subr.mxu0 0.0
    %2242 = vmatpush1.msra.mxu0 0.0
    %2243 = vmatprep.subr.mxu0 0.0
    %2244 = vmatpush1.msra.mxu0 0.0
    %2245 = vmatprep.mubr.f32.mxu0 0.0
    %v2246 = vand.u32 %v222, 4294901760
    %v2247 = vsub.f32 %v222, %v2246
    %v2248 = vand.u32 %v2247, 4294901760
    %v2249 = vsub.f32 %v2247, %v2248
    %v2250 = vand.u32 %v2249, 4294901760
    %2251 = vmatmul.mubr.f32.gmra.mrb[0].mxu0 %v2250
    %v2252 = vpop.f32.mrb[0].mxu0
    %v2253 = vadd.f32 %v187, %v2252
    %v2254 = vpop.f32.mrb[0].mxu0
    %v2255 = vadd.f32 %v191, %v2254
    %2256 = vdwg.mxu0
    %v2257 = vand.u32 %v67, 4294901760
    %v2258 = vsub.f32 %v67, %v2257
    %v2259 = vand.u32 %v2258, 4294901760
    %v2260 = vsub.f32 %v2258, %v2259
    %v2261 = vand.u32 %v2260, 4294901760
    %2262 = vmatprep.subr.mxu0 %v2261
    %v2263 = vand.u32 %v66, 4294901760
    %v2264 = vsub.f32 %v66, %v2263
    %v2265 = vand.u32 %v2264, 4294901760
    %v2266 = vsub.f32 %v2264, %v2265
    %v2267 = vand.u32 %v2266, 4294901760
    %2268 = vmatpush1.msra.mxu0 %v2267
    %v2269 = vand.u32 %v79, 4294901760
    %v2270 = vsub.f32 %v79, %v2269
    %v2271 = vand.u32 %v2270, 4294901760
    %v2272 = vsub.f32 %v2270, %v2271
    %v2273 = vand.u32 %v2272, 4294901760
    %2274 = vmatprep.subr.mxu0 %v2273
    %v2275 = vand.u32 %v78, 4294901760
    %v2276 = vsub.f32 %v78, %v2275
    %v2277 = vand.u32 %v2276, 4294901760
    %v2278 = vsub.f32 %v2276, %v2277
    %v2279 = vand.u32 %v2278, 4294901760
    %2280 = vmatpush1.msra.mxu0 %v2279
    %v2281 = vand.u32 %v91, 4294901760
    %v2282 = vsub.f32 %v91, %v2281
    %v2283 = vand.u32 %v2282, 4294901760
    %v2284 = vsub.f32 %v2282, %v2283
    %v2285 = vand.u32 %v2284, 4294901760
    %2286 = vmatprep.subr.mxu0 %v2285
    %v2287 = vand.u32 %v90, 4294901760
    %v2288 = vsub.f32 %v90, %v2287
    %v2289 = vand.u32 %v2288, 4294901760
    %v2290 = vsub.f32 %v2288, %v2289
    %v2291 = vand.u32 %v2290, 4294901760
    %2292 = vmatpush1.msra.mxu0 %v2291
    %v2293 = vand.u32 %v103, 4294901760
    %v2294 = vsub.f32 %v103, %v2293
    %v2295 = vand.u32 %v2294, 4294901760
    %v2296 = vsub.f32 %v2294, %v2295
    %v2297 = vand.u32 %v2296, 4294901760
    %2298 = vmatprep.subr.mxu0 %v2297
    %v2299 = vand.u32 %v102, 4294901760
    %v2300 = vsub.f32 %v102, %v2299
    %v2301 = vand.u32 %v2300, 4294901760
    %v2302 = vsub.f32 %v2300, %v2301
    %v2303 = vand.u32 %v2302, 4294901760
    %2304 = vmatpush1.msra.mxu0 %v2303
    %v2305 = vand.u32 %v115, 4294901760
    %v2306 = vsub.f32 %v115, %v2305
    %v2307 = vand.u32 %v2306, 4294901760
    %v2308 = vsub.f32 %v2306, %v2307
    %v2309 = vand.u32 %v2308, 4294901760
    %2310 = vmatprep.subr.mxu0 %v2309
    %v2311 = vand.u32 %v114, 4294901760
    %v2312 = vsub.f32 %v114, %v2311
    %v2313 = vand.u32 %v2312, 4294901760
    %v2314 = vsub.f32 %v2312, %v2313
    %v2315 = vand.u32 %v2314, 4294901760
    %2316 = vmatpush1.msra.mxu0 %v2315
    %v2317 = vand.u32 %v127, 4294901760
    %v2318 = vsub.f32 %v127, %v2317
    %v2319 = vand.u32 %v2318, 4294901760
    %v2320 = vsub.f32 %v2318, %v2319
    %v2321 = vand.u32 %v2320, 4294901760
    %2322 = vmatprep.subr.mxu0 %v2321
    %v2323 = vand.u32 %v126, 4294901760
    %v2324 = vsub.f32 %v126, %v2323
    %v2325 = vand.u32 %v2324, 4294901760
    %v2326 = vsub.f32 %v2324, %v2325
    %v2327 = vand.u32 %v2326, 4294901760
    %2328 = vmatpush1.msra.mxu0 %v2327
    %v2329 = vand.u32 %v139, 4294901760
    %v2330 = vsub.f32 %v139, %v2329
    %v2331 = vand.u32 %v2330, 4294901760
    %v2332 = vsub.f32 %v2330, %v2331
    %v2333 = vand.u32 %v2332, 4294901760
    %2334 = vmatprep.subr.mxu0 %v2333
    %v2335 = vand.u32 %v138, 4294901760
    %v2336 = vsub.f32 %v138, %v2335
    %v2337 = vand.u32 %v2336, 4294901760
    %v2338 = vsub.f32 %v2336, %v2337
    %v2339 = vand.u32 %v2338, 4294901760
    %2340 = vmatpush1.msra.mxu0 %v2339
    %v2341 = vand.u32 %v151, 4294901760
    %v2342 = vsub.f32 %v151, %v2341
    %v2343 = vand.u32 %v2342, 4294901760
    %v2344 = vsub.f32 %v2342, %v2343
    %v2345 = vand.u32 %v2344, 4294901760
    %2346 = vmatprep.subr.mxu0 %v2345
    %v2347 = vand.u32 %v150, 4294901760
    %v2348 = vsub.f32 %v150, %v2347
    %v2349 = vand.u32 %v2348, 4294901760
    %v2350 = vsub.f32 %v2348, %v2349
    %v2351 = vand.u32 %v2350, 4294901760
    %2352 = vmatpush1.msra.mxu0 %v2351
    %2353 = vmatprep.subr.mxu0 0.0
    %2354 = vmatpush1.msra.mxu0 0.0
    %2355 = vmatprep.subr.mxu0 0.0
    %2356 = vmatpush1.msra.mxu0 0.0
    %2357 = vmatprep.subr.mxu0 0.0
    %2358 = vmatpush1.msra.mxu0 0.0
    %2359 = vmatprep.subr.mxu0 0.0
    %2360 = vmatpush1.msra.mxu0 0.0
    %2361 = vmatprep.subr.mxu0 0.0
    %2362 = vmatpush1.msra.mxu0 0.0
    %2363 = vmatprep.subr.mxu0 0.0
    %2364 = vmatpush1.msra.mxu0 0.0
    %2365 = vmatprep.subr.mxu0 0.0
    %2366 = vmatpush1.msra.mxu0 0.0
    %2367 = vmatprep.subr.mxu0 0.0
    %2368 = vmatpush1.msra.mxu0 0.0
    %2369 = vmatprep.subr.mxu0 0.0
    %2370 = vmatpush1.msra.mxu0 0.0
    %2371 = vmatprep.subr.mxu0 0.0
    %2372 = vmatpush1.msra.mxu0 0.0
    %2373 = vmatprep.subr.mxu0 0.0
    %2374 = vmatpush1.msra.mxu0 0.0
    %2375 = vmatprep.subr.mxu0 0.0
    %2376 = vmatpush1.msra.mxu0 0.0
    %2377 = vmatprep.subr.mxu0 0.0
    %2378 = vmatpush1.msra.mxu0 0.0
    %2379 = vmatprep.subr.mxu0 0.0
    %2380 = vmatpush1.msra.mxu0 0.0
    %2381 = vmatprep.subr.mxu0 0.0
    %2382 = vmatpush1.msra.mxu0 0.0
    %2383 = vmatprep.subr.mxu0 0.0
    %2384 = vmatpush1.msra.mxu0 0.0
    %2385 = vmatprep.subr.mxu0 0.0
    %2386 = vmatpush1.msra.mxu0 0.0
    %2387 = vmatprep.subr.mxu0 0.0
    %2388 = vmatpush1.msra.mxu0 0.0
    %2389 = vmatprep.subr.mxu0 0.0
    %2390 = vmatpush1.msra.mxu0 0.0
    %2391 = vmatprep.subr.mxu0 0.0
    %2392 = vmatpush1.msra.mxu0 0.0
    %2393 = vmatprep.subr.mxu0 0.0
    %2394 = vmatpush1.msra.mxu0 0.0
    %2395 = vmatprep.subr.mxu0 0.0
    %2396 = vmatpush1.msra.mxu0 0.0
    %2397 = vmatprep.subr.mxu0 0.0
    %2398 = vmatpush1.msra.mxu0 0.0
    %2399 = vmatprep.subr.mxu0 0.0
    %2400 = vmatpush1.msra.mxu0 0.0
    %2401 = vmatprep.mubr.f32.mxu0 0.0
    %v2402 = vand.u32 %v222, 4294901760
    %2403 = vmatmul.mubr.f32.gmra.mrb[0].mxu0 %v2402
    %v2404 = vpop.f32.mrb[0].mxu0
    %v2405 = vadd.f32 %v2253, %v2404
    %v2406 = vpop.f32.mrb[0].mxu0
    %v2407 = vadd.f32 %v2255, %v2406
    %2408 = vdwg.mxu0
    %v2409 = vand.u32 %v67, 4294901760
    %v2410 = vsub.f32 %v67, %v2409
    %2411 = vmatprep.subr.mxu0 %v2410
    %v2412 = vand.u32 %v66, 4294901760
    %v2413 = vsub.f32 %v66, %v2412
    %2414 = vmatpush1.msra.mxu0 %v2413
    %v2415 = vand.u32 %v79, 4294901760
    %v2416 = vsub.f32 %v79, %v2415
    %2417 = vmatprep.subr.mxu0 %v2416
    %v2418 = vand.u32 %v78, 4294901760
    %v2419 = vsub.f32 %v78, %v2418
    %2420 = vmatpush1.msra.mxu0 %v2419
    %v2421 = vand.u32 %v91, 4294901760
    %v2422 = vsub.f32 %v91, %v2421
    %2423 = vmatprep.subr.mxu0 %v2422
    %v2424 = vand.u32 %v90, 4294901760
    %v2425 = vsub.f32 %v90, %v2424
    %2426 = vmatpush1.msra.mxu0 %v2425
    %v2427 = vand.u32 %v103, 4294901760
    %v2428 = vsub.f32 %v103, %v2427
    %2429 = vmatprep.subr.mxu0 %v2428
    %v2430 = vand.u32 %v102, 4294901760
    %v2431 = vsub.f32 %v102, %v2430
    %2432 = vmatpush1.msra.mxu0 %v2431
    %v2433 = vand.u32 %v115, 4294901760
    %v2434 = vsub.f32 %v115, %v2433
    %2435 = vmatprep.subr.mxu0 %v2434
    %v2436 = vand.u32 %v114, 4294901760
    %v2437 = vsub.f32 %v114, %v2436
    %2438 = vmatpush1.msra.mxu0 %v2437
    %v2439 = vand.u32 %v127, 4294901760
    %v2440 = vsub.f32 %v127, %v2439
    %2441 = vmatprep.subr.mxu0 %v2440
    %v2442 = vand.u32 %v126, 4294901760
    %v2443 = vsub.f32 %v126, %v2442
    %2444 = vmatpush1.msra.mxu0 %v2443
    %v2445 = vand.u32 %v139, 4294901760
    %v2446 = vsub.f32 %v139, %v2445
    %2447 = vmatprep.subr.mxu0 %v2446
    %v2448 = vand.u32 %v138, 4294901760
    %v2449 = vsub.f32 %v138, %v2448
    %2450 = vmatpush1.msra.mxu0 %v2449
    %v2451 = vand.u32 %v151, 4294901760
    %v2452 = vsub.f32 %v151, %v2451
    %2453 = vmatprep.subr.mxu0 %v2452
    %v2454 = vand.u32 %v150, 4294901760
    %v2455 = vsub.f32 %v150, %v2454
    %2456 = vmatpush1.msra.mxu0 %v2455
    %2457 = vmatprep.subr.mxu0 0.0
    %2458 = vmatpush1.msra.mxu0 0.0
    %2459 = vmatprep.subr.mxu0 0.0
    %2460 = vmatpush1.msra.mxu0 0.0
    %2461 = vmatprep.subr.mxu0 0.0
    %2462 = vmatpush1.msra.mxu0 0.0
    %2463 = vmatprep.subr.mxu0 0.0
    %2464 = vmatpush1.msra.mxu0 0.0
    %2465 = vmatprep.subr.mxu0 0.0
    %2466 = vmatpush1.msra.mxu0 0.0
    %2467 = vmatprep.subr.mxu0 0.0
    %2468 = vmatpush1.msra.mxu0 0.0
    %2469 = vmatprep.subr.mxu0 0.0
    %2470 = vmatpush1.msra.mxu0 0.0
    %2471 = vmatprep.subr.mxu0 0.0
    %2472 = vmatpush1.msra.mxu0 0.0
    %2473 = vmatprep.subr.mxu0 0.0
    %2474 = vmatpush1.msra.mxu0 0.0
    %2475 = vmatprep.subr.mxu0 0.0
    %2476 = vmatpush1.msra.mxu0 0.0
    %2477 = vmatprep.subr.mxu0 0.0
    %2478 = vmatpush1.msra.mxu0 0.0
    %2479 = vmatprep.subr.mxu0 0.0
    %2480 = vmatpush1.msra.mxu0 0.0
    %2481 = vmatprep.subr.mxu0 0.0
    %2482 = vmatpush1.msra.mxu0 0.0
    %2483 = vmatprep.subr.mxu0 0.0
    %2484 = vmatpush1.msra.mxu0 0.0
    %2485 = vmatprep.subr.mxu0 0.0
    %2486 = vmatpush1.msra.mxu0 0.0
    %2487 = vmatprep.subr.mxu0 0.0
    %2488 = vmatpush1.msra.mxu0 0.0
    %2489 = vmatprep.subr.mxu0 0.0
    %2490 = vmatpush1.msra.mxu0 0.0
    %2491 = vmatprep.subr.mxu0 0.0
    %2492 = vmatpush1.msra.mxu0 0.0
    %2493 = vmatprep.subr.mxu0 0.0
    %2494 = vmatpush1.msra.mxu0 0.0
    %2495 = vmatprep.subr.mxu0 0.0
    %2496 = vmatpush1.msra.mxu0 0.0
    %2497 = vmatprep.subr.mxu0 0.0
    %2498 = vmatpush1.msra.mxu0 0.0
    %2499 = vmatprep.subr.mxu0 0.0
    %2500 = vmatpush1.msra.mxu0 0.0
    %2501 = vmatprep.subr.mxu0 0.0
    %2502 = vmatpush1.msra.mxu0 0.0
    %2503 = vmatprep.subr.mxu0 0.0
    %2504 = vmatpush1.msra.mxu0 0.0
    %2505 = vmatprep.mubr.f32.mxu0 0.0
    %v2506 = vand.u32 %v222, 4294901760
    %v2507 = vsub.f32 %v222, %v2506
    %2508 = vmatmul.mubr.f32.gmra.mrb[0].mxu0 %v2507
    %v2509 = vpop.f32.mrb[0].mxu0
    %v2510 = vadd.f32 %v2405, %v2509
    %v2511 = vpop.f32.mrb[0].mxu0
    %v2512 = vadd.f32 %v2407, %v2511
    %2513 = vdwg.mxu0
    %v2514 = vand.u32 %v67, 4294901760
    %2515 = vmatprep.subr.mxu0 %v2514
    %v2516 = vand.u32 %v66, 4294901760
    %2517 = vmatpush1.msra.mxu0 %v2516
    %v2518 = vand.u32 %v79, 4294901760
    %2519 = vmatprep.subr.mxu0 %v2518
    %v2520 = vand.u32 %v78, 4294901760
    %2521 = vmatpush1.msra.mxu0 %v2520
    %v2522 = vand.u32 %v91, 4294901760
    %2523 = vmatprep.subr.mxu0 %v2522
    %v2524 = vand.u32 %v90, 4294901760
    %2525 = vmatpush1.msra.mxu0 %v2524
    %v2526 = vand.u32 %v103, 4294901760
    %2527 = vmatprep.subr.mxu0 %v2526
    %v2528 = vand.u32 %v102, 4294901760
    %2529 = vmatpush1.msra.mxu0 %v2528
    %v2530 = vand.u32 %v115, 4294901760
    %2531 = vmatprep.subr.mxu0 %v2530
    %v2532 = vand.u32 %v114, 4294901760
    %2533 = vmatpush1.msra.mxu0 %v2532
    %v2534 = vand.u32 %v127, 4294901760
    %2535 = vmatprep.subr.mxu0 %v2534
    %v2536 = vand.u32 %v126, 4294901760
    %2537 = vmatpush1.msra.mxu0 %v2536
    %v2538 = vand.u32 %v139, 4294901760
    %2539 = vmatprep.subr.mxu0 %v2538
    %v2540 = vand.u32 %v138, 4294901760
    %2541 = vmatpush1.msra.mxu0 %v2540
    %v2542 = vand.u32 %v151, 4294901760
    %2543 = vmatprep.subr.mxu0 %v2542
    %v2544 = vand.u32 %v150, 4294901760
    %2545 = vmatpush1.msra.mxu0 %v2544
    %2546 = vmatprep.subr.mxu0 0.0
    %2547 = vmatpush1.msra.mxu0 0.0
    %2548 = vmatprep.subr.mxu0 0.0
    %2549 = vmatpush1.msra.mxu0 0.0
    %2550 = vmatprep.subr.mxu0 0.0
    %2551 = vmatpush1.msra.mxu0 0.0
    %2552 = vmatprep.subr.mxu0 0.0
    %2553 = vmatpush1.msra.mxu0 0.0
    %2554 = vmatprep.subr.mxu0 0.0
    %2555 = vmatpush1.msra.mxu0 0.0
    %2556 = vmatprep.subr.mxu0 0.0
    %2557 = vmatpush1.msra.mxu0 0.0
    %2558 = vmatprep.subr.mxu0 0.0
    %2559 = vmatpush1.msra.mxu0 0.0
    %2560 = vmatprep.subr.mxu0 0.0
    %2561 = vmatpush1.msra.mxu0 0.0
    %2562 = vmatprep.subr.mxu0 0.0
    %2563 = vmatpush1.msra.mxu0 0.0
    %2564 = vmatprep.subr.mxu0 0.0
    %2565 = vmatpush1.msra.mxu0 0.0
    %2566 = vmatprep.subr.mxu0 0.0
    %2567 = vmatpush1.msra.mxu0 0.0
    %2568 = vmatprep.subr.mxu0 0.0
    %2569 = vmatpush1.msra.mxu0 0.0
    %2570 = vmatprep.subr.mxu0 0.0
    %2571 = vmatpush1.msra.mxu0 0.0
    %2572 = vmatprep.subr.mxu0 0.0
    %2573 = vmatpush1.msra.mxu0 0.0
    %2574 = vmatprep.subr.mxu0 0.0
    %2575 = vmatpush1.msra.mxu0 0.0
    %2576 = vmatprep.subr.mxu0 0.0
    %2577 = vmatpush1.msra.mxu0 0.0
    %2578 = vmatprep.subr.mxu0 0.0
    %2579 = vmatpush1.msra.mxu0 0.0
    %2580 = vmatprep.subr.mxu0 0.0
    %2581 = vmatpush1.msra.mxu0 0.0
    %2582 = vmatprep.subr.mxu0 0.0
    %2583 = vmatpush1.msra.mxu0 0.0
    %2584 = vmatprep.subr.mxu0 0.0
    %2585 = vmatpush1.msra.mxu0 0.0
    %2586 = vmatprep.subr.mxu0 0.0
    %2587 = vmatpush1.msra.mxu0 0.0
    %2588 = vmatprep.subr.mxu0 0.0
    %2589 = vmatpush1.msra.mxu0 0.0
    %2590 = vmatprep.subr.mxu0 0.0
    %2591 = vmatpush1.msra.mxu0 0.0
    %2592 = vmatprep.subr.mxu0 0.0
    %2593 = vmatpush1.msra.mxu0 0.0
    %2594 = vmatprep.mubr.f32.mxu0 0.0
    %v2595 = vand.u32 %v222, 4294901760
    %v2596 = vsub.f32 %v222, %v2595
    %v2597 = vand.u32 %v2596, 4294901760
    %2598 = vmatmul.mubr.f32.gmra.mrb[0].mxu0 %v2597
    %v2599 = vpop.f32.mrb[0].mxu0
    %v2600 = vadd.f32 %v2510, %v2599
    %v2601 = vpop.f32.mrb[0].mxu0
    %v2602 = vadd.f32 %v2512, %v2601
    %2603 = vdwg.mxu0
    %v2604 = vand.u32 %v67, 4294901760
    %v2605 = vsub.f32 %v67, %v2604
    %v2606 = vand.u32 %v2605, 4294901760
    %2607 = vmatprep.subr.mxu0 %v2606
    %v2608 = vand.u32 %v66, 4294901760
    %v2609 = vsub.f32 %v66, %v2608
    %v2610 = vand.u32 %v2609, 4294901760
    %2611 = vmatpush1.msra.mxu0 %v2610
    %v2612 = vand.u32 %v79, 4294901760
    %v2613 = vsub.f32 %v79, %v2612
    %v2614 = vand.u32 %v2613, 4294901760
    %2615 = vmatprep.subr.mxu0 %v2614
    %v2616 = vand.u32 %v78, 4294901760
    %v2617 = vsub.f32 %v78, %v2616
    %v2618 = vand.u32 %v2617, 4294901760
    %2619 = vmatpush1.msra.mxu0 %v2618
    %v2620 = vand.u32 %v91, 4294901760
    %v2621 = vsub.f32 %v91, %v2620
    %v2622 = vand.u32 %v2621, 4294901760
    %2623 = vmatprep.subr.mxu0 %v2622
    %v2624 = vand.u32 %v90, 4294901760
    %v2625 = vsub.f32 %v90, %v2624
    %v2626 = vand.u32 %v2625, 4294901760
    %2627 = vmatpush1.msra.mxu0 %v2626
    %v2628 = vand.u32 %v103, 4294901760
    %v2629 = vsub.f32 %v103, %v2628
    %v2630 = vand.u32 %v2629, 4294901760
    %2631 = vmatprep.subr.mxu0 %v2630
    %v2632 = vand.u32 %v102, 4294901760
    %v2633 = vsub.f32 %v102, %v2632
    %v2634 = vand.u32 %v2633, 4294901760
    %2635 = vmatpush1.msra.mxu0 %v2634
    %v2636 = vand.u32 %v115, 4294901760
    %v2637 = vsub.f32 %v115, %v2636
    %v2638 = vand.u32 %v2637, 4294901760
    %2639 = vmatprep.subr.mxu0 %v2638
    %v2640 = vand.u32 %v114, 4294901760
    %v2641 = vsub.f32 %v114, %v2640
    %v2642 = vand.u32 %v2641, 4294901760
    %2643 = vmatpush1.msra.mxu0 %v2642
    %v2644 = vand.u32 %v127, 4294901760
    %v2645 = vsub.f32 %v127, %v2644
    %v2646 = vand.u32 %v2645, 4294901760
    %2647 = vmatprep.subr.mxu0 %v2646
    %v2648 = vand.u32 %v126, 4294901760
    %v2649 = vsub.f32 %v126, %v2648
    %v2650 = vand.u32 %v2649, 4294901760
    %2651 = vmatpush1.msra.mxu0 %v2650
    %v2652 = vand.u32 %v139, 4294901760
    %v2653 = vsub.f32 %v139, %v2652
    %v2654 = vand.u32 %v2653, 4294901760
    %2655 = vmatprep.subr.mxu0 %v2654
    %v2656 = vand.u32 %v138, 4294901760
    %v2657 = vsub.f32 %v138, %v2656
    %v2658 = vand.u32 %v2657, 4294901760
    %2659 = vmatpush1.msra.mxu0 %v2658
    %v2660 = vand.u32 %v151, 4294901760
    %v2661 = vsub.f32 %v151, %v2660
    %v2662 = vand.u32 %v2661, 4294901760
    %2663 = vmatprep.subr.mxu0 %v2662
    %v2664 = vand.u32 %v150, 4294901760
    %v2665 = vsub.f32 %v150, %v2664
    %v2666 = vand.u32 %v2665, 4294901760
    %2667 = vmatpush1.msra.mxu0 %v2666
    %2668 = vmatprep.subr.mxu0 0.0
    %2669 = vmatpush1.msra.mxu0 0.0
    %2670 = vmatprep.subr.mxu0 0.0
    %2671 = vmatpush1.msra.mxu0 0.0
    %2672 = vmatprep.subr.mxu0 0.0
    %2673 = vmatpush1.msra.mxu0 0.0
    %2674 = vmatprep.subr.mxu0 0.0
    %2675 = vmatpush1.msra.mxu0 0.0
    %2676 = vmatprep.subr.mxu0 0.0
    %2677 = vmatpush1.msra.mxu0 0.0
    %2678 = vmatprep.subr.mxu0 0.0
    %2679 = vmatpush1.msra.mxu0 0.0
    %2680 = vmatprep.subr.mxu0 0.0
    %2681 = vmatpush1.msra.mxu0 0.0
    %2682 = vmatprep.subr.mxu0 0.0
    %2683 = vmatpush1.msra.mxu0 0.0
    %2684 = vmatprep.subr.mxu0 0.0
    %2685 = vmatpush1.msra.mxu0 0.0
    %2686 = vmatprep.subr.mxu0 0.0
    %2687 = vmatpush1.msra.mxu0 0.0
    %2688 = vmatprep.subr.mxu0 0.0
    %2689 = vmatpush1.msra.mxu0 0.0
    %2690 = vmatprep.subr.mxu0 0.0
    %2691 = vmatpush1.msra.mxu0 0.0
    %2692 = vmatprep.subr.mxu0 0.0
    %2693 = vmatpush1.msra.mxu0 0.0
    %2694 = vmatprep.subr.mxu0 0.0
    %2695 = vmatpush1.msra.mxu0 0.0
    %2696 = vmatprep.subr.mxu0 0.0
    %2697 = vmatpush1.msra.mxu0 0.0
    %2698 = vmatprep.subr.mxu0 0.0
    %2699 = vmatpush1.msra.mxu0 0.0
    %2700 = vmatprep.subr.mxu0 0.0
    %2701 = vmatpush1.msra.mxu0 0.0
    %2702 = vmatprep.subr.mxu0 0.0
    %2703 = vmatpush1.msra.mxu0 0.0
    %2704 = vmatprep.subr.mxu0 0.0
    %2705 = vmatpush1.msra.mxu0 0.0
    %2706 = vmatprep.subr.mxu0 0.0
    %2707 = vmatpush1.msra.mxu0 0.0
    %2708 = vmatprep.subr.mxu0 0.0
    %2709 = vmatpush1.msra.mxu0 0.0
    %2710 = vmatprep.subr.mxu0 0.0
    %2711 = vmatpush1.msra.mxu0 0.0
    %2712 = vmatprep.subr.mxu0 0.0
    %2713 = vmatpush1.msra.mxu0 0.0
    %2714 = vmatprep.subr.mxu0 0.0
    %2715 = vmatpush1.msra.mxu0 0.0
    %2716 = vmatprep.mubr.f32.mxu0 0.0
    %v2717 = vand.u32 %v222, 4294901760
    %2718 = vmatmul.mubr.f32.gmra.mrb[0].mxu0 %v2717
    %v2719 = vpop.f32.mrb[0].mxu0
    %v2720 = vadd.f32 %v2600, %v2719
    %v2721 = vpop.f32.mrb[0].mxu0
    %v2722 = vadd.f32 %v2602, %v2721
    %2723 = vdwg.mxu0
    %v2724 = vand.u32 %v67, 4294901760
    %2725 = vmatprep.subr.mxu0 %v2724
    %v2726 = vand.u32 %v66, 4294901760
    %2727 = vmatpush1.msra.mxu0 %v2726
    %v2728 = vand.u32 %v79, 4294901760
    %2729 = vmatprep.subr.mxu0 %v2728
    %v2730 = vand.u32 %v78, 4294901760
    %2731 = vmatpush1.msra.mxu0 %v2730
    %v2732 = vand.u32 %v91, 4294901760
    %2733 = vmatprep.subr.mxu0 %v2732
    %v2734 = vand.u32 %v90, 4294901760
    %2735 = vmatpush1.msra.mxu0 %v2734
    %v2736 = vand.u32 %v103, 4294901760
    %2737 = vmatprep.subr.mxu0 %v2736
    %v2738 = vand.u32 %v102, 4294901760
    %2739 = vmatpush1.msra.mxu0 %v2738
    %v2740 = vand.u32 %v115, 4294901760
    %2741 = vmatprep.subr.mxu0 %v2740
    %v2742 = vand.u32 %v114, 4294901760
    %2743 = vmatpush1.msra.mxu0 %v2742
    %v2744 = vand.u32 %v127, 4294901760
    %2745 = vmatprep.subr.mxu0 %v2744
    %v2746 = vand.u32 %v126, 4294901760
    %2747 = vmatpush1.msra.mxu0 %v2746
    %v2748 = vand.u32 %v139, 4294901760
    %2749 = vmatprep.subr.mxu0 %v2748
    %v2750 = vand.u32 %v138, 4294901760
    %2751 = vmatpush1.msra.mxu0 %v2750
    %v2752 = vand.u32 %v151, 4294901760
    %2753 = vmatprep.subr.mxu0 %v2752
    %v2754 = vand.u32 %v150, 4294901760
    %2755 = vmatpush1.msra.mxu0 %v2754
    %2756 = vmatprep.subr.mxu0 0.0
    %2757 = vmatpush1.msra.mxu0 0.0
    %2758 = vmatprep.subr.mxu0 0.0
    %2759 = vmatpush1.msra.mxu0 0.0
    %2760 = vmatprep.subr.mxu0 0.0
    %2761 = vmatpush1.msra.mxu0 0.0
    %2762 = vmatprep.subr.mxu0 0.0
    %2763 = vmatpush1.msra.mxu0 0.0
    %2764 = vmatprep.subr.mxu0 0.0
    %2765 = vmatpush1.msra.mxu0 0.0
    %2766 = vmatprep.subr.mxu0 0.0
    %2767 = vmatpush1.msra.mxu0 0.0
    %2768 = vmatprep.subr.mxu0 0.0
    %2769 = vmatpush1.msra.mxu0 0.0
    %2770 = vmatprep.subr.mxu0 0.0
    %2771 = vmatpush1.msra.mxu0 0.0
    %2772 = vmatprep.subr.mxu0 0.0
    %2773 = vmatpush1.msra.mxu0 0.0
    %2774 = vmatprep.subr.mxu0 0.0
    %2775 = vmatpush1.msra.mxu0 0.0
    %2776 = vmatprep.subr.mxu0 0.0
    %2777 = vmatpush1.msra.mxu0 0.0
    %2778 = vmatprep.subr.mxu0 0.0
    %2779 = vmatpush1.msra.mxu0 0.0
    %2780 = vmatprep.subr.mxu0 0.0
    %2781 = vmatpush1.msra.mxu0 0.0
    %2782 = vmatprep.subr.mxu0 0.0
    %2783 = vmatpush1.msra.mxu0 0.0
    %2784 = vmatprep.subr.mxu0 0.0
    %2785 = vmatpush1.msra.mxu0 0.0
    %2786 = vmatprep.subr.mxu0 0.0
    %2787 = vmatpush1.msra.mxu0 0.0
    %2788 = vmatprep.subr.mxu0 0.0
    %2789 = vmatpush1.msra.mxu0 0.0
    %2790 = vmatprep.subr.mxu0 0.0
    %2791 = vmatpush1.msra.mxu0 0.0
    %2792 = vmatprep.subr.mxu0 0.0
    %2793 = vmatpush1.msra.mxu0 0.0
    %2794 = vmatprep.subr.mxu0 0.0
    %2795 = vmatpush1.msra.mxu0 0.0
    %2796 = vmatprep.subr.mxu0 0.0
    %2797 = vmatpush1.msra.mxu0 0.0
    %2798 = vmatprep.subr.mxu0 0.0
    %2799 = vmatpush1.msra.mxu0 0.0
    %2800 = vmatprep.subr.mxu0 0.0
    %2801 = vmatpush1.msra.mxu0 0.0
    %2802 = vmatprep.subr.mxu0 0.0
    %2803 = vmatpush1.msra.mxu0 0.0
    %2804 = vmatprep.mubr.f32.mxu0 0.0
    %v2805 = vand.u32 %v222, 4294901760
    %2806 = vmatmul.mubr.f32.gmra.mrb[0].mxu0 %v2805
    %v2807 = vpop.f32.mrb[0].mxu0
    %v2808 = vadd.f32 %v2720, %v2807
    %v2809 = vpop.f32.mrb[0].mxu0
    %v2810 = vadd.f32 %v2722, %v2809
    %2811 = vdwg.mxu0
    %v2812 = vand.u32 %v69, 4294901760
    %2813 = vmatprep.subr.mxu0 %v2812
    %v2814 = vand.u32 %v68, 4294901760
    %2815 = vmatpush1.msra.mxu0 %v2814
    %v2816 = vand.u32 %v81, 4294901760
    %2817 = vmatprep.subr.mxu0 %v2816
    %v2818 = vand.u32 %v80, 4294901760
    %2819 = vmatpush1.msra.mxu0 %v2818
    %v2820 = vand.u32 %v93, 4294901760
    %2821 = vmatprep.subr.mxu0 %v2820
    %v2822 = vand.u32 %v92, 4294901760
    %2823 = vmatpush1.msra.mxu0 %v2822
    %v2824 = vand.u32 %v105, 4294901760
    %2825 = vmatprep.subr.mxu0 %v2824
    %v2826 = vand.u32 %v104, 4294901760
    %2827 = vmatpush1.msra.mxu0 %v2826
    %v2828 = vand.u32 %v117, 4294901760
    %2829 = vmatprep.subr.mxu0 %v2828
    %v2830 = vand.u32 %v116, 4294901760
    %2831 = vmatpush1.msra.mxu0 %v2830
    %v2832 = vand.u32 %v129, 4294901760
    %2833 = vmatprep.subr.mxu0 %v2832
    %v2834 = vand.u32 %v128, 4294901760
    %2835 = vmatpush1.msra.mxu0 %v2834
    %v2836 = vand.u32 %v141, 4294901760
    %2837 = vmatprep.subr.mxu0 %v2836
    %v2838 = vand.u32 %v140, 4294901760
    %2839 = vmatpush1.msra.mxu0 %v2838
    %v2840 = vand.u32 %v153, 4294901760
    %2841 = vmatprep.subr.mxu0 %v2840
    %v2842 = vand.u32 %v152, 4294901760
    %2843 = vmatpush1.msra.mxu0 %v2842
    %2844 = vmatprep.subr.mxu0 0.0
    %2845 = vmatpush1.msra.mxu0 0.0
    %2846 = vmatprep.subr.mxu0 0.0
    %2847 = vmatpush1.msra.mxu0 0.0
    %2848 = vmatprep.subr.mxu0 0.0
    %2849 = vmatpush1.msra.mxu0 0.0
    %2850 = vmatprep.subr.mxu0 0.0
    %2851 = vmatpush1.msra.mxu0 0.0
    %2852 = vmatprep.subr.mxu0 0.0
    %2853 = vmatpush1.msra.mxu0 0.0
    %2854 = vmatprep.subr.mxu0 0.0
    %2855 = vmatpush1.msra.mxu0 0.0
    %2856 = vmatprep.subr.mxu0 0.0
    %2857 = vmatpush1.msra.mxu0 0.0
    %2858 = vmatprep.subr.mxu0 0.0
    %2859 = vmatpush1.msra.mxu0 0.0
    %2860 = vmatprep.subr.mxu0 0.0
    %2861 = vmatpush1.msra.mxu0 0.0
    %2862 = vmatprep.subr.mxu0 0.0
    %2863 = vmatpush1.msra.mxu0 0.0
    %2864 = vmatprep.subr.mxu0 0.0
    %2865 = vmatpush1.msra.mxu0 0.0
    %2866 = vmatprep.subr.mxu0 0.0
    %2867 = vmatpush1.msra.mxu0 0.0
    %2868 = vmatprep.subr.mxu0 0.0
    %2869 = vmatpush1.msra.mxu0 0.0
    %2870 = vmatprep.subr.mxu0 0.0
    %2871 = vmatpush1.msra.mxu0 0.0
    %2872 = vmatprep.subr.mxu0 0.0
    %2873 = vmatpush1.msra.mxu0 0.0
    %2874 = vmatprep.subr.mxu0 0.0
    %2875 = vmatpush1.msra.mxu0 0.0
    %2876 = vmatprep.subr.mxu0 0.0
    %2877 = vmatpush1.msra.mxu0 0.0
    %2878 = vmatprep.subr.mxu0 0.0
    %2879 = vmatpush1.msra.mxu0 0.0
    %2880 = vmatprep.subr.mxu0 0.0
    %2881 = vmatpush1.msra.mxu0 0.0
    %2882 = vmatprep.subr.mxu0 0.0
    %2883 = vmatpush1.msra.mxu0 0.0
    %2884 = vmatprep.subr.mxu0 0.0
    %2885 = vmatpush1.msra.mxu0 0.0
    %2886 = vmatprep.subr.mxu0 0.0
    %2887 = vmatpush1.msra.mxu0 0.0
    %2888 = vmatprep.subr.mxu0 0.0
    %2889 = vmatpush1.msra.mxu0 0.0
    %2890 = vmatprep.subr.mxu0 0.0
    %2891 = vmatpush1.msra.mxu0 0.0
    %2892 = vmatprep.mubr.f32.mxu0 0.0
    %v2893 = vand.u32 %v222, 4294901760
    %v2894 = vsub.f32 %v222, %v2893
    %v2895 = vand.u32 %v2894, 4294901760
    %v2896 = vsub.f32 %v2894, %v2895
    %v2897 = vand.u32 %v2896, 4294901760
    %2898 = vmatmul.mubr.f32.gmra.mrb[0].mxu0 %v2897
    %v2899 = vpop.f32.mrb[0].mxu0
    %v2900 = vadd.f32 %v195, %v2899
    %v2901 = vpop.f32.mrb[0].mxu0
    %v2902 = vadd.f32 %v199, %v2901
    %2903 = vdwg.mxu0
    %v2904 = vand.u32 %v69, 4294901760
    %v2905 = vsub.f32 %v69, %v2904
    %v2906 = vand.u32 %v2905, 4294901760
    %v2907 = vsub.f32 %v2905, %v2906
    %v2908 = vand.u32 %v2907, 4294901760
    %2909 = vmatprep.subr.mxu0 %v2908
    %v2910 = vand.u32 %v68, 4294901760
    %v2911 = vsub.f32 %v68, %v2910
    %v2912 = vand.u32 %v2911, 4294901760
    %v2913 = vsub.f32 %v2911, %v2912
    %v2914 = vand.u32 %v2913, 4294901760
    %2915 = vmatpush1.msra.mxu0 %v2914
    %v2916 = vand.u32 %v81, 4294901760
    %v2917 = vsub.f32 %v81, %v2916
    %v2918 = vand.u32 %v2917, 4294901760
    %v2919 = vsub.f32 %v2917, %v2918
    %v2920 = vand.u32 %v2919, 4294901760
    %2921 = vmatprep.subr.mxu0 %v2920
    %v2922 = vand.u32 %v80, 4294901760
    %v2923 = vsub.f32 %v80, %v2922
    %v2924 = vand.u32 %v2923, 4294901760
    %v2925 = vsub.f32 %v2923, %v2924
    %v2926 = vand.u32 %v2925, 4294901760
    %2927 = vmatpush1.msra.mxu0 %v2926
    %v2928 = vand.u32 %v93, 4294901760
    %v2929 = vsub.f32 %v93, %v2928
    %v2930 = vand.u32 %v2929, 4294901760
    %v2931 = vsub.f32 %v2929, %v2930
    %v2932 = vand.u32 %v2931, 4294901760
    %2933 = vmatprep.subr.mxu0 %v2932
    %v2934 = vand.u32 %v92, 4294901760
    %v2935 = vsub.f32 %v92, %v2934
    %v2936 = vand.u32 %v2935, 4294901760
    %v2937 = vsub.f32 %v2935, %v2936
    %v2938 = vand.u32 %v2937, 4294901760
    %2939 = vmatpush1.msra.mxu0 %v2938
    %v2940 = vand.u32 %v105, 4294901760
    %v2941 = vsub.f32 %v105, %v2940
    %v2942 = vand.u32 %v2941, 4294901760
    %v2943 = vsub.f32 %v2941, %v2942
    %v2944 = vand.u32 %v2943, 4294901760
    %2945 = vmatprep.subr.mxu0 %v2944
    %v2946 = vand.u32 %v104, 4294901760
    %v2947 = vsub.f32 %v104, %v2946
    %v2948 = vand.u32 %v2947, 4294901760
    %v2949 = vsub.f32 %v2947, %v2948
    %v2950 = vand.u32 %v2949, 4294901760
    %2951 = vmatpush1.msra.mxu0 %v2950
    %v2952 = vand.u32 %v117, 4294901760
    %v2953 = vsub.f32 %v117, %v2952
    %v2954 = vand.u32 %v2953, 4294901760
    %v2955 = vsub.f32 %v2953, %v2954
    %v2956 = vand.u32 %v2955, 4294901760
    %2957 = vmatprep.subr.mxu0 %v2956
    %v2958 = vand.u32 %v116, 4294901760
    %v2959 = vsub.f32 %v116, %v2958
    %v2960 = vand.u32 %v2959, 4294901760
    %v2961 = vsub.f32 %v2959, %v2960
    %v2962 = vand.u32 %v2961, 4294901760
    %2963 = vmatpush1.msra.mxu0 %v2962
    %v2964 = vand.u32 %v129, 4294901760
    %v2965 = vsub.f32 %v129, %v2964
    %v2966 = vand.u32 %v2965, 4294901760
    %v2967 = vsub.f32 %v2965, %v2966
    %v2968 = vand.u32 %v2967, 4294901760
    %2969 = vmatprep.subr.mxu0 %v2968
    %v2970 = vand.u32 %v128, 4294901760
    %v2971 = vsub.f32 %v128, %v2970
    %v2972 = vand.u32 %v2971, 4294901760
    %v2973 = vsub.f32 %v2971, %v2972
    %v2974 = vand.u32 %v2973, 4294901760
    %2975 = vmatpush1.msra.mxu0 %v2974
    %v2976 = vand.u32 %v141, 4294901760
    %v2977 = vsub.f32 %v141, %v2976
    %v2978 = vand.u32 %v2977, 4294901760
    %v2979 = vsub.f32 %v2977, %v2978
    %v2980 = vand.u32 %v2979, 4294901760
    %2981 = vmatprep.subr.mxu0 %v2980
    %v2982 = vand.u32 %v140, 4294901760
    %v2983 = vsub.f32 %v140, %v2982
    %v2984 = vand.u32 %v2983, 4294901760
    %v2985 = vsub.f32 %v2983, %v2984
    %v2986 = vand.u32 %v2985, 4294901760
    %2987 = vmatpush1.msra.mxu0 %v2986
    %v2988 = vand.u32 %v153, 4294901760
    %v2989 = vsub.f32 %v153, %v2988
    %v2990 = vand.u32 %v2989, 4294901760
    %v2991 = vsub.f32 %v2989, %v2990
    %v2992 = vand.u32 %v2991, 4294901760
    %2993 = vmatprep.subr.mxu0 %v2992
    %v2994 = vand.u32 %v152, 4294901760
    %v2995 = vsub.f32 %v152, %v2994
    %v2996 = vand.u32 %v2995, 4294901760
    %v2997 = vsub.f32 %v2995, %v2996
    %v2998 = vand.u32 %v2997, 4294901760
    %2999 = vmatpush1.msra.mxu0 %v2998
    %3000 = vmatprep.subr.mxu0 0.0
    %3001 = vmatpush1.msra.mxu0 0.0
    %3002 = vmatprep.subr.mxu0 0.0
    %3003 = vmatpush1.msra.mxu0 0.0
    %3004 = vmatprep.subr.mxu0 0.0
    %3005 = vmatpush1.msra.mxu0 0.0
    %3006 = vmatprep.subr.mxu0 0.0
    %3007 = vmatpush1.msra.mxu0 0.0
    %3008 = vmatprep.subr.mxu0 0.0
    %3009 = vmatpush1.msra.mxu0 0.0
    %3010 = vmatprep.subr.mxu0 0.0
    %3011 = vmatpush1.msra.mxu0 0.0
    %3012 = vmatprep.subr.mxu0 0.0
    %3013 = vmatpush1.msra.mxu0 0.0
    %3014 = vmatprep.subr.mxu0 0.0
    %3015 = vmatpush1.msra.mxu0 0.0
    %3016 = vmatprep.subr.mxu0 0.0
    %3017 = vmatpush1.msra.mxu0 0.0
    %3018 = vmatprep.subr.mxu0 0.0
    %3019 = vmatpush1.msra.mxu0 0.0
    %3020 = vmatprep.subr.mxu0 0.0
    %3021 = vmatpush1.msra.mxu0 0.0
    %3022 = vmatprep.subr.mxu0 0.0
    %3023 = vmatpush1.msra.mxu0 0.0
    %3024 = vmatprep.subr.mxu0 0.0
    %3025 = vmatpush1.msra.mxu0 0.0
    %3026 = vmatprep.subr.mxu0 0.0
    %3027 = vmatpush1.msra.mxu0 0.0
    %3028 = vmatprep.subr.mxu0 0.0
    %3029 = vmatpush1.msra.mxu0 0.0
    %3030 = vmatprep.subr.mxu0 0.0
    %3031 = vmatpush1.msra.mxu0 0.0
    %3032 = vmatprep.subr.mxu0 0.0
    %3033 = vmatpush1.msra.mxu0 0.0
    %3034 = vmatprep.subr.mxu0 0.0
    %3035 = vmatpush1.msra.mxu0 0.0
    %3036 = vmatprep.subr.mxu0 0.0
    %3037 = vmatpush1.msra.mxu0 0.0
    %3038 = vmatprep.subr.mxu0 0.0
    %3039 = vmatpush1.msra.mxu0 0.0
    %3040 = vmatprep.subr.mxu0 0.0
    %3041 = vmatpush1.msra.mxu0 0.0
    %3042 = vmatprep.subr.mxu0 0.0
    %3043 = vmatpush1.msra.mxu0 0.0
    %3044 = vmatprep.subr.mxu0 0.0
    %3045 = vmatpush1.msra.mxu0 0.0
    %3046 = vmatprep.subr.mxu0 0.0
    %3047 = vmatpush1.msra.mxu0 0.0
    %3048 = vmatprep.mubr.f32.mxu0 0.0
    %v3049 = vand.u32 %v222, 4294901760
    %3050 = vmatmul.mubr.f32.gmra.mrb[0].mxu0 %v3049
    %v3051 = vpop.f32.mrb[0].mxu0
    %v3052 = vadd.f32 %v2900, %v3051
    %v3053 = vpop.f32.mrb[0].mxu0
    %v3054 = vadd.f32 %v2902, %v3053
    %3055 = vdwg.mxu0
    %v3056 = vand.u32 %v69, 4294901760
    %v3057 = vsub.f32 %v69, %v3056
    %3058 = vmatprep.subr.mxu0 %v3057
    %v3059 = vand.u32 %v68, 4294901760
    %v3060 = vsub.f32 %v68, %v3059
    %3061 = vmatpush1.msra.mxu0 %v3060
    %v3062 = vand.u32 %v81, 4294901760
    %v3063 = vsub.f32 %v81, %v3062
    %3064 = vmatprep.subr.mxu0 %v3063
    %v3065 = vand.u32 %v80, 4294901760
    %v3066 = vsub.f32 %v80, %v3065
    %3067 = vmatpush1.msra.mxu0 %v3066
    %v3068 = vand.u32 %v93, 4294901760
    %v3069 = vsub.f32 %v93, %v3068
    %3070 = vmatprep.subr.mxu0 %v3069
    %v3071 = vand.u32 %v92, 4294901760
    %v3072 = vsub.f32 %v92, %v3071
    %3073 = vmatpush1.msra.mxu0 %v3072
    %v3074 = vand.u32 %v105, 4294901760
    %v3075 = vsub.f32 %v105, %v3074
    %3076 = vmatprep.subr.mxu0 %v3075
    %v3077 = vand.u32 %v104, 4294901760
    %v3078 = vsub.f32 %v104, %v3077
    %3079 = vmatpush1.msra.mxu0 %v3078
    %v3080 = vand.u32 %v117, 4294901760
    %v3081 = vsub.f32 %v117, %v3080
    %3082 = vmatprep.subr.mxu0 %v3081
    %v3083 = vand.u32 %v116, 4294901760
    %v3084 = vsub.f32 %v116, %v3083
    %3085 = vmatpush1.msra.mxu0 %v3084
    %v3086 = vand.u32 %v129, 4294901760
    %v3087 = vsub.f32 %v129, %v3086
    %3088 = vmatprep.subr.mxu0 %v3087
    %v3089 = vand.u32 %v128, 4294901760
    %v3090 = vsub.f32 %v128, %v3089
    %3091 = vmatpush1.msra.mxu0 %v3090
    %v3092 = vand.u32 %v141, 4294901760
    %v3093 = vsub.f32 %v141, %v3092
    %3094 = vmatprep.subr.mxu0 %v3093
    %v3095 = vand.u32 %v140, 4294901760
    %v3096 = vsub.f32 %v140, %v3095
    %3097 = vmatpush1.msra.mxu0 %v3096
    %v3098 = vand.u32 %v153, 4294901760
    %v3099 = vsub.f32 %v153, %v3098
    %3100 = vmatprep.subr.mxu0 %v3099
    %v3101 = vand.u32 %v152, 4294901760
    %v3102 = vsub.f32 %v152, %v3101
    %3103 = vmatpush1.msra.mxu0 %v3102
    %3104 = vmatprep.subr.mxu0 0.0
    %3105 = vmatpush1.msra.mxu0 0.0
    %3106 = vmatprep.subr.mxu0 0.0
    %3107 = vmatpush1.msra.mxu0 0.0
    %3108 = vmatprep.subr.mxu0 0.0
    %3109 = vmatpush1.msra.mxu0 0.0
    %3110 = vmatprep.subr.mxu0 0.0
    %3111 = vmatpush1.msra.mxu0 0.0
    %3112 = vmatprep.subr.mxu0 0.0
    %3113 = vmatpush1.msra.mxu0 0.0
    %3114 = vmatprep.subr.mxu0 0.0
    %3115 = vmatpush1.msra.mxu0 0.0
    %3116 = vmatprep.subr.mxu0 0.0
    %3117 = vmatpush1.msra.mxu0 0.0
    %3118 = vmatprep.subr.mxu0 0.0
    %3119 = vmatpush1.msra.mxu0 0.0
    %3120 = vmatprep.subr.mxu0 0.0
    %3121 = vmatpush1.msra.mxu0 0.0
    %3122 = vmatprep.subr.mxu0 0.0
    %3123 = vmatpush1.msra.mxu0 0.0
    %3124 = vmatprep.subr.mxu0 0.0
    %3125 = vmatpush1.msra.mxu0 0.0
    %3126 = vmatprep.subr.mxu0 0.0
    %3127 = vmatpush1.msra.mxu0 0.0
    %3128 = vmatprep.subr.mxu0 0.0
    %3129 = vmatpush1.msra.mxu0 0.0
    %3130 = vmatprep.subr.mxu0 0.0
    %3131 = vmatpush1.msra.mxu0 0.0
    %3132 = vmatprep.subr.mxu0 0.0
    %3133 = vmatpush1.msra.mxu0 0.0
    %3134 = vmatprep.subr.mxu0 0.0
    %3135 = vmatpush1.msra.mxu0 0.0
    %3136 = vmatprep.subr.mxu0 0.0
    %3137 = vmatpush1.msra.mxu0 0.0
    %3138 = vmatprep.subr.mxu0 0.0
    %3139 = vmatpush1.msra.mxu0 0.0
    %3140 = vmatprep.subr.mxu0 0.0
    %3141 = vmatpush1.msra.mxu0 0.0
    %3142 = vmatprep.subr.mxu0 0.0
    %3143 = vmatpush1.msra.mxu0 0.0
    %3144 = vmatprep.subr.mxu0 0.0
    %3145 = vmatpush1.msra.mxu0 0.0
    %3146 = vmatprep.subr.mxu0 0.0
    %3147 = vmatpush1.msra.mxu0 0.0
    %3148 = vmatprep.subr.mxu0 0.0
    %3149 = vmatpush1.msra.mxu0 0.0
    %3150 = vmatprep.subr.mxu0 0.0
    %3151 = vmatpush1.msra.mxu0 0.0
    %3152 = vmatprep.mubr.f32.mxu0 0.0
    %v3153 = vand.u32 %v222, 4294901760
    %v3154 = vsub.f32 %v222, %v3153
    %3155 = vmatmul.mubr.f32.gmra.mrb[0].mxu0 %v3154
    %v3156 = vpop.f32.mrb[0].mxu0
    %v3157 = vadd.f32 %v3052, %v3156
    %v3158 = vpop.f32.mrb[0].mxu0
    %v3159 = vadd.f32 %v3054, %v3158
    %3160 = vdwg.mxu0
    %v3161 = vand.u32 %v69, 4294901760
    %3162 = vmatprep.subr.mxu0 %v3161
    %v3163 = vand.u32 %v68, 4294901760
    %3164 = vmatpush1.msra.mxu0 %v3163
    %v3165 = vand.u32 %v81, 4294901760
    %3166 = vmatprep.subr.mxu0 %v3165
    %v3167 = vand.u32 %v80, 4294901760
    %3168 = vmatpush1.msra.mxu0 %v3167
    %v3169 = vand.u32 %v93, 4294901760
    %3170 = vmatprep.subr.mxu0 %v3169
    %v3171 = vand.u32 %v92, 4294901760
    %3172 = vmatpush1.msra.mxu0 %v3171
    %v3173 = vand.u32 %v105, 4294901760
    %3174 = vmatprep.subr.mxu0 %v3173
    %v3175 = vand.u32 %v104, 4294901760
    %3176 = vmatpush1.msra.mxu0 %v3175
    %v3177 = vand.u32 %v117, 4294901760
    %3178 = vmatprep.subr.mxu0 %v3177
    %v3179 = vand.u32 %v116, 4294901760
    %3180 = vmatpush1.msra.mxu0 %v3179
    %v3181 = vand.u32 %v129, 4294901760
    %3182 = vmatprep.subr.mxu0 %v3181
    %v3183 = vand.u32 %v128, 4294901760
    %3184 = vmatpush1.msra.mxu0 %v3183
    %v3185 = vand.u32 %v141, 4294901760
    %3186 = vmatprep.subr.mxu0 %v3185
    %v3187 = vand.u32 %v140, 4294901760
    %3188 = vmatpush1.msra.mxu0 %v3187
    %v3189 = vand.u32 %v153, 4294901760
    %3190 = vmatprep.subr.mxu0 %v3189
    %v3191 = vand.u32 %v152, 4294901760
    %3192 = vmatpush1.msra.mxu0 %v3191
    %3193 = vmatprep.subr.mxu0 0.0
    %3194 = vmatpush1.msra.mxu0 0.0
    %3195 = vmatprep.subr.mxu0 0.0
    %3196 = vmatpush1.msra.mxu0 0.0
    %3197 = vmatprep.subr.mxu0 0.0
    %3198 = vmatpush1.msra.mxu0 0.0
    %3199 = vmatprep.subr.mxu0 0.0
    %3200 = vmatpush1.msra.mxu0 0.0
    %3201 = vmatprep.subr.mxu0 0.0
    %3202 = vmatpush1.msra.mxu0 0.0
    %3203 = vmatprep.subr.mxu0 0.0
    %3204 = vmatpush1.msra.mxu0 0.0
    %3205 = vmatprep.subr.mxu0 0.0
    %3206 = vmatpush1.msra.mxu0 0.0
    %3207 = vmatprep.subr.mxu0 0.0
    %3208 = vmatpush1.msra.mxu0 0.0
    %3209 = vmatprep.subr.mxu0 0.0
    %3210 = vmatpush1.msra.mxu0 0.0
    %3211 = vmatprep.subr.mxu0 0.0
    %3212 = vmatpush1.msra.mxu0 0.0
    %3213 = vmatprep.subr.mxu0 0.0
    %3214 = vmatpush1.msra.mxu0 0.0
    %3215 = vmatprep.subr.mxu0 0.0
    %3216 = vmatpush1.msra.mxu0 0.0
    %3217 = vmatprep.subr.mxu0 0.0
    %3218 = vmatpush1.msra.mxu0 0.0
    %3219 = vmatprep.subr.mxu0 0.0
    %3220 = vmatpush1.msra.mxu0 0.0
    %3221 = vmatprep.subr.mxu0 0.0
    %3222 = vmatpush1.msra.mxu0 0.0
    %3223 = vmatprep.subr.mxu0 0.0
    %3224 = vmatpush1.msra.mxu0 0.0
    %3225 = vmatprep.subr.mxu0 0.0
    %3226 = vmatpush1.msra.mxu0 0.0
    %3227 = vmatprep.subr.mxu0 0.0
    %3228 = vmatpush1.msra.mxu0 0.0
    %3229 = vmatprep.subr.mxu0 0.0
    %3230 = vmatpush1.msra.mxu0 0.0
    %3231 = vmatprep.subr.mxu0 0.0
    %3232 = vmatpush1.msra.mxu0 0.0
    %3233 = vmatprep.subr.mxu0 0.0
    %3234 = vmatpush1.msra.mxu0 0.0
    %3235 = vmatprep.subr.mxu0 0.0
    %3236 = vmatpush1.msra.mxu0 0.0
    %3237 = vmatprep.subr.mxu0 0.0
    %3238 = vmatpush1.msra.mxu0 0.0
    %3239 = vmatprep.subr.mxu0 0.0
    %3240 = vmatpush1.msra.mxu0 0.0
    %3241 = vmatprep.mubr.f32.mxu0 0.0
    %v3242 = vand.u32 %v222, 4294901760
    %v3243 = vsub.f32 %v222, %v3242
    %v3244 = vand.u32 %v3243, 4294901760
    %3245 = vmatmul.mubr.f32.gmra.mrb[0].mxu0 %v3244
    %v3246 = vpop.f32.mrb[0].mxu0
    %v3247 = vadd.f32 %v3157, %v3246
    %v3248 = vpop.f32.mrb[0].mxu0
    %v3249 = vadd.f32 %v3159, %v3248
    %3250 = vdwg.mxu0
    %v3251 = vand.u32 %v69, 4294901760
    %v3252 = vsub.f32 %v69, %v3251
    %v3253 = vand.u32 %v3252, 4294901760
    %3254 = vmatprep.subr.mxu0 %v3253
    %v3255 = vand.u32 %v68, 4294901760
    %v3256 = vsub.f32 %v68, %v3255
    %v3257 = vand.u32 %v3256, 4294901760
    %3258 = vmatpush1.msra.mxu0 %v3257
    %v3259 = vand.u32 %v81, 4294901760
    %v3260 = vsub.f32 %v81, %v3259
    %v3261 = vand.u32 %v3260, 4294901760
    %3262 = vmatprep.subr.mxu0 %v3261
    %v3263 = vand.u32 %v80, 4294901760
    %v3264 = vsub.f32 %v80, %v3263
    %v3265 = vand.u32 %v3264, 4294901760
    %3266 = vmatpush1.msra.mxu0 %v3265
    %v3267 = vand.u32 %v93, 4294901760
    %v3268 = vsub.f32 %v93, %v3267
    %v3269 = vand.u32 %v3268, 4294901760
    %3270 = vmatprep.subr.mxu0 %v3269
    %v3271 = vand.u32 %v92, 4294901760
    %v3272 = vsub.f32 %v92, %v3271
    %v3273 = vand.u32 %v3272, 4294901760
    %3274 = vmatpush1.msra.mxu0 %v3273
    %v3275 = vand.u32 %v105, 4294901760
    %v3276 = vsub.f32 %v105, %v3275
    %v3277 = vand.u32 %v3276, 4294901760
    %3278 = vmatprep.subr.mxu0 %v3277
    %v3279 = vand.u32 %v104, 4294901760
    %v3280 = vsub.f32 %v104, %v3279
    %v3281 = vand.u32 %v3280, 4294901760
    %3282 = vmatpush1.msra.mxu0 %v3281
    %v3283 = vand.u32 %v117, 4294901760
    %v3284 = vsub.f32 %v117, %v3283
    %v3285 = vand.u32 %v3284, 4294901760
    %3286 = vmatprep.subr.mxu0 %v3285
    %v3287 = vand.u32 %v116, 4294901760
    %v3288 = vsub.f32 %v116, %v3287
    %v3289 = vand.u32 %v3288, 4294901760
    %3290 = vmatpush1.msra.mxu0 %v3289
    %v3291 = vand.u32 %v129, 4294901760
    %v3292 = vsub.f32 %v129, %v3291
    %v3293 = vand.u32 %v3292, 4294901760
    %3294 = vmatprep.subr.mxu0 %v3293
    %v3295 = vand.u32 %v128, 4294901760
    %v3296 = vsub.f32 %v128, %v3295
    %v3297 = vand.u32 %v3296, 4294901760
    %3298 = vmatpush1.msra.mxu0 %v3297
    %v3299 = vand.u32 %v141, 4294901760
    %v3300 = vsub.f32 %v141, %v3299
    %v3301 = vand.u32 %v3300, 4294901760
    %3302 = vmatprep.subr.mxu0 %v3301
    %v3303 = vand.u32 %v140, 4294901760
    %v3304 = vsub.f32 %v140, %v3303
    %v3305 = vand.u32 %v3304, 4294901760
    %3306 = vmatpush1.msra.mxu0 %v3305
    %v3307 = vand.u32 %v153, 4294901760
    %v3308 = vsub.f32 %v153, %v3307
    %v3309 = vand.u32 %v3308, 4294901760
    %3310 = vmatprep.subr.mxu0 %v3309
    %v3311 = vand.u32 %v152, 4294901760
    %v3312 = vsub.f32 %v152, %v3311
    %v3313 = vand.u32 %v3312, 4294901760
    %3314 = vmatpush1.msra.mxu0 %v3313
    %3315 = vmatprep.subr.mxu0 0.0
    %3316 = vmatpush1.msra.mxu0 0.0
    %3317 = vmatprep.subr.mxu0 0.0
    %3318 = vmatpush1.msra.mxu0 0.0
    %3319 = vmatprep.subr.mxu0 0.0
    %3320 = vmatpush1.msra.mxu0 0.0
    %3321 = vmatprep.subr.mxu0 0.0
    %3322 = vmatpush1.msra.mxu0 0.0
    %3323 = vmatprep.subr.mxu0 0.0
    %3324 = vmatpush1.msra.mxu0 0.0
    %3325 = vmatprep.subr.mxu0 0.0
    %3326 = vmatpush1.msra.mxu0 0.0
    %3327 = vmatprep.subr.mxu0 0.0
    %3328 = vmatpush1.msra.mxu0 0.0
    %3329 = vmatprep.subr.mxu0 0.0
    %3330 = vmatpush1.msra.mxu0 0.0
    %3331 = vmatprep.subr.mxu0 0.0
    %3332 = vmatpush1.msra.mxu0 0.0
    %3333 = vmatprep.subr.mxu0 0.0
    %3334 = vmatpush1.msra.mxu0 0.0
    %3335 = vmatprep.subr.mxu0 0.0
    %3336 = vmatpush1.msra.mxu0 0.0
    %3337 = vmatprep.subr.mxu0 0.0
    %3338 = vmatpush1.msra.mxu0 0.0
    %3339 = vmatprep.subr.mxu0 0.0
    %3340 = vmatpush1.msra.mxu0 0.0
    %3341 = vmatprep.subr.mxu0 0.0
    %3342 = vmatpush1.msra.mxu0 0.0
    %3343 = vmatprep.subr.mxu0 0.0
    %3344 = vmatpush1.msra.mxu0 0.0
    %3345 = vmatprep.subr.mxu0 0.0
    %3346 = vmatpush1.msra.mxu0 0.0
    %3347 = vmatprep.subr.mxu0 0.0
    %3348 = vmatpush1.msra.mxu0 0.0
    %3349 = vmatprep.subr.mxu0 0.0
    %3350 = vmatpush1.msra.mxu0 0.0
    %3351 = vmatprep.subr.mxu0 0.0
    %3352 = vmatpush1.msra.mxu0 0.0
    %3353 = vmatprep.subr.mxu0 0.0
    %3354 = vmatpush1.msra.mxu0 0.0
    %3355 = vmatprep.subr.mxu0 0.0
    %3356 = vmatpush1.msra.mxu0 0.0
    %3357 = vmatprep.subr.mxu0 0.0
    %3358 = vmatpush1.msra.mxu0 0.0
    %3359 = vmatprep.subr.mxu0 0.0
    %3360 = vmatpush1.msra.mxu0 0.0
    %3361 = vmatprep.subr.mxu0 0.0
    %3362 = vmatpush1.msra.mxu0 0.0
    %3363 = vmatprep.mubr.f32.mxu0 0.0
    %v3364 = vand.u32 %v222, 4294901760
    %3365 = vmatmul.mubr.f32.gmra.mrb[0].mxu0 %v3364
    %v3366 = vpop.f32.mrb[0].mxu0
    %v3367 = vadd.f32 %v3247, %v3366
    %v3368 = vpop.f32.mrb[0].mxu0
    %v3369 = vadd.f32 %v3249, %v3368
    %3370 = vdwg.mxu0
    %v3371 = vand.u32 %v69, 4294901760
    %3372 = vmatprep.subr.mxu0 %v3371
    %v3373 = vand.u32 %v68, 4294901760
    %3374 = vmatpush1.msra.mxu0 %v3373
    %v3375 = vand.u32 %v81, 4294901760
    %3376 = vmatprep.subr.mxu0 %v3375
    %v3377 = vand.u32 %v80, 4294901760
    %3378 = vmatpush1.msra.mxu0 %v3377
    %v3379 = vand.u32 %v93, 4294901760
    %3380 = vmatprep.subr.mxu0 %v3379
    %v3381 = vand.u32 %v92, 4294901760
    %3382 = vmatpush1.msra.mxu0 %v3381
    %v3383 = vand.u32 %v105, 4294901760
    %3384 = vmatprep.subr.mxu0 %v3383
    %v3385 = vand.u32 %v104, 4294901760
    %3386 = vmatpush1.msra.mxu0 %v3385
    %v3387 = vand.u32 %v117, 4294901760
    %3388 = vmatprep.subr.mxu0 %v3387
    %v3389 = vand.u32 %v116, 4294901760
    %3390 = vmatpush1.msra.mxu0 %v3389
    %v3391 = vand.u32 %v129, 4294901760
    %3392 = vmatprep.subr.mxu0 %v3391
    %v3393 = vand.u32 %v128, 4294901760
    %3394 = vmatpush1.msra.mxu0 %v3393
    %v3395 = vand.u32 %v141, 4294901760
    %3396 = vmatprep.subr.mxu0 %v3395
    %v3397 = vand.u32 %v140, 4294901760
    %3398 = vmatpush1.msra.mxu0 %v3397
    %v3399 = vand.u32 %v153, 4294901760
    %3400 = vmatprep.subr.mxu0 %v3399
    %v3401 = vand.u32 %v152, 4294901760
    %3402 = vmatpush1.msra.mxu0 %v3401
    %3403 = vmatprep.subr.mxu0 0.0
    %3404 = vmatpush1.msra.mxu0 0.0
    %3405 = vmatprep.subr.mxu0 0.0
    %3406 = vmatpush1.msra.mxu0 0.0
    %3407 = vmatprep.subr.mxu0 0.0
    %3408 = vmatpush1.msra.mxu0 0.0
    %3409 = vmatprep.subr.mxu0 0.0
    %3410 = vmatpush1.msra.mxu0 0.0
    %3411 = vmatprep.subr.mxu0 0.0
    %3412 = vmatpush1.msra.mxu0 0.0
    %3413 = vmatprep.subr.mxu0 0.0
    %3414 = vmatpush1.msra.mxu0 0.0
    %3415 = vmatprep.subr.mxu0 0.0
    %3416 = vmatpush1.msra.mxu0 0.0
    %3417 = vmatprep.subr.mxu0 0.0
    %3418 = vmatpush1.msra.mxu0 0.0
    %3419 = vmatprep.subr.mxu0 0.0
    %3420 = vmatpush1.msra.mxu0 0.0
    %3421 = vmatprep.subr.mxu0 0.0
    %3422 = vmatpush1.msra.mxu0 0.0
    %3423 = vmatprep.subr.mxu0 0.0
    %3424 = vmatpush1.msra.mxu0 0.0
    %3425 = vmatprep.subr.mxu0 0.0
    %3426 = vmatpush1.msra.mxu0 0.0
    %3427 = vmatprep.subr.mxu0 0.0
    %3428 = vmatpush1.msra.mxu0 0.0
    %3429 = vmatprep.subr.mxu0 0.0
    %3430 = vmatpush1.msra.mxu0 0.0
    %3431 = vmatprep.subr.mxu0 0.0
    %3432 = vmatpush1.msra.mxu0 0.0
    %3433 = vmatprep.subr.mxu0 0.0
    %3434 = vmatpush1.msra.mxu0 0.0
    %3435 = vmatprep.subr.mxu0 0.0
    %3436 = vmatpush1.msra.mxu0 0.0
    %3437 = vmatprep.subr.mxu0 0.0
    %3438 = vmatpush1.msra.mxu0 0.0
    %3439 = vmatprep.subr.mxu0 0.0
    %3440 = vmatpush1.msra.mxu0 0.0
    %3441 = vmatprep.subr.mxu0 0.0
    %3442 = vmatpush1.msra.mxu0 0.0
    %3443 = vmatprep.subr.mxu0 0.0
    %3444 = vmatpush1.msra.mxu0 0.0
    %3445 = vmatprep.subr.mxu0 0.0
    %3446 = vmatpush1.msra.mxu0 0.0
    %3447 = vmatprep.subr.mxu0 0.0
    %3448 = vmatpush1.msra.mxu0 0.0
    %3449 = vmatprep.subr.mxu0 0.0
    %3450 = vmatpush1.msra.mxu0 0.0
    %3451 = vmatprep.mubr.f32.mxu0 0.0
    %v3452 = vand.u32 %v222, 4294901760
    %3453 = vmatmul.mubr.f32.gmra.mrb[0].mxu0 %v3452
    %v3454 = vpop.f32.mrb[0].mxu0
    %v3455 = vadd.f32 %v3367, %v3454
    %v3456 = vpop.f32.mrb[0].mxu0
    %v3457 = vadd.f32 %v3369, %v3456
    %3458 = vdwg.mxu0
    %v3459 = vand.u32 %v71, 4294901760
    %3460 = vmatprep.subr.mxu0 %v3459
    %v3461 = vand.u32 %v70, 4294901760
    %3462 = vmatpush1.msra.mxu0 %v3461
    %v3463 = vand.u32 %v83, 4294901760
    %3464 = vmatprep.subr.mxu0 %v3463
    %v3465 = vand.u32 %v82, 4294901760
    %3466 = vmatpush1.msra.mxu0 %v3465
    %v3467 = vand.u32 %v95, 4294901760
    %3468 = vmatprep.subr.mxu0 %v3467
    %v3469 = vand.u32 %v94, 4294901760
    %3470 = vmatpush1.msra.mxu0 %v3469
    %v3471 = vand.u32 %v107, 4294901760
    %3472 = vmatprep.subr.mxu0 %v3471
    %v3473 = vand.u32 %v106, 4294901760
    %3474 = vmatpush1.msra.mxu0 %v3473
    %v3475 = vand.u32 %v119, 4294901760
    %3476 = vmatprep.subr.mxu0 %v3475
    %v3477 = vand.u32 %v118, 4294901760
    %3478 = vmatpush1.msra.mxu0 %v3477
    %v3479 = vand.u32 %v131, 4294901760
    %3480 = vmatprep.subr.mxu0 %v3479
    %v3481 = vand.u32 %v130, 4294901760
    %3482 = vmatpush1.msra.mxu0 %v3481
    %v3483 = vand.u32 %v143, 4294901760
    %3484 = vmatprep.subr.mxu0 %v3483
    %v3485 = vand.u32 %v142, 4294901760
    %3486 = vmatpush1.msra.mxu0 %v3485
    %v3487 = vand.u32 %v155, 4294901760
    %3488 = vmatprep.subr.mxu0 %v3487
    %v3489 = vand.u32 %v154, 4294901760
    %3490 = vmatpush1.msra.mxu0 %v3489
    %3491 = vmatprep.subr.mxu0 0.0
    %3492 = vmatpush1.msra.mxu0 0.0
    %3493 = vmatprep.subr.mxu0 0.0
    %3494 = vmatpush1.msra.mxu0 0.0
    %3495 = vmatprep.subr.mxu0 0.0
    %3496 = vmatpush1.msra.mxu0 0.0
    %3497 = vmatprep.subr.mxu0 0.0
    %3498 = vmatpush1.msra.mxu0 0.0
    %3499 = vmatprep.subr.mxu0 0.0
    %3500 = vmatpush1.msra.mxu0 0.0
    %3501 = vmatprep.subr.mxu0 0.0
    %3502 = vmatpush1.msra.mxu0 0.0
    %3503 = vmatprep.subr.mxu0 0.0
    %3504 = vmatpush1.msra.mxu0 0.0
    %3505 = vmatprep.subr.mxu0 0.0
    %3506 = vmatpush1.msra.mxu0 0.0
    %3507 = vmatprep.subr.mxu0 0.0
    %3508 = vmatpush1.msra.mxu0 0.0
    %3509 = vmatprep.subr.mxu0 0.0
    %3510 = vmatpush1.msra.mxu0 0.0
    %3511 = vmatprep.subr.mxu0 0.0
    %3512 = vmatpush1.msra.mxu0 0.0
    %3513 = vmatprep.subr.mxu0 0.0
    %3514 = vmatpush1.msra.mxu0 0.0
    %3515 = vmatprep.subr.mxu0 0.0
    %3516 = vmatpush1.msra.mxu0 0.0
    %3517 = vmatprep.subr.mxu0 0.0
    %3518 = vmatpush1.msra.mxu0 0.0
    %3519 = vmatprep.subr.mxu0 0.0
    %3520 = vmatpush1.msra.mxu0 0.0
    %3521 = vmatprep.subr.mxu0 0.0
    %3522 = vmatpush1.msra.mxu0 0.0
    %3523 = vmatprep.subr.mxu0 0.0
    %3524 = vmatpush1.msra.mxu0 0.0
    %3525 = vmatprep.subr.mxu0 0.0
    %3526 = vmatpush1.msra.mxu0 0.0
    %3527 = vmatprep.subr.mxu0 0.0
    %3528 = vmatpush1.msra.mxu0 0.0
    %3529 = vmatprep.subr.mxu0 0.0
    %3530 = vmatpush1.msra.mxu0 0.0
    %3531 = vmatprep.subr.mxu0 0.0
    %3532 = vmatpush1.msra.mxu0 0.0
    %3533 = vmatprep.subr.mxu0 0.0
    %3534 = vmatpush1.msra.mxu0 0.0
    %3535 = vmatprep.subr.mxu0 0.0
    %3536 = vmatpush1.msra.mxu0 0.0
    %3537 = vmatprep.subr.mxu0 0.0
    %3538 = vmatpush1.msra.mxu0 0.0
    %3539 = vmatprep.mubr.f32.mxu0 0.0
    %v3540 = vand.u32 %v222, 4294901760
    %v3541 = vsub.f32 %v222, %v3540
    %v3542 = vand.u32 %v3541, 4294901760
    %v3543 = vsub.f32 %v3541, %v3542
    %v3544 = vand.u32 %v3543, 4294901760
    %3545 = vmatmul.mubr.f32.gmra.mrb[0].mxu0 %v3544
    %v3546 = vpop.f32.mrb[0].mxu0
    %v3547 = vadd.f32 %v203, %v3546
    %v3548 = vpop.f32.mrb[0].mxu0
    %v3549 = vadd.f32 %v207, %v3548
    %3550 = vdwg.mxu0
    %v3551 = vand.u32 %v71, 4294901760
    %v3552 = vsub.f32 %v71, %v3551
    %v3553 = vand.u32 %v3552, 4294901760
    %v3554 = vsub.f32 %v3552, %v3553
    %v3555 = vand.u32 %v3554, 4294901760
    %3556 = vmatprep.subr.mxu0 %v3555
    %v3557 = vand.u32 %v70, 4294901760
    %v3558 = vsub.f32 %v70, %v3557
    %v3559 = vand.u32 %v3558, 4294901760
    %v3560 = vsub.f32 %v3558, %v3559
    %v3561 = vand.u32 %v3560, 4294901760
    %3562 = vmatpush1.msra.mxu0 %v3561
    %v3563 = vand.u32 %v83, 4294901760
    %v3564 = vsub.f32 %v83, %v3563
    %v3565 = vand.u32 %v3564, 4294901760
    %v3566 = vsub.f32 %v3564, %v3565
    %v3567 = vand.u32 %v3566, 4294901760
    %3568 = vmatprep.subr.mxu0 %v3567
    %v3569 = vand.u32 %v82, 4294901760
    %v3570 = vsub.f32 %v82, %v3569
    %v3571 = vand.u32 %v3570, 4294901760
    %v3572 = vsub.f32 %v3570, %v3571
    %v3573 = vand.u32 %v3572, 4294901760
    %3574 = vmatpush1.msra.mxu0 %v3573
    %v3575 = vand.u32 %v95, 4294901760
    %v3576 = vsub.f32 %v95, %v3575
    %v3577 = vand.u32 %v3576, 4294901760
    %v3578 = vsub.f32 %v3576, %v3577
    %v3579 = vand.u32 %v3578, 4294901760
    %3580 = vmatprep.subr.mxu0 %v3579
    %v3581 = vand.u32 %v94, 4294901760
    %v3582 = vsub.f32 %v94, %v3581
    %v3583 = vand.u32 %v3582, 4294901760
    %v3584 = vsub.f32 %v3582, %v3583
    %v3585 = vand.u32 %v3584, 4294901760
    %3586 = vmatpush1.msra.mxu0 %v3585
    %v3587 = vand.u32 %v107, 4294901760
    %v3588 = vsub.f32 %v107, %v3587
    %v3589 = vand.u32 %v3588, 4294901760
    %v3590 = vsub.f32 %v3588, %v3589
    %v3591 = vand.u32 %v3590, 4294901760
    %3592 = vmatprep.subr.mxu0 %v3591
    %v3593 = vand.u32 %v106, 4294901760
    %v3594 = vsub.f32 %v106, %v3593
    %v3595 = vand.u32 %v3594, 4294901760
    %v3596 = vsub.f32 %v3594, %v3595
    %v3597 = vand.u32 %v3596, 4294901760
    %3598 = vmatpush1.msra.mxu0 %v3597
    %v3599 = vand.u32 %v119, 4294901760
    %v3600 = vsub.f32 %v119, %v3599
    %v3601 = vand.u32 %v3600, 4294901760
    %v3602 = vsub.f32 %v3600, %v3601
    %v3603 = vand.u32 %v3602, 4294901760
    %3604 = vmatprep.subr.mxu0 %v3603
    %v3605 = vand.u32 %v118, 4294901760
    %v3606 = vsub.f32 %v118, %v3605
    %v3607 = vand.u32 %v3606, 4294901760
    %v3608 = vsub.f32 %v3606, %v3607
    %v3609 = vand.u32 %v3608, 4294901760
    %3610 = vmatpush1.msra.mxu0 %v3609
    %v3611 = vand.u32 %v131, 4294901760
    %v3612 = vsub.f32 %v131, %v3611
    %v3613 = vand.u32 %v3612, 4294901760
    %v3614 = vsub.f32 %v3612, %v3613
    %v3615 = vand.u32 %v3614, 4294901760
    %3616 = vmatprep.subr.mxu0 %v3615
    %v3617 = vand.u32 %v130, 4294901760
    %v3618 = vsub.f32 %v130, %v3617
    %v3619 = vand.u32 %v3618, 4294901760
    %v3620 = vsub.f32 %v3618, %v3619
    %v3621 = vand.u32 %v3620, 4294901760
    %3622 = vmatpush1.msra.mxu0 %v3621
    %v3623 = vand.u32 %v143, 4294901760
    %v3624 = vsub.f32 %v143, %v3623
    %v3625 = vand.u32 %v3624, 4294901760
    %v3626 = vsub.f32 %v3624, %v3625
    %v3627 = vand.u32 %v3626, 4294901760
    %3628 = vmatprep.subr.mxu0 %v3627
    %v3629 = vand.u32 %v142, 4294901760
    %v3630 = vsub.f32 %v142, %v3629
    %v3631 = vand.u32 %v3630, 4294901760
    %v3632 = vsub.f32 %v3630, %v3631
    %v3633 = vand.u32 %v3632, 4294901760
    %3634 = vmatpush1.msra.mxu0 %v3633
    %v3635 = vand.u32 %v155, 4294901760
    %v3636 = vsub.f32 %v155, %v3635
    %v3637 = vand.u32 %v3636, 4294901760
    %v3638 = vsub.f32 %v3636, %v3637
    %v3639 = vand.u32 %v3638, 4294901760
    %3640 = vmatprep.subr.mxu0 %v3639
    %v3641 = vand.u32 %v154, 4294901760
    %v3642 = vsub.f32 %v154, %v3641
    %v3643 = vand.u32 %v3642, 4294901760
    %v3644 = vsub.f32 %v3642, %v3643
    %v3645 = vand.u32 %v3644, 4294901760
    %3646 = vmatpush1.msra.mxu0 %v3645
    %3647 = vmatprep.subr.mxu0 0.0
    %3648 = vmatpush1.msra.mxu0 0.0
    %3649 = vmatprep.subr.mxu0 0.0
    %3650 = vmatpush1.msra.mxu0 0.0
    %3651 = vmatprep.subr.mxu0 0.0
    %3652 = vmatpush1.msra.mxu0 0.0
    %3653 = vmatprep.subr.mxu0 0.0
    %3654 = vmatpush1.msra.mxu0 0.0
    %3655 = vmatprep.subr.mxu0 0.0
    %3656 = vmatpush1.msra.mxu0 0.0
    %3657 = vmatprep.subr.mxu0 0.0
    %3658 = vmatpush1.msra.mxu0 0.0
    %3659 = vmatprep.subr.mxu0 0.0
    %3660 = vmatpush1.msra.mxu0 0.0
    %3661 = vmatprep.subr.mxu0 0.0
    %3662 = vmatpush1.msra.mxu0 0.0
    %3663 = vmatprep.subr.mxu0 0.0
    %3664 = vmatpush1.msra.mxu0 0.0
    %3665 = vmatprep.subr.mxu0 0.0
    %3666 = vmatpush1.msra.mxu0 0.0
    %3667 = vmatprep.subr.mxu0 0.0
    %3668 = vmatpush1.msra.mxu0 0.0
    %3669 = vmatprep.subr.mxu0 0.0
    %3670 = vmatpush1.msra.mxu0 0.0
    %3671 = vmatprep.subr.mxu0 0.0
    %3672 = vmatpush1.msra.mxu0 0.0
    %3673 = vmatprep.subr.mxu0 0.0
    %3674 = vmatpush1.msra.mxu0 0.0
    %3675 = vmatprep.subr.mxu0 0.0
    %3676 = vmatpush1.msra.mxu0 0.0
    %3677 = vmatprep.subr.mxu0 0.0
    %3678 = vmatpush1.msra.mxu0 0.0
    %3679 = vmatprep.subr.mxu0 0.0
    %3680 = vmatpush1.msra.mxu0 0.0
    %3681 = vmatprep.subr.mxu0 0.0
    %3682 = vmatpush1.msra.mxu0 0.0
    %3683 = vmatprep.subr.mxu0 0.0
    %3684 = vmatpush1.msra.mxu0 0.0
    %3685 = vmatprep.subr.mxu0 0.0
    %3686 = vmatpush1.msra.mxu0 0.0
    %3687 = vmatprep.subr.mxu0 0.0
    %3688 = vmatpush1.msra.mxu0 0.0
    %3689 = vmatprep.subr.mxu0 0.0
    %3690 = vmatpush1.msra.mxu0 0.0
    %3691 = vmatprep.subr.mxu0 0.0
    %3692 = vmatpush1.msra.mxu0 0.0
    %3693 = vmatprep.subr.mxu0 0.0
    %3694 = vmatpush1.msra.mxu0 0.0
    %3695 = vmatprep.mubr.f32.mxu0 0.0
    %v3696 = vand.u32 %v222, 4294901760
    %3697 = vmatmul.mubr.f32.gmra.mrb[0].mxu0 %v3696
    %v3698 = vpop.f32.mrb[0].mxu0
    %v3699 = vadd.f32 %v3547, %v3698
    %v3700 = vpop.f32.mrb[0].mxu0
    %v3701 = vadd.f32 %v3549, %v3700
    %3702 = vdwg.mxu0
    %v3703 = vand.u32 %v71, 4294901760
    %v3704 = vsub.f32 %v71, %v3703
    %3705 = vmatprep.subr.mxu0 %v3704
    %v3706 = vand.u32 %v70, 4294901760
    %v3707 = vsub.f32 %v70, %v3706
    %3708 = vmatpush1.msra.mxu0 %v3707
    %v3709 = vand.u32 %v83, 4294901760
    %v3710 = vsub.f32 %v83, %v3709
    %3711 = vmatprep.subr.mxu0 %v3710
    %v3712 = vand.u32 %v82, 4294901760
    %v3713 = vsub.f32 %v82, %v3712
    %3714 = vmatpush1.msra.mxu0 %v3713
    %v3715 = vand.u32 %v95, 4294901760
    %v3716 = vsub.f32 %v95, %v3715
    %3717 = vmatprep.subr.mxu0 %v3716
    %v3718 = vand.u32 %v94, 4294901760
    %v3719 = vsub.f32 %v94, %v3718
    %3720 = vmatpush1.msra.mxu0 %v3719
    %v3721 = vand.u32 %v107, 4294901760
    %v3722 = vsub.f32 %v107, %v3721
    %3723 = vmatprep.subr.mxu0 %v3722
    %v3724 = vand.u32 %v106, 4294901760
    %v3725 = vsub.f32 %v106, %v3724
    %3726 = vmatpush1.msra.mxu0 %v3725
    %v3727 = vand.u32 %v119, 4294901760
    %v3728 = vsub.f32 %v119, %v3727
    %3729 = vmatprep.subr.mxu0 %v3728
    %v3730 = vand.u32 %v118, 4294901760
    %v3731 = vsub.f32 %v118, %v3730
    %3732 = vmatpush1.msra.mxu0 %v3731
    %v3733 = vand.u32 %v131, 4294901760
    %v3734 = vsub.f32 %v131, %v3733
    %3735 = vmatprep.subr.mxu0 %v3734
    %v3736 = vand.u32 %v130, 4294901760
    %v3737 = vsub.f32 %v130, %v3736
    %3738 = vmatpush1.msra.mxu0 %v3737
    %v3739 = vand.u32 %v143, 4294901760
    %v3740 = vsub.f32 %v143, %v3739
    %3741 = vmatprep.subr.mxu0 %v3740
    %v3742 = vand.u32 %v142, 4294901760
    %v3743 = vsub.f32 %v142, %v3742
    %3744 = vmatpush1.msra.mxu0 %v3743
    %v3745 = vand.u32 %v155, 4294901760
    %v3746 = vsub.f32 %v155, %v3745
    %3747 = vmatprep.subr.mxu0 %v3746
    %v3748 = vand.u32 %v154, 4294901760
    %v3749 = vsub.f32 %v154, %v3748
    %3750 = vmatpush1.msra.mxu0 %v3749
    %3751 = vmatprep.subr.mxu0 0.0
    %3752 = vmatpush1.msra.mxu0 0.0
    %3753 = vmatprep.subr.mxu0 0.0
    %3754 = vmatpush1.msra.mxu0 0.0
    %3755 = vmatprep.subr.mxu0 0.0
    %3756 = vmatpush1.msra.mxu0 0.0
    %3757 = vmatprep.subr.mxu0 0.0
    %3758 = vmatpush1.msra.mxu0 0.0
    %3759 = vmatprep.subr.mxu0 0.0
    %3760 = vmatpush1.msra.mxu0 0.0
    %3761 = vmatprep.subr.mxu0 0.0
    %3762 = vmatpush1.msra.mxu0 0.0
    %3763 = vmatprep.subr.mxu0 0.0
    %3764 = vmatpush1.msra.mxu0 0.0
    %3765 = vmatprep.subr.mxu0 0.0
    %3766 = vmatpush1.msra.mxu0 0.0
    %3767 = vmatprep.subr.mxu0 0.0
    %3768 = vmatpush1.msra.mxu0 0.0
    %3769 = vmatprep.subr.mxu0 0.0
    %3770 = vmatpush1.msra.mxu0 0.0
    %3771 = vmatprep.subr.mxu0 0.0
    %3772 = vmatpush1.msra.mxu0 0.0
    %3773 = vmatprep.subr.mxu0 0.0
    %3774 = vmatpush1.msra.mxu0 0.0
    %3775 = vmatprep.subr.mxu0 0.0
    %3776 = vmatpush1.msra.mxu0 0.0
    %3777 = vmatprep.subr.mxu0 0.0
    %3778 = vmatpush1.msra.mxu0 0.0
    %3779 = vmatprep.subr.mxu0 0.0
    %3780 = vmatpush1.msra.mxu0 0.0
    %3781 = vmatprep.subr.mxu0 0.0
    %3782 = vmatpush1.msra.mxu0 0.0
    %3783 = vmatprep.subr.mxu0 0.0
    %3784 = vmatpush1.msra.mxu0 0.0
    %3785 = vmatprep.subr.mxu0 0.0
    %3786 = vmatpush1.msra.mxu0 0.0
    %3787 = vmatprep.subr.mxu0 0.0
    %3788 = vmatpush1.msra.mxu0 0.0
    %3789 = vmatprep.subr.mxu0 0.0
    %3790 = vmatpush1.msra.mxu0 0.0
    %3791 = vmatprep.subr.mxu0 0.0
    %3792 = vmatpush1.msra.mxu0 0.0
    %3793 = vmatprep.subr.mxu0 0.0
    %3794 = vmatpush1.msra.mxu0 0.0
    %3795 = vmatprep.subr.mxu0 0.0
    %3796 = vmatpush1.msra.mxu0 0.0
    %3797 = vmatprep.subr.mxu0 0.0
    %3798 = vmatpush1.msra.mxu0 0.0
    %3799 = vmatprep.mubr.f32.mxu0 0.0
    %v3800 = vand.u32 %v222, 4294901760
    %v3801 = vsub.f32 %v222, %v3800
    %3802 = vmatmul.mubr.f32.gmra.mrb[0].mxu0 %v3801
    %v3803 = vpop.f32.mrb[0].mxu0
    %v3804 = vadd.f32 %v3699, %v3803
    %v3805 = vpop.f32.mrb[0].mxu0
    %v3806 = vadd.f32 %v3701, %v3805
    %3807 = vdwg.mxu0
    %v3808 = vand.u32 %v71, 4294901760
    %3809 = vmatprep.subr.mxu0 %v3808
    %v3810 = vand.u32 %v70, 4294901760
    %3811 = vmatpush1.msra.mxu0 %v3810
    %v3812 = vand.u32 %v83, 4294901760
    %3813 = vmatprep.subr.mxu0 %v3812
    %v3814 = vand.u32 %v82, 4294901760
    %3815 = vmatpush1.msra.mxu0 %v3814
    %v3816 = vand.u32 %v95, 4294901760
    %3817 = vmatprep.subr.mxu0 %v3816
    %v3818 = vand.u32 %v94, 4294901760
    %3819 = vmatpush1.msra.mxu0 %v3818
    %v3820 = vand.u32 %v107, 4294901760
    %3821 = vmatprep.subr.mxu0 %v3820
    %v3822 = vand.u32 %v106, 4294901760
    %3823 = vmatpush1.msra.mxu0 %v3822
    %v3824 = vand.u32 %v119, 4294901760
    %3825 = vmatprep.subr.mxu0 %v3824
    %v3826 = vand.u32 %v118, 4294901760
    %3827 = vmatpush1.msra.mxu0 %v3826
    %v3828 = vand.u32 %v131, 4294901760
    %3829 = vmatprep.subr.mxu0 %v3828
    %v3830 = vand.u32 %v130, 4294901760
    %3831 = vmatpush1.msra.mxu0 %v3830
    %v3832 = vand.u32 %v143, 4294901760
    %3833 = vmatprep.subr.mxu0 %v3832
    %v3834 = vand.u32 %v142, 4294901760
    %3835 = vmatpush1.msra.mxu0 %v3834
    %v3836 = vand.u32 %v155, 4294901760
    %3837 = vmatprep.subr.mxu0 %v3836
    %v3838 = vand.u32 %v154, 4294901760
    %3839 = vmatpush1.msra.mxu0 %v3838
    %3840 = vmatprep.subr.mxu0 0.0
    %3841 = vmatpush1.msra.mxu0 0.0
    %3842 = vmatprep.subr.mxu0 0.0
    %3843 = vmatpush1.msra.mxu0 0.0
    %3844 = vmatprep.subr.mxu0 0.0
    %3845 = vmatpush1.msra.mxu0 0.0
    %3846 = vmatprep.subr.mxu0 0.0
    %3847 = vmatpush1.msra.mxu0 0.0
    %3848 = vmatprep.subr.mxu0 0.0
    %3849 = vmatpush1.msra.mxu0 0.0
    %3850 = vmatprep.subr.mxu0 0.0
    %3851 = vmatpush1.msra.mxu0 0.0
    %3852 = vmatprep.subr.mxu0 0.0
    %3853 = vmatpush1.msra.mxu0 0.0
    %3854 = vmatprep.subr.mxu0 0.0
    %3855 = vmatpush1.msra.mxu0 0.0
    %3856 = vmatprep.subr.mxu0 0.0
    %3857 = vmatpush1.msra.mxu0 0.0
    %3858 = vmatprep.subr.mxu0 0.0
    %3859 = vmatpush1.msra.mxu0 0.0
    %3860 = vmatprep.subr.mxu0 0.0
    %3861 = vmatpush1.msra.mxu0 0.0
    %3862 = vmatprep.subr.mxu0 0.0
    %3863 = vmatpush1.msra.mxu0 0.0
    %3864 = vmatprep.subr.mxu0 0.0
    %3865 = vmatpush1.msra.mxu0 0.0
    %3866 = vmatprep.subr.mxu0 0.0
    %3867 = vmatpush1.msra.mxu0 0.0
    %3868 = vmatprep.subr.mxu0 0.0
    %3869 = vmatpush1.msra.mxu0 0.0
    %3870 = vmatprep.subr.mxu0 0.0
    %3871 = vmatpush1.msra.mxu0 0.0
    %3872 = vmatprep.subr.mxu0 0.0
    %3873 = vmatpush1.msra.mxu0 0.0
    %3874 = vmatprep.subr.mxu0 0.0
    %3875 = vmatpush1.msra.mxu0 0.0
    %3876 = vmatprep.subr.mxu0 0.0
    %3877 = vmatpush1.msra.mxu0 0.0
    %3878 = vmatprep.subr.mxu0 0.0
    %3879 = vmatpush1.msra.mxu0 0.0
    %3880 = vmatprep.subr.mxu0 0.0
    %3881 = vmatpush1.msra.mxu0 0.0
    %3882 = vmatprep.subr.mxu0 0.0
    %3883 = vmatpush1.msra.mxu0 0.0
    %3884 = vmatprep.subr.mxu0 0.0
    %3885 = vmatpush1.msra.mxu0 0.0
    %3886 = vmatprep.subr.mxu0 0.0
    %3887 = vmatpush1.msra.mxu0 0.0
    %3888 = vmatprep.mubr.f32.mxu0 0.0
    %v3889 = vand.u32 %v222, 4294901760
    %v3890 = vsub.f32 %v222, %v3889
    %v3891 = vand.u32 %v3890, 4294901760
    %3892 = vmatmul.mubr.f32.gmra.mrb[0].mxu0 %v3891
    %v3893 = vpop.f32.mrb[0].mxu0
    %v3894 = vadd.f32 %v3804, %v3893
    %v3895 = vpop.f32.mrb[0].mxu0
    %v3896 = vadd.f32 %v3806, %v3895
    %3897 = vdwg.mxu0
    %v3898 = vand.u32 %v71, 4294901760
    %v3899 = vsub.f32 %v71, %v3898
    %v3900 = vand.u32 %v3899, 4294901760
    %3901 = vmatprep.subr.mxu0 %v3900
    %v3902 = vand.u32 %v70, 4294901760
    %v3903 = vsub.f32 %v70, %v3902
    %v3904 = vand.u32 %v3903, 4294901760
    %3905 = vmatpush1.msra.mxu0 %v3904
    %v3906 = vand.u32 %v83, 4294901760
    %v3907 = vsub.f32 %v83, %v3906
    %v3908 = vand.u32 %v3907, 4294901760
    %3909 = vmatprep.subr.mxu0 %v3908
    %v3910 = vand.u32 %v82, 4294901760
    %v3911 = vsub.f32 %v82, %v3910
    %v3912 = vand.u32 %v3911, 4294901760
    %3913 = vmatpush1.msra.mxu0 %v3912
    %v3914 = vand.u32 %v95, 4294901760
    %v3915 = vsub.f32 %v95, %v3914
    %v3916 = vand.u32 %v3915, 4294901760
    %3917 = vmatprep.subr.mxu0 %v3916
    %v3918 = vand.u32 %v94, 4294901760
    %v3919 = vsub.f32 %v94, %v3918
    %v3920 = vand.u32 %v3919, 4294901760
    %3921 = vmatpush1.msra.mxu0 %v3920
    %v3922 = vand.u32 %v107, 4294901760
    %v3923 = vsub.f32 %v107, %v3922
    %v3924 = vand.u32 %v3923, 4294901760
    %3925 = vmatprep.subr.mxu0 %v3924
    %v3926 = vand.u32 %v106, 4294901760
    %v3927 = vsub.f32 %v106, %v3926
    %v3928 = vand.u32 %v3927, 4294901760
    %3929 = vmatpush1.msra.mxu0 %v3928
    %v3930 = vand.u32 %v119, 4294901760
    %v3931 = vsub.f32 %v119, %v3930
    %v3932 = vand.u32 %v3931, 4294901760
    %3933 = vmatprep.subr.mxu0 %v3932
    %v3934 = vand.u32 %v118, 4294901760
    %v3935 = vsub.f32 %v118, %v3934
    %v3936 = vand.u32 %v3935, 4294901760
    %3937 = vmatpush1.msra.mxu0 %v3936
    %v3938 = vand.u32 %v131, 4294901760
    %v3939 = vsub.f32 %v131, %v3938
    %v3940 = vand.u32 %v3939, 4294901760
    %3941 = vmatprep.subr.mxu0 %v3940
    %v3942 = vand.u32 %v130, 4294901760
    %v3943 = vsub.f32 %v130, %v3942
    %v3944 = vand.u32 %v3943, 4294901760
    %3945 = vmatpush1.msra.mxu0 %v3944
    %v3946 = vand.u32 %v143, 4294901760
    %v3947 = vsub.f32 %v143, %v3946
    %v3948 = vand.u32 %v3947, 4294901760
    %3949 = vmatprep.subr.mxu0 %v3948
    %v3950 = vand.u32 %v142, 4294901760
    %v3951 = vsub.f32 %v142, %v3950
    %v3952 = vand.u32 %v3951, 4294901760
    %3953 = vmatpush1.msra.mxu0 %v3952
    %v3954 = vand.u32 %v155, 4294901760
    %v3955 = vsub.f32 %v155, %v3954
    %v3956 = vand.u32 %v3955, 4294901760
    %3957 = vmatprep.subr.mxu0 %v3956
    %v3958 = vand.u32 %v154, 4294901760
    %v3959 = vsub.f32 %v154, %v3958
    %v3960 = vand.u32 %v3959, 4294901760
    %3961 = vmatpush1.msra.mxu0 %v3960
    %3962 = vmatprep.subr.mxu0 0.0
    %3963 = vmatpush1.msra.mxu0 0.0
    %3964 = vmatprep.subr.mxu0 0.0
    %3965 = vmatpush1.msra.mxu0 0.0
    %3966 = vmatprep.subr.mxu0 0.0
    %3967 = vmatpush1.msra.mxu0 0.0
    %3968 = vmatprep.subr.mxu0 0.0
    %3969 = vmatpush1.msra.mxu0 0.0
    %3970 = vmatprep.subr.mxu0 0.0
    %3971 = vmatpush1.msra.mxu0 0.0
    %3972 = vmatprep.subr.mxu0 0.0
    %3973 = vmatpush1.msra.mxu0 0.0
    %3974 = vmatprep.subr.mxu0 0.0
    %3975 = vmatpush1.msra.mxu0 0.0
    %3976 = vmatprep.subr.mxu0 0.0
    %3977 = vmatpush1.msra.mxu0 0.0
    %3978 = vmatprep.subr.mxu0 0.0
    %3979 = vmatpush1.msra.mxu0 0.0
    %3980 = vmatprep.subr.mxu0 0.0
    %3981 = vmatpush1.msra.mxu0 0.0
    %3982 = vmatprep.subr.mxu0 0.0
    %3983 = vmatpush1.msra.mxu0 0.0
    %3984 = vmatprep.subr.mxu0 0.0
    %3985 = vmatpush1.msra.mxu0 0.0
    %3986 = vmatprep.subr.mxu0 0.0
    %3987 = vmatpush1.msra.mxu0 0.0
    %3988 = vmatprep.subr.mxu0 0.0
    %3989 = vmatpush1.msra.mxu0 0.0
    %3990 = vmatprep.subr.mxu0 0.0
    %3991 = vmatpush1.msra.mxu0 0.0
    %3992 = vmatprep.subr.mxu0 0.0
    %3993 = vmatpush1.msra.mxu0 0.0
    %3994 = vmatprep.subr.mxu0 0.0
    %3995 = vmatpush1.msra.mxu0 0.0
    %3996 = vmatprep.subr.mxu0 0.0
    %3997 = vmatpush1.msra.mxu0 0.0
    %3998 = vmatprep.subr.mxu0 0.0
    %3999 = vmatpush1.msra.mxu0 0.0
    %4000 = vmatprep.subr.mxu0 0.0
    %4001 = vmatpush1.msra.mxu0 0.0
    %4002 = vmatprep.subr.mxu0 0.0
    %4003 = vmatpush1.msra.mxu0 0.0
    %4004 = vmatprep.subr.mxu0 0.0
    %4005 = vmatpush1.msra.mxu0 0.0
    %4006 = vmatprep.subr.mxu0 0.0
    %4007 = vmatpush1.msra.mxu0 0.0
    %4008 = vmatprep.subr.mxu0 0.0
    %4009 = vmatpush1.msra.mxu0 0.0
    %4010 = vmatprep.mubr.f32.mxu0 0.0
    %v4011 = vand.u32 %v222, 4294901760
    %4012 = vmatmul.mubr.f32.gmra.mrb[0].mxu0 %v4011
    %v4013 = vpop.f32.mrb[0].mxu0
    %v4014 = vadd.f32 %v3894, %v4013
    %v4015 = vpop.f32.mrb[0].mxu0
    %v4016 = vadd.f32 %v3896, %v4015
    %4017 = vdwg.mxu0
    %v4018 = vand.u32 %v71, 4294901760
    %4019 = vmatprep.subr.mxu0 %v4018
    %v4020 = vand.u32 %v70, 4294901760
    %4021 = vmatpush1.msra.mxu0 %v4020
    %v4022 = vand.u32 %v83, 4294901760
    %4023 = vmatprep.subr.mxu0 %v4022
    %v4024 = vand.u32 %v82, 4294901760
    %4025 = vmatpush1.msra.mxu0 %v4024
    %v4026 = vand.u32 %v95, 4294901760
    %4027 = vmatprep.subr.mxu0 %v4026
    %v4028 = vand.u32 %v94, 4294901760
    %4029 = vmatpush1.msra.mxu0 %v4028
    %v4030 = vand.u32 %v107, 4294901760
    %4031 = vmatprep.subr.mxu0 %v4030
    %v4032 = vand.u32 %v106, 4294901760
    %4033 = vmatpush1.msra.mxu0 %v4032
    %v4034 = vand.u32 %v119, 4294901760
    %4035 = vmatprep.subr.mxu0 %v4034
    %v4036 = vand.u32 %v118, 4294901760
    %4037 = vmatpush1.msra.mxu0 %v4036
    %v4038 = vand.u32 %v131, 4294901760
    %4039 = vmatprep.subr.mxu0 %v4038
    %v4040 = vand.u32 %v130, 4294901760
    %4041 = vmatpush1.msra.mxu0 %v4040
    %v4042 = vand.u32 %v143, 4294901760
    %4043 = vmatprep.subr.mxu0 %v4042
    %v4044 = vand.u32 %v142, 4294901760
    %4045 = vmatpush1.msra.mxu0 %v4044
    %v4046 = vand.u32 %v155, 4294901760
    %4047 = vmatprep.subr.mxu0 %v4046
    %v4048 = vand.u32 %v154, 4294901760
    %4049 = vmatpush1.msra.mxu0 %v4048
    %4050 = vmatprep.subr.mxu0 0.0
    %4051 = vmatpush1.msra.mxu0 0.0
    %4052 = vmatprep.subr.mxu0 0.0
    %4053 = vmatpush1.msra.mxu0 0.0
    %4054 = vmatprep.subr.mxu0 0.0
    %4055 = vmatpush1.msra.mxu0 0.0
    %4056 = vmatprep.subr.mxu0 0.0
    %4057 = vmatpush1.msra.mxu0 0.0
    %4058 = vmatprep.subr.mxu0 0.0
    %4059 = vmatpush1.msra.mxu0 0.0
    %4060 = vmatprep.subr.mxu0 0.0
    %4061 = vmatpush1.msra.mxu0 0.0
    %4062 = vmatprep.subr.mxu0 0.0
    %4063 = vmatpush1.msra.mxu0 0.0
    %4064 = vmatprep.subr.mxu0 0.0
    %4065 = vmatpush1.msra.mxu0 0.0
    %4066 = vmatprep.subr.mxu0 0.0
    %4067 = vmatpush1.msra.mxu0 0.0
    %4068 = vmatprep.subr.mxu0 0.0
    %4069 = vmatpush1.msra.mxu0 0.0
    %4070 = vmatprep.subr.mxu0 0.0
    %4071 = vmatpush1.msra.mxu0 0.0
    %4072 = vmatprep.subr.mxu0 0.0
    %4073 = vmatpush1.msra.mxu0 0.0
    %4074 = vmatprep.subr.mxu0 0.0
    %4075 = vmatpush1.msra.mxu0 0.0
    %4076 = vmatprep.subr.mxu0 0.0
    %4077 = vmatpush1.msra.mxu0 0.0
    %4078 = vmatprep.subr.mxu0 0.0
    %4079 = vmatpush1.msra.mxu0 0.0
    %4080 = vmatprep.subr.mxu0 0.0
    %4081 = vmatpush1.msra.mxu0 0.0
    %4082 = vmatprep.subr.mxu0 0.0
    %4083 = vmatpush1.msra.mxu0 0.0
    %4084 = vmatprep.subr.mxu0 0.0
    %4085 = vmatpush1.msra.mxu0 0.0
    %4086 = vmatprep.subr.mxu0 0.0
    %4087 = vmatpush1.msra.mxu0 0.0
    %4088 = vmatprep.subr.mxu0 0.0
    %4089 = vmatpush1.msra.mxu0 0.0
    %4090 = vmatprep.subr.mxu0 0.0
    %4091 = vmatpush1.msra.mxu0 0.0
    %4092 = vmatprep.subr.mxu0 0.0
    %4093 = vmatpush1.msra.mxu0 0.0
    %4094 = vmatprep.subr.mxu0 0.0
    %4095 = vmatpush1.msra.mxu0 0.0
    %4096 = vmatprep.subr.mxu0 0.0
    %4097 = vmatpush1.msra.mxu0 0.0
    %4098 = vmatprep.mubr.f32.mxu0 0.0
    %v4099 = vand.u32 %v222, 4294901760
    %4100 = vmatmul.mubr.f32.gmra.mrb[0].mxu0 %v4099
    %v4101 = vpop.f32.mrb[0].mxu0
    %v4102 = vadd.f32 %v4014, %v4101
    %v4103 = vpop.f32.mrb[0].mxu0
    %v4104 = vadd.f32 %v4016, %v4103
    %4105 = vdwg.mxu0
    %v4118 = vcombine.low %v867, %v869
    %v4119 = vcombine.low %v1514, %v1516
    %v4121 = vunpack.c.l.s4 1983009808
    %v4122 = vunpack.c.0.s8 %v4121
    %v4123 = vlaneseq
    %v4124 = vshrl.u32 %v4123, 7
    %v4125 = vsub.s32 %v4122, %v4124
    %v4126 = vrot.slane %v4118, %v4125
    %v4128 = vunpack.c.l.s4 1983009808
    %v4129 = vunpack.c.0.s8 %v4128
    %v4130 = vlaneseq
    %v4131 = vshrl.u32 %v4130, 7
    %v4132 = vsub.s32 %v4129, %v4131
    %v4133 = vrot.slane %v4119, %v4132
    %v4134 = vcombine.low %v4126, %v4133
    %v4135 = vcombine.low %v2161, %v2163
    %v4136 = vcombine.low %v2808, %v2810
    %v4138 = vunpack.c.l.s4 1983009808
    %v4139 = vunpack.c.0.s8 %v4138
    %v4140 = vlaneseq
    %v4141 = vshrl.u32 %v4140, 7
    %v4142 = vsub.s32 %v4139, %v4141
    %v4143 = vrot.slane %v4135, %v4142
    %v4145 = vunpack.c.l.s4 1983009808
    %v4146 = vunpack.c.0.s8 %v4145
    %v4147 = vlaneseq
    %v4148 = vshrl.u32 %v4147, 7
    %v4149 = vsub.s32 %v4146, %v4148
    %v4150 = vrot.slane %v4136, %v4149
    %v4151 = vcombine.low %v4143, %v4150
    %v4152 = vcombine.low %v3455, %v3457
    %v4153 = vcombine.low %v4102, %v4104
    %v4155 = vunpack.c.l.s4 1983009808
    %v4156 = vunpack.c.0.s8 %v4155
    %v4157 = vlaneseq
    %v4158 = vshrl.u32 %v4157, 7
    %v4159 = vsub.s32 %v4156, %v4158
    %v4160 = vrot.slane %v4152, %v4159
    %v4162 = vunpack.c.l.s4 1983009808
    %v4163 = vunpack.c.0.s8 %v4162
    %v4164 = vlaneseq
    %v4165 = vshrl.u32 %v4164, 7
    %v4166 = vsub.s32 %v4163, %v4165
    %v4167 = vrot.slane %v4153, %v4166
    %v4168 = vcombine.low %v4160, %v4167
    %4172 = vst [vmem:[#allocation8] sm:$0xff] %v4134
    %4173 = vst [vmem:[#allocation8 + $0x8] sm:$0xff] %v4151
    %4174 = vst [vmem:[#allocation8 + $0x10] sm:$0xff] %v4168
    // Predicated region
    $region26: #{tpu_custom_call.1} parent=1 // pred_check
      _
    $region27: #{tpu_custom_call.1} parent=1 // pred_check_branch
      %4176 = sbr.rel (0) target = $region29
    $region28: #{tpu_custom_call.1} parent=1 // pred_region
      %s4178 = ssub.s32 384, 384
      %4179 = vsyncadd [#allocation4], %s4178
      %s4181 = sshll.u32 [#allocation8], 4
      %s4182 = int_to_ptr.vmem [resolvable:$true] %s4181
      %4184 = dma.vmem_to_hbm [thread:$0]  %s4182, 384, %s3, [#allocation4]
    $region29: #{tpu_custom_call.1} parent=1 // pred_fallthru
      _
    // Predicated region
    $region30: #{tpu_custom_call.1} parent=1 // pred_check
      _
    $region31: #{tpu_custom_call.1} parent=1 // pred_check_branch
      %4186 = sbr.rel (0) target = $region33
    $region32: #{tpu_custom_call.1} parent=1 // pred_region
      %4187 = dma.done [#allocation4], 384
    $region33: #{tpu_custom_call.1} parent=1 // pred_fallthru
      _
    %4188 = vsyncpa [#allocation3], 1
    %4189 = vsyncpa [#allocation6], 1
    %4190 = vsyncpa [#allocation4], 1

</llo_original>
